<compile_context>
chip_gen: v6e
topology: v6e:2x2x1
jax: 0.10.0
libtpu: 0.0.40
codegen_flags: <defaults>
</compile_context>

<pallas_src>
import jax
import jax.numpy as jnp
from jax import lax
from jax.experimental import pallas as pl
from jax.experimental.pallas import tpu as pltpu


# ---------------------------------------------------------------------------
# Helpers
# ---------------------------------------------------------------------------
def _round_up(x, m):
    return ((x + m - 1) // m) * m


def _full_spec(shape):
    """Whole-array BlockSpec for a grid-less pallas_call."""
    nd = len(shape)
    return pl.BlockSpec(shape, lambda *_: (0,) * nd)


def _pad_gatewise(w, hidden, h_pad):
    """(rows, 4*hidden) -> (rows, 4*h_pad); each PyTorch gate block (i,f,g,o)
    is zero-padded independently so in-kernel slices [g*h_pad:(g+1)*h_pad]
    stay aligned with the original gates."""
    rows = w.shape[0]
    out = jnp.zeros((rows, 4 * h_pad), w.dtype)
    for g in range(4):
        out = out.at[:, g * h_pad: g * h_pad + hidden].set(
            w[:, g * hidden:(g + 1) * hidden])
    return out


# ---------------------------------------------------------------------------
# Fused Pallas kernel: num_layers-stacked LSTM over the full sequence + fc head.
# ---------------------------------------------------------------------------
def _make_fused_kernel(seq, batch_pad, h_pad, num_layers):
    # Partial unroll: short serial chains get LLO visibility without the
    # code-size / vreg-live-range blowup of a full unroll on long sequences.
    unroll = int(min(seq, 8))

    def kernel(*refs):
        n_w = 3 * num_layers
        x_ref = refs[0]                                  # (seq*batch_pad, wd_pad) bf16
        w_refs = refs[1:1 + n_w]                         # wx, wh (bf16), b (f32) per layer
        fcw_ref = refs[1 + n_w]                          # (h_pad, labels_pad) bf16
        fcb_ref = refs[2 + n_w]                          # (1, labels_pad) f32
        out_ref = refs[3 + n_w]                          # (batch_pad, labels_pad) f32
        gx_scr, seq_buf = refs[4 + n_w:]                 # (SB,4h) f32, (SB,h) bf16

        h_last = None
        for l in range(num_layers):
            wx_ref, wh_ref, b_ref = w_refs[3 * l: 3 * l + 3]
            last = (l == num_layers - 1)

            # Time-parallel input projection for the whole sequence as ONE big
            # MXU matmul (bf16 inputs, f32 accumulation), bias folded in.
            # Layer > 0 streams its operand directly from the sequence buffer.
            src = x_ref if l == 0 else seq_buf
            gx_scr[...] = (
                jnp.dot(src[...], wx_ref[...],
                        preferred_element_type=jnp.float32)
                + b_ref[...]
            )

            # Sequential recurrence: one small bf16 matmul + f32 gate math per
            # step.  h/c live in the fori_loop carry (vregs), not VMEM scratch.
            def step(t, carry, wh_ref=wh_ref, last=last):
                h_prev, c_prev = carry
                off = pl.multiple_of(t * batch_pad, batch_pad)
                gates = gx_scr[pl.ds(off, batch_pad), :] + jnp.dot(
                    h_prev.astype(jnp.bfloat16), wh_ref[...],
                    preferred_element_type=jnp.float32)
                # PyTorch gate order i, f, g, o; each slice is a 128-lane block.
                i_g = jax.nn.sigmoid(gates[:, 0 * h_pad:1 * h_pad])
                f_g = jax.nn.sigmoid(gates[:, 1 * h_pad:2 * h_pad])
                g_g = jnp.tanh(gates[:, 2 * h_pad:3 * h_pad])
                o_g = jax.nn.sigmoid(gates[:, 3 * h_pad:4 * h_pad])
                c_new = f_g * c_prev + i_g * g_g
                h_new = o_g * jnp.tanh(c_new)
                if not last:
                    # In-place overwrite of the (now dead) layer-input rows with
                    # this layer's outputs -> single sequence buffer in VMEM.
                    seq_buf[pl.ds(off, batch_pad), :] = h_new.astype(jnp.bfloat16)
                return h_new, c_new

            h0 = jnp.zeros((batch_pad, h_pad), jnp.float32)
            c0 = jnp.zeros((batch_pad, h_pad), jnp.float32)
            h_last, _ = lax.fori_loop(0, seq, step, (h0, c0), unroll=unroll)
            # inter-layer LSTM dropout(0.3): identity in eval mode.

        # fc head = Dropout(0.5) [identity at eval] + Linear on the final-step
        # hidden state.  Output is lane-dense (labels padded to 128).
        out_ref[...] = (
            jnp.dot(h_last.astype(jnp.bfloat16), fcw_ref[...],
                    preferred_element_type=jnp.float32)
            + fcb_ref[...]
        )

    return kernel


def _fused_lstm_fc(x2d, padded, seq, batch_pad):
    h_pad = padded["h_pad"]
    l_pad = padded["l_pad"]
    num_layers = len(padded["layers"])
    SB = seq * batch_pad

    inputs = [x2d]
    in_specs = [_full_spec(x2d.shape)]
    for lay in padded["layers"]:
        for name in ("wx", "wh", "b"):
            inputs.append(lay[name])
            in_specs.append(_full_spec(lay[name].shape))
    inputs += [padded["fc_w"], padded["fc_b"]]
    in_specs += [_full_spec(padded["fc_w"].shape), _full_spec(padded["fc_b"].shape)]

    # VMEM budget: inputs/weights (single-buffered, grid-less) + scratch + output,
    # with 2x headroom for compiler temporaries; floor 32 MiB, cap < 64 MiB (v7x).
    vmem_bytes = sum(int(a.size) * a.dtype.itemsize for a in inputs)
    vmem_bytes += SB * 4 * h_pad * 4      # gx scratch (f32)
    vmem_bytes += SB * h_pad * 2          # single sequence buffer (bf16)
    vmem_bytes += batch_pad * l_pad * 4   # output tile
    vmem_limit = int(min(60 << 20, max(32 << 20, 2 * vmem_bytes)))

    kernel = _make_fused_kernel(seq, batch_pad, h_pad, num_layers)
    return pl.pallas_call(
        kernel,
        out_shape=jax.ShapeDtypeStruct((batch_pad, l_pad), jnp.float32),
        in_specs=in_specs,
        out_specs=_full_spec((batch_pad, l_pad)),
        scratch_shapes=[
            pltpu.VMEM((SB, 4 * h_pad), jnp.float32),   # hoisted x-projection
            pltpu.VMEM((SB, h_pad), jnp.bfloat16),      # single in/out seq buffer
        ],
        compiler_params=pltpu.CompilerParams(vmem_limit_bytes=vmem_limit),
    )(*inputs)


# ---------------------------------------------------------------------------
# Parameter construction (PyTorch-equivalent init) and lane/MXU-aligned padding.
# ---------------------------------------------------------------------------
def init_params(key, vocab_size, word_dim, hidden, num_layers, labels):
    params = {}
    k_emb, key = jax.random.split(key)
    params["embedding"] = jax.random.normal(
        k_emb, (vocab_size, word_dim), jnp.float32) * 0.1

    scale = 1.0 / jnp.sqrt(hidden)
    layers = []
    for layer in range(num_layers):
        in_dim = word_dim if layer == 0 else hidden
        k1, k2, k3, k4, key = jax.random.split(key, 5)
        wx = jax.random.uniform(k1, (in_dim, 4 * hidden), jnp.float32, -scale, scale)
        wh = jax.random.uniform(k2, (hidden, 4 * hidden), jnp.float32, -scale, scale)
        b_ih = jax.random.uniform(k3, (4 * hidden,), jnp.float32, -scale, scale)
        b_hh = jax.random.uniform(k4, (4 * hidden,), jnp.float32, -scale, scale)
        layers.append({"wx": wx, "wh": wh, "b": (b_ih + b_hh).reshape(1, 4 * hidden)})
    params["lstm"] = layers

    kf1, kf2, key = jax.random.split(key, 3)
    fscale = 1.0 / jnp.sqrt(hidden)
    params["fc_w"] = jax.random.uniform(kf1, (hidden, labels), jnp.float32, -fscale, fscale)
    params["fc_b"] = jax.random.uniform(kf2, (1, labels), jnp.float32, -fscale, fscale)
    return params


def pad_params(params, word_dim, hidden, labels):
    """Zero-pad all dims to lane/MXU-aligned sizes and cast MXU operands to bf16.
    Padded gate/weight columns are zero, so padded hidden channels stay exactly
    zero through the recurrence and do not perturb the real outputs."""
    wd_pad = _round_up(word_dim, 128)
    h_pad = _round_up(hidden, 128)
    l_pad = _round_up(labels, 128)

    emb_pad = jnp.pad(params["embedding"], ((0, 0), (0, wd_pad - word_dim)))

    layers = []
    for i, lay in enumerate(params["lstm"]):
        in_dim = word_dim if i == 0 else hidden
        in_pad = wd_pad if i == 0 else h_pad
        wx = _pad_gatewise(lay["wx"], hidden, h_pad)
        wx = jnp.pad(wx, ((0, in_pad - in_dim), (0, 0))).astype(jnp.bfloat16)
        wh = _pad_gatewise(lay["wh"], hidden, h_pad)
        wh = jnp.pad(wh, ((0, h_pad - hidden), (0, 0))).astype(jnp.bfloat16)
        b = _pad_gatewise(lay["b"], hidden, h_pad).astype(jnp.float32)
        layers.append({"wx": wx, "wh": wh, "b": b})

    fc_w = jnp.pad(params["fc_w"],
                   ((0, h_pad - hidden), (0, l_pad - labels))).astype(jnp.bfloat16)
    fc_b = jnp.pad(params["fc_b"], ((0, 0), (0, l_pad - labels))).astype(jnp.float32)

    return {"embedding": emb_pad, "layers": layers, "fc_w": fc_w, "fc_b": fc_b,
            "wd_pad": wd_pad, "h_pad": h_pad, "l_pad": l_pad,
            "hidden": hidden, "labels": labels, "word_dim": word_dim}


# ---------------------------------------------------------------------------
# Model forward (JAX glue: permute, embedding gather, pad, slice result).
# ---------------------------------------------------------------------------
def lstm_model_forward(padded, token_ids):
    """token_ids: (batch, seq) int32 -> logits (batch, labels)."""
    batch, seq = token_ids.shape
    b_pad = _round_up(batch, 8)

    x = jnp.transpose(token_ids, (1, 0))                  # X.permute(1, 0)
    emb = jnp.take(padded["embedding"], x, axis=0)        # (seq, batch, wd_pad)
    # embedding dropout(0.5): identity in eval mode.
    emb = jnp.pad(emb, ((0, 0), (0, b_pad - batch), (0, 0)))
    x2d = emb.reshape(seq * b_pad, padded["wd_pad"]).astype(jnp.bfloat16)

    logits_pad = _fused_lstm_fc(x2d, padded, seq=seq, batch_pad=b_pad)
    return logits_pad[:batch, :padded["labels"]]


# ---------------------------------------------------------------------------
# Pure-JAX f32 reference (unpadded) for numerical verification.
# ---------------------------------------------------------------------------
def _reference_forward(params, token_ids):
    x = jnp.transpose(token_ids, (1, 0))
    x = params["embedding"][x]
    hidden = params["lstm"][0]["wh"].shape[0]
    batch = x.shape[1]
    for layer in params["lstm"]:
        def step(carry, x_t):
            h, c = carry
            gates = x_t @ layer["wx"] + h @ layer["wh"] + layer["b"]
            i_g = jax.nn.sigmoid(gates[:, 0 * hidden:1 * hidden])
            f_g = jax.nn.sigmoid(gates[:, 1 * hidden:2 * hidden])
            g_g = jnp.tanh(gates[:, 2 * hidden:3 * hidden])
            o_g = jax.nn.sigmoid(gates[:, 3 * hidden:4 * hidden])
            c = f_g * c + i_g * g_g
            h = o_g * jnp.tanh(c)
            return (h, c), h
        init = (jnp.zeros((batch, hidden), jnp.float32),
                jnp.zeros((batch, hidden), jnp.float32))
        _, x = jax.lax.scan(step, init, x)
    return x[-1] @ params["fc_w"] + params["fc_b"]


if __name__ == "__main__":
    # Small, self-consistent config (matching the PyTorch module's forward).
    batch, seq = 2, 8
    vocab_size, word_dim = 100, 32
    num_hiddens, num_layers, labels = 32, 2, 4

    key = jax.random.PRNGKey(0)
    k_params, k_tokens = jax.random.split(key)
    params = init_params(k_params, vocab_size, word_dim, num_hiddens, num_layers, labels)
    padded = pad_params(params, word_dim, num_hiddens, labels)
    token_ids = jax.random.randint(k_tokens, (batch, seq), 0, vocab_size, dtype=jnp.int32)

    logits = jax.block_until_ready(lstm_model_forward(padded, token_ids))
    ref = jax.block_until_ready(_reference_forward(params, token_ids))

    assert logits.shape == (batch, labels)
    # bf16 MXU operands with f32 accumulation: compare against the f32 reference
    # at a tolerance that absorbs the ~3-digit weight/activation quantization.
    assert jnp.allclose(logits, ref, rtol=2e-2, atol=2e-2), (
        f"max abs diff {jnp.max(jnp.abs(logits - ref))}")
    print("KERNEL_OK")
</pallas_src>

<mosaic_0001>
module attributes {stable_mosaic.version = 11 : i64} {
  func.func @kernel(%arg0: memref<64x128xbf16, #tpu.memory_space<vmem>>, %arg1: memref<128x512xbf16, #tpu.memory_space<vmem>>, %arg2: memref<128x512xbf16, #tpu.memory_space<vmem>>, %arg3: memref<1x512xf32, #tpu.memory_space<vmem>>, %arg4: memref<128x512xbf16, #tpu.memory_space<vmem>>, %arg5: memref<128x512xbf16, #tpu.memory_space<vmem>>, %arg6: memref<1x512xf32, #tpu.memory_space<vmem>>, %arg7: memref<128x128xbf16, #tpu.memory_space<vmem>>, %arg8: memref<1x128xf32, #tpu.memory_space<vmem>>, %arg9: memref<8x128xf32, #tpu.memory_space<vmem>>, %arg10: memref<64x512xf32, #tpu.memory_space<vmem>>, %arg11: memref<64x128xbf16, #tpu.memory_space<vmem>>) attributes {dimension_semantics = [], scalar_prefetch = 0 : i64, scratch_operands = 2 : i64, tpu.core_type = #tpu.core_type<tc>} {
    %c0 = arith.constant 0 : index
    %c0_0 = arith.constant 0 : index
    %0 = vector.load %arg0[%c0, %c0_0] : memref<64x128xbf16, #tpu.memory_space<vmem>>, vector<64x128xbf16>
    %c0_1 = arith.constant 0 : index
    %c0_2 = arith.constant 0 : index
    %1 = vector.load %arg1[%c0_1, %c0_2] : memref<128x512xbf16, #tpu.memory_space<vmem>>, vector<128x512xbf16>
    %cst = arith.constant dense<0.000000e+00> : vector<64x512xf32>
    %2 = tpu.matmul %0, %1, %cst {dimension_numbers = #tpu.dot_dimension_numbers<[1], [0], [0], [1], [0, 0, 1, 1], [], []>} : vector<64x128xbf16>, vector<128x512xbf16>, vector<64x512xf32> -> vector<64x512xf32>
    %c0_3 = arith.constant 0 : index
    %c0_4 = arith.constant 0 : index
    %3 = vector.load %arg3[%c0_3, %c0_4] : memref<1x512xf32, #tpu.memory_space<vmem>>, vector<1x512xf32>
    %4 = vector.broadcast %3 : vector<1x512xf32> to vector<64x512xf32>
    %5 = arith.addf %2, %4 : vector<64x512xf32>
    %c0_5 = arith.constant 0 : index
    %c0_6 = arith.constant 0 : index
    %6 = vector.load %arg10[%c0_5, %c0_6] : memref<64x512xf32, #tpu.memory_space<vmem>>, vector<64x512xf32>
    tpu.vector_store %arg10[%c0_5, %c0_6], %5 {strides = array<i32>} : memref<64x512xf32, #tpu.memory_space<vmem>>, vector<64x512xf32>,
    %cst_7 = arith.constant 0.000000e+00 : f32
    %7 = vector.broadcast %cst_7 : f32 to vector<8x128xf32>
    %cst_8 = arith.constant 0.000000e+00 : f32
    %8 = vector.broadcast %cst_8 : f32 to vector<8x128xf32>
    %c0_i32 = arith.constant 0 : i32
    %c8_i32 = arith.constant 8 : i32
    %9 = arith.muli %c0_i32, %c8_i32 : i32
    %10 = tpu.assume_multiple %9, 8 : i32
    %11 = arith.index_cast %10 : i32 to index
    %c0_9 = arith.constant 0 : index
    %12 = vector.load %arg10[%11, %c0_9] : memref<64x512xf32, #tpu.memory_space<vmem>>, vector<8x512xf32>
    %13 = arith.truncf %7 : vector<8x128xf32> to vector<8x128xbf16>
    %c0_10 = arith.constant 0 : index
    %c0_11 = arith.constant 0 : index
    %14 = vector.load %arg2[%c0_10, %c0_11] : memref<128x512xbf16, #tpu.memory_space<vmem>>, vector<128x512xbf16>
    %cst_12 = arith.constant dense<0.000000e+00> : vector<8x512xf32>
    %15 = tpu.matmul %13, %14, %cst_12 {dimension_numbers = #tpu.dot_dimension_numbers<[1], [0], [0], [1], [0, 0, 1, 1], [], []>} : vector<8x128xbf16>, vector<128x512xbf16>, vector<8x512xf32> -> vector<8x512xf32>
    %16 = arith.addf %12, %15 : vector<8x512xf32>
    %17 = vector.extract_strided_slice %16 {offsets = [0, 0], sizes = [8, 128], strides = [1, 1]} : vector<8x512xf32> to vector<8x128xf32>
    %18 = arith.negf %17 : vector<8x128xf32>
    %19 = math.exp %18 : vector<8x128xf32>
    %cst_13 = arith.constant 1.000000e+00 : f32
    %20 = vector.broadcast %cst_13 : f32 to vector<8x128xf32>
    %21 = arith.addf %20, %19 : vector<8x128xf32>
    %22 = arith.divf %20, %21 : vector<8x128xf32>
    %23 = vector.extract_strided_slice %16 {offsets = [0, 128], sizes = [8, 128], strides = [1, 1]} : vector<8x512xf32> to vector<8x128xf32>
    %24 = arith.negf %23 : vector<8x128xf32>
    %25 = math.exp %24 : vector<8x128xf32>
    %cst_14 = arith.constant 1.000000e+00 : f32
    %26 = vector.broadcast %cst_14 : f32 to vector<8x128xf32>
    %27 = arith.addf %26, %25 : vector<8x128xf32>
    %28 = arith.divf %26, %27 : vector<8x128xf32>
    %29 = vector.extract_strided_slice %16 {offsets = [0, 256], sizes = [8, 128], strides = [1, 1]} : vector<8x512xf32> to vector<8x128xf32>
    %30 = math.tanh %29 : vector<8x128xf32>
    %31 = vector.extract_strided_slice %16 {offsets = [0, 384], sizes = [8, 128], strides = [1, 1]} : vector<8x512xf32> to vector<8x128xf32>
    %32 = arith.negf %31 : vector<8x128xf32>
    %33 = math.exp %32 : vector<8x128xf32>
    %cst_15 = arith.constant 1.000000e+00 : f32
    %34 = vector.broadcast %cst_15 : f32 to vector<8x128xf32>
    %35 = arith.addf %34, %33 : vector<8x128xf32>
    %36 = arith.divf %34, %35 : vector<8x128xf32>
    %37 = arith.mulf %28, %8 : vector<8x128xf32>
    %38 = arith.mulf %22, %30 : vector<8x128xf32>
    %39 = arith.addf %37, %38 : vector<8x128xf32>
    %40 = math.tanh %39 : vector<8x128xf32>
    %41 = arith.mulf %36, %40 : vector<8x128xf32>
    %42 = arith.truncf %41 : vector<8x128xf32> to vector<8x128xbf16>
    %43 = arith.index_cast %10 : i32 to index
    %c0_16 = arith.constant 0 : index
    %44 = vector.load %arg11[%43, %c0_16] : memref<64x128xbf16, #tpu.memory_space<vmem>>, vector<8x128xbf16>
    tpu.vector_store %arg11[%43, %c0_16], %42 {strides = array<i32>} : memref<64x128xbf16, #tpu.memory_space<vmem>>, vector<8x128xbf16>,
    %c1_i32 = arith.constant 1 : i32
    %c8_i32_17 = arith.constant 8 : i32
    %45 = arith.muli %c1_i32, %c8_i32_17 : i32
    %46 = tpu.assume_multiple %45, 8 : i32
    %47 = arith.index_cast %46 : i32 to index
    %c0_18 = arith.constant 0 : index
    %48 = vector.load %arg10[%47, %c0_18] : memref<64x512xf32, #tpu.memory_space<vmem>>, vector<8x512xf32>
    %49 = arith.truncf %41 : vector<8x128xf32> to vector<8x128xbf16>
    %c0_19 = arith.constant 0 : index
    %c0_20 = arith.constant 0 : index
    %50 = vector.load %arg2[%c0_19, %c0_20] : memref<128x512xbf16, #tpu.memory_space<vmem>>, vector<128x512xbf16>
    %cst_21 = arith.constant dense<0.000000e+00> : vector<8x512xf32>
    %51 = tpu.matmul %49, %50, %cst_21 {dimension_numbers = #tpu.dot_dimension_numbers<[1], [0], [0], [1], [0, 0, 1, 1], [], []>} : vector<8x128xbf16>, vector<128x512xbf16>, vector<8x512xf32> -> vector<8x512xf32>
    %52 = arith.addf %48, %51 : vector<8x512xf32>
    %53 = vector.extract_strided_slice %52 {offsets = [0, 0], sizes = [8, 128], strides = [1, 1]} : vector<8x512xf32> to vector<8x128xf32>
    %54 = arith.negf %53 : vector<8x128xf32>
    %55 = math.exp %54 : vector<8x128xf32>
    %cst_22 = arith.constant 1.000000e+00 : f32
    %56 = vector.broadcast %cst_22 : f32 to vector<8x128xf32>
    %57 = arith.addf %56, %55 : vector<8x128xf32>
    %58 = arith.divf %56, %57 : vector<8x128xf32>
    %59 = vector.extract_strided_slice %52 {offsets = [0, 128], sizes = [8, 128], strides = [1, 1]} : vector<8x512xf32> to vector<8x128xf32>
    %60 = arith.negf %59 : vector<8x128xf32>
    %61 = math.exp %60 : vector<8x128xf32>
    %cst_23 = arith.constant 1.000000e+00 : f32
    %62 = vector.broadcast %cst_23 : f32 to vector<8x128xf32>
    %63 = arith.addf %62, %61 : vector<8x128xf32>
    %64 = arith.divf %62, %63 : vector<8x128xf32>
    %65 = vector.extract_strided_slice %52 {offsets = [0, 256], sizes = [8, 128], strides = [1, 1]} : vector<8x512xf32> to vector<8x128xf32>
    %66 = math.tanh %65 : vector<8x128xf32>
    %67 = vector.extract_strided_slice %52 {offsets = [0, 384], sizes = [8, 128], strides = [1, 1]} : vector<8x512xf32> to vector<8x128xf32>
    %68 = arith.negf %67 : vector<8x128xf32>
    %69 = math.exp %68 : vector<8x128xf32>
    %cst_24 = arith.constant 1.000000e+00 : f32
    %70 = vector.broadcast %cst_24 : f32 to vector<8x128xf32>
    %71 = arith.addf %70, %69 : vector<8x128xf32>
    %72 = arith.divf %70, %71 : vector<8x128xf32>
    %73 = arith.mulf %64, %39 : vector<8x128xf32>
    %74 = arith.mulf %58, %66 : vector<8x128xf32>
    %75 = arith.addf %73, %74 : vector<8x128xf32>
    %76 = math.tanh %75 : vector<8x128xf32>
    %77 = arith.mulf %72, %76 : vector<8x128xf32>
    %78 = arith.truncf %77 : vector<8x128xf32> to vector<8x128xbf16>
    %79 = arith.index_cast %46 : i32 to index
    %c0_25 = arith.constant 0 : index
    %80 = vector.load %arg11[%79, %c0_25] : memref<64x128xbf16, #tpu.memory_space<vmem>>, vector<8x128xbf16>
    tpu.vector_store %arg11[%79, %c0_25], %78 {strides = array<i32>} : memref<64x128xbf16, #tpu.memory_space<vmem>>, vector<8x128xbf16>,
    %c2_i32 = arith.constant 2 : i32
    %c8_i32_26 = arith.constant 8 : i32
    %81 = arith.muli %c2_i32, %c8_i32_26 : i32
    %82 = tpu.assume_multiple %81, 8 : i32
    %83 = arith.index_cast %82 : i32 to index
    %c0_27 = arith.constant 0 : index
    %84 = vector.load %arg10[%83, %c0_27] : memref<64x512xf32, #tpu.memory_space<vmem>>, vector<8x512xf32>
    %85 = arith.truncf %77 : vector<8x128xf32> to vector<8x128xbf16>
    %c0_28 = arith.constant 0 : index
    %c0_29 = arith.constant 0 : index
    %86 = vector.load %arg2[%c0_28, %c0_29] : memref<128x512xbf16, #tpu.memory_space<vmem>>, vector<128x512xbf16>
    %cst_30 = arith.constant dense<0.000000e+00> : vector<8x512xf32>
    %87 = tpu.matmul %85, %86, %cst_30 {dimension_numbers = #tpu.dot_dimension_numbers<[1], [0], [0], [1], [0, 0, 1, 1], [], []>} : vector<8x128xbf16>, vector<128x512xbf16>, vector<8x512xf32> -> vector<8x512xf32>
    %88 = arith.addf %84, %87 : vector<8x512xf32>
    %89 = vector.extract_strided_slice %88 {offsets = [0, 0], sizes = [8, 128], strides = [1, 1]} : vector<8x512xf32> to vector<8x128xf32>
    %90 = arith.negf %89 : vector<8x128xf32>
    %91 = math.exp %90 : vector<8x128xf32>
    %cst_31 = arith.constant 1.000000e+00 : f32
    %92 = vector.broadcast %cst_31 : f32 to vector<8x128xf32>
    %93 = arith.addf %92, %91 : vector<8x128xf32>
    %94 = arith.divf %92, %93 : vector<8x128xf32>
    %95 = vector.extract_strided_slice %88 {offsets = [0, 128], sizes = [8, 128], strides = [1, 1]} : vector<8x512xf32> to vector<8x128xf32>
    %96 = arith.negf %95 : vector<8x128xf32>
    %97 = math.exp %96 : vector<8x128xf32>
    %cst_32 = arith.constant 1.000000e+00 : f32
    %98 = vector.broadcast %cst_32 : f32 to vector<8x128xf32>
    %99 = arith.addf %98, %97 : vector<8x128xf32>
    %100 = arith.divf %98, %99 : vector<8x128xf32>
    %101 = vector.extract_strided_slice %88 {offsets = [0, 256], sizes = [8, 128], strides = [1, 1]} : vector<8x512xf32> to vector<8x128xf32>
    %102 = math.tanh %101 : vector<8x128xf32>
    %103 = vector.extract_strided_slice %88 {offsets = [0, 384], sizes = [8, 128], strides = [1, 1]} : vector<8x512xf32> to vector<8x128xf32>
    %104 = arith.negf %103 : vector<8x128xf32>
    %105 = math.exp %104 : vector<8x128xf32>
    %cst_33 = arith.constant 1.000000e+00 : f32
    %106 = vector.broadcast %cst_33 : f32 to vector<8x128xf32>
    %107 = arith.addf %106, %105 : vector<8x128xf32>
    %108 = arith.divf %106, %107 : vector<8x128xf32>
    %109 = arith.mulf %100, %75 : vector<8x128xf32>
    %110 = arith.mulf %94, %102 : vector<8x128xf32>
    %111 = arith.addf %109, %110 : vector<8x128xf32>
    %112 = math.tanh %111 : vector<8x128xf32>
    %113 = arith.mulf %108, %112 : vector<8x128xf32>
    %114 = arith.truncf %113 : vector<8x128xf32> to vector<8x128xbf16>
    %115 = arith.index_cast %82 : i32 to index
    %c0_34 = arith.constant 0 : index
    %116 = vector.load %arg11[%115, %c0_34] : memref<64x128xbf16, #tpu.memory_space<vmem>>, vector<8x128xbf16>
    tpu.vector_store %arg11[%115, %c0_34], %114 {strides = array<i32>} : memref<64x128xbf16, #tpu.memory_space<vmem>>, vector<8x128xbf16>,
    %c3_i32 = arith.constant 3 : i32
    %c8_i32_35 = arith.constant 8 : i32
    %117 = arith.muli %c3_i32, %c8_i32_35 : i32
    %118 = tpu.assume_multiple %117, 8 : i32
    %119 = arith.index_cast %118 : i32 to index
    %c0_36 = arith.constant 0 : index
    %120 = vector.load %arg10[%119, %c0_36] : memref<64x512xf32, #tpu.memory_space<vmem>>, vector<8x512xf32>
    %121 = arith.truncf %113 : vector<8x128xf32> to vector<8x128xbf16>
    %c0_37 = arith.constant 0 : index
    %c0_38 = arith.constant 0 : index
    %122 = vector.load %arg2[%c0_37, %c0_38] : memref<128x512xbf16, #tpu.memory_space<vmem>>, vector<128x512xbf16>
    %cst_39 = arith.constant dense<0.000000e+00> : vector<8x512xf32>
    %123 = tpu.matmul %121, %122, %cst_39 {dimension_numbers = #tpu.dot_dimension_numbers<[1], [0], [0], [1], [0, 0, 1, 1], [], []>} : vector<8x128xbf16>, vector<128x512xbf16>, vector<8x512xf32> -> vector<8x512xf32>
    %124 = arith.addf %120, %123 : vector<8x512xf32>
    %125 = vector.extract_strided_slice %124 {offsets = [0, 0], sizes = [8, 128], strides = [1, 1]} : vector<8x512xf32> to vector<8x128xf32>
    %126 = arith.negf %125 : vector<8x128xf32>
    %127 = math.exp %126 : vector<8x128xf32>
    %cst_40 = arith.constant 1.000000e+00 : f32
    %128 = vector.broadcast %cst_40 : f32 to vector<8x128xf32>
    %129 = arith.addf %128, %127 : vector<8x128xf32>
    %130 = arith.divf %128, %129 : vector<8x128xf32>
    %131 = vector.extract_strided_slice %124 {offsets = [0, 128], sizes = [8, 128], strides = [1, 1]} : vector<8x512xf32> to vector<8x128xf32>
    %132 = arith.negf %131 : vector<8x128xf32>
    %133 = math.exp %132 : vector<8x128xf32>
    %cst_41 = arith.constant 1.000000e+00 : f32
    %134 = vector.broadcast %cst_41 : f32 to vector<8x128xf32>
    %135 = arith.addf %134, %133 : vector<8x128xf32>
    %136 = arith.divf %134, %135 : vector<8x128xf32>
    %137 = vector.extract_strided_slice %124 {offsets = [0, 256], sizes = [8, 128], strides = [1, 1]} : vector<8x512xf32> to vector<8x128xf32>
    %138 = math.tanh %137 : vector<8x128xf32>
    %139 = vector.extract_strided_slice %124 {offsets = [0, 384], sizes = [8, 128], strides = [1, 1]} : vector<8x512xf32> to vector<8x128xf32>
    %140 = arith.negf %139 : vector<8x128xf32>
    %141 = math.exp %140 : vector<8x128xf32>
    %cst_42 = arith.constant 1.000000e+00 : f32
    %142 = vector.broadcast %cst_42 : f32 to vector<8x128xf32>
    %143 = arith.addf %142, %141 : vector<8x128xf32>
    %144 = arith.divf %142, %143 : vector<8x128xf32>
    %145 = arith.mulf %136, %111 : vector<8x128xf32>
    %146 = arith.mulf %130, %138 : vector<8x128xf32>
    %147 = arith.addf %145, %146 : vector<8x128xf32>
    %148 = math.tanh %147 : vector<8x128xf32>
    %149 = arith.mulf %144, %148 : vector<8x128xf32>
    %150 = arith.truncf %149 : vector<8x128xf32> to vector<8x128xbf16>
    %151 = arith.index_cast %118 : i32 to index
    %c0_43 = arith.constant 0 : index
    %152 = vector.load %arg11[%151, %c0_43] : memref<64x128xbf16, #tpu.memory_space<vmem>>, vector<8x128xbf16>
    tpu.vector_store %arg11[%151, %c0_43], %150 {strides = array<i32>} : memref<64x128xbf16, #tpu.memory_space<vmem>>, vector<8x128xbf16>,
    %c4_i32 = arith.constant 4 : i32
    %c8_i32_44 = arith.constant 8 : i32
    %153 = arith.muli %c4_i32, %c8_i32_44 : i32
    %154 = tpu.assume_multiple %153, 8 : i32
    %155 = arith.index_cast %154 : i32 to index
    %c0_45 = arith.constant 0 : index
    %156 = vector.load %arg10[%155, %c0_45] : memref<64x512xf32, #tpu.memory_space<vmem>>, vector<8x512xf32>
    %157 = arith.truncf %149 : vector<8x128xf32> to vector<8x128xbf16>
    %c0_46 = arith.constant 0 : index
    %c0_47 = arith.constant 0 : index
    %158 = vector.load %arg2[%c0_46, %c0_47] : memref<128x512xbf16, #tpu.memory_space<vmem>>, vector<128x512xbf16>
    %cst_48 = arith.constant dense<0.000000e+00> : vector<8x512xf32>
    %159 = tpu.matmul %157, %158, %cst_48 {dimension_numbers = #tpu.dot_dimension_numbers<[1], [0], [0], [1], [0, 0, 1, 1], [], []>} : vector<8x128xbf16>, vector<128x512xbf16>, vector<8x512xf32> -> vector<8x512xf32>
    %160 = arith.addf %156, %159 : vector<8x512xf32>
    %161 = vector.extract_strided_slice %160 {offsets = [0, 0], sizes = [8, 128], strides = [1, 1]} : vector<8x512xf32> to vector<8x128xf32>
    %162 = arith.negf %161 : vector<8x128xf32>
    %163 = math.exp %162 : vector<8x128xf32>
    %cst_49 = arith.constant 1.000000e+00 : f32
    %164 = vector.broadcast %cst_49 : f32 to vector<8x128xf32>
    %165 = arith.addf %164, %163 : vector<8x128xf32>
    %166 = arith.divf %164, %165 : vector<8x128xf32>
    %167 = vector.extract_strided_slice %160 {offsets = [0, 128], sizes = [8, 128], strides = [1, 1]} : vector<8x512xf32> to vector<8x128xf32>
    %168 = arith.negf %167 : vector<8x128xf32>
    %169 = math.exp %168 : vector<8x128xf32>
    %cst_50 = arith.constant 1.000000e+00 : f32
    %170 = vector.broadcast %cst_50 : f32 to vector<8x128xf32>
    %171 = arith.addf %170, %169 : vector<8x128xf32>
    %172 = arith.divf %170, %171 : vector<8x128xf32>
    %173 = vector.extract_strided_slice %160 {offsets = [0, 256], sizes = [8, 128], strides = [1, 1]} : vector<8x512xf32> to vector<8x128xf32>
    %174 = math.tanh %173 : vector<8x128xf32>
    %175 = vector.extract_strided_slice %160 {offsets = [0, 384], sizes = [8, 128], strides = [1, 1]} : vector<8x512xf32> to vector<8x128xf32>
    %176 = arith.negf %175 : vector<8x128xf32>
    %177 = math.exp %176 : vector<8x128xf32>
    %cst_51 = arith.constant 1.000000e+00 : f32
    %178 = vector.broadcast %cst_51 : f32 to vector<8x128xf32>
    %179 = arith.addf %178, %177 : vector<8x128xf32>
    %180 = arith.divf %178, %179 : vector<8x128xf32>
    %181 = arith.mulf %172, %147 : vector<8x128xf32>
    %182 = arith.mulf %166, %174 : vector<8x128xf32>
    %183 = arith.addf %181, %182 : vector<8x128xf32>
    %184 = math.tanh %183 : vector<8x128xf32>
    %185 = arith.mulf %180, %184 : vector<8x128xf32>
    %186 = arith.truncf %185 : vector<8x128xf32> to vector<8x128xbf16>
    %187 = arith.index_cast %154 : i32 to index
    %c0_52 = arith.constant 0 : index
    %188 = vector.load %arg11[%187, %c0_52] : memref<64x128xbf16, #tpu.memory_space<vmem>>, vector<8x128xbf16>
    tpu.vector_store %arg11[%187, %c0_52], %186 {strides = array<i32>} : memref<64x128xbf16, #tpu.memory_space<vmem>>, vector<8x128xbf16>,
    %c5_i32 = arith.constant 5 : i32
    %c8_i32_53 = arith.constant 8 : i32
    %189 = arith.muli %c5_i32, %c8_i32_53 : i32
    %190 = tpu.assume_multiple %189, 8 : i32
    %191 = arith.index_cast %190 : i32 to index
    %c0_54 = arith.constant 0 : index
    %192 = vector.load %arg10[%191, %c0_54] : memref<64x512xf32, #tpu.memory_space<vmem>>, vector<8x512xf32>
    %193 = arith.truncf %185 : vector<8x128xf32> to vector<8x128xbf16>
    %c0_55 = arith.constant 0 : index
    %c0_56 = arith.constant 0 : index
    %194 = vector.load %arg2[%c0_55, %c0_56] : memref<128x512xbf16, #tpu.memory_space<vmem>>, vector<128x512xbf16>
    %cst_57 = arith.constant dense<0.000000e+00> : vector<8x512xf32>
    %195 = tpu.matmul %193, %194, %cst_57 {dimension_numbers = #tpu.dot_dimension_numbers<[1], [0], [0], [1], [0, 0, 1, 1], [], []>} : vector<8x128xbf16>, vector<128x512xbf16>, vector<8x512xf32> -> vector<8x512xf32>
    %196 = arith.addf %192, %195 : vector<8x512xf32>
    %197 = vector.extract_strided_slice %196 {offsets = [0, 0], sizes = [8, 128], strides = [1, 1]} : vector<8x512xf32> to vector<8x128xf32>
    %198 = arith.negf %197 : vector<8x128xf32>
    %199 = math.exp %198 : vector<8x128xf32>
    %cst_58 = arith.constant 1.000000e+00 : f32
    %200 = vector.broadcast %cst_58 : f32 to vector<8x128xf32>
    %201 = arith.addf %200, %199 : vector<8x128xf32>
    %202 = arith.divf %200, %201 : vector<8x128xf32>
    %203 = vector.extract_strided_slice %196 {offsets = [0, 128], sizes = [8, 128], strides = [1, 1]} : vector<8x512xf32> to vector<8x128xf32>
    %204 = arith.negf %203 : vector<8x128xf32>
    %205 = math.exp %204 : vector<8x128xf32>
    %cst_59 = arith.constant 1.000000e+00 : f32
    %206 = vector.broadcast %cst_59 : f32 to vector<8x128xf32>
    %207 = arith.addf %206, %205 : vector<8x128xf32>
    %208 = arith.divf %206, %207 : vector<8x128xf32>
    %209 = vector.extract_strided_slice %196 {offsets = [0, 256], sizes = [8, 128], strides = [1, 1]} : vector<8x512xf32> to vector<8x128xf32>
    %210 = math.tanh %209 : vector<8x128xf32>
    %211 = vector.extract_strided_slice %196 {offsets = [0, 384], sizes = [8, 128], strides = [1, 1]} : vector<8x512xf32> to vector<8x128xf32>
    %212 = arith.negf %211 : vector<8x128xf32>
    %213 = math.exp %212 : vector<8x128xf32>
    %cst_60 = arith.constant 1.000000e+00 : f32
    %214 = vector.broadcast %cst_60 : f32 to vector<8x128xf32>
    %215 = arith.addf %214, %213 : vector<8x128xf32>
    %216 = arith.divf %214, %215 : vector<8x128xf32>
    %217 = arith.mulf %208, %183 : vector<8x128xf32>
    %218 = arith.mulf %202, %210 : vector<8x128xf32>
    %219 = arith.addf %217, %218 : vector<8x128xf32>
    %220 = math.tanh %219 : vector<8x128xf32>
    %221 = arith.mulf %216, %220 : vector<8x128xf32>
    %222 = arith.truncf %221 : vector<8x128xf32> to vector<8x128xbf16>
    %223 = arith.index_cast %190 : i32 to index
    %c0_61 = arith.constant 0 : index
    %224 = vector.load %arg11[%223, %c0_61] : memref<64x128xbf16, #tpu.memory_space<vmem>>, vector<8x128xbf16>
    tpu.vector_store %arg11[%223, %c0_61], %222 {strides = array<i32>} : memref<64x128xbf16, #tpu.memory_space<vmem>>, vector<8x128xbf16>,
    %c6_i32 = arith.constant 6 : i32
    %c8_i32_62 = arith.constant 8 : i32
    %225 = arith.muli %c6_i32, %c8_i32_62 : i32
    %226 = tpu.assume_multiple %225, 8 : i32
    %227 = arith.index_cast %226 : i32 to index
    %c0_63 = arith.constant 0 : index
    %228 = vector.load %arg10[%227, %c0_63] : memref<64x512xf32, #tpu.memory_space<vmem>>, vector<8x512xf32>
    %229 = arith.truncf %221 : vector<8x128xf32> to vector<8x128xbf16>
    %c0_64 = arith.constant 0 : index
    %c0_65 = arith.constant 0 : index
    %230 = vector.load %arg2[%c0_64, %c0_65] : memref<128x512xbf16, #tpu.memory_space<vmem>>, vector<128x512xbf16>
    %cst_66 = arith.constant dense<0.000000e+00> : vector<8x512xf32>
    %231 = tpu.matmul %229, %230, %cst_66 {dimension_numbers = #tpu.dot_dimension_numbers<[1], [0], [0], [1], [0, 0, 1, 1], [], []>} : vector<8x128xbf16>, vector<128x512xbf16>, vector<8x512xf32> -> vector<8x512xf32>
    %232 = arith.addf %228, %231 : vector<8x512xf32>
    %233 = vector.extract_strided_slice %232 {offsets = [0, 0], sizes = [8, 128], strides = [1, 1]} : vector<8x512xf32> to vector<8x128xf32>
    %234 = arith.negf %233 : vector<8x128xf32>
    %235 = math.exp %234 : vector<8x128xf32>
    %cst_67 = arith.constant 1.000000e+00 : f32
    %236 = vector.broadcast %cst_67 : f32 to vector<8x128xf32>
    %237 = arith.addf %236, %235 : vector<8x128xf32>
    %238 = arith.divf %236, %237 : vector<8x128xf32>
    %239 = vector.extract_strided_slice %232 {offsets = [0, 128], sizes = [8, 128], strides = [1, 1]} : vector<8x512xf32> to vector<8x128xf32>
    %240 = arith.negf %239 : vector<8x128xf32>
    %241 = math.exp %240 : vector<8x128xf32>
    %cst_68 = arith.constant 1.000000e+00 : f32
    %242 = vector.broadcast %cst_68 : f32 to vector<8x128xf32>
    %243 = arith.addf %242, %241 : vector<8x128xf32>
    %244 = arith.divf %242, %243 : vector<8x128xf32>
    %245 = vector.extract_strided_slice %232 {offsets = [0, 256], sizes = [8, 128], strides = [1, 1]} : vector<8x512xf32> to vector<8x128xf32>
    %246 = math.tanh %245 : vector<8x128xf32>
    %247 = vector.extract_strided_slice %232 {offsets = [0, 384], sizes = [8, 128], strides = [1, 1]} : vector<8x512xf32> to vector<8x128xf32>
    %248 = arith.negf %247 : vector<8x128xf32>
    %249 = math.exp %248 : vector<8x128xf32>
    %cst_69 = arith.constant 1.000000e+00 : f32
    %250 = vector.broadcast %cst_69 : f32 to vector<8x128xf32>
    %251 = arith.addf %250, %249 : vector<8x128xf32>
    %252 = arith.divf %250, %251 : vector<8x128xf32>
    %253 = arith.mulf %244, %219 : vector<8x128xf32>
    %254 = arith.mulf %238, %246 : vector<8x128xf32>
    %255 = arith.addf %253, %254 : vector<8x128xf32>
    %256 = math.tanh %255 : vector<8x128xf32>
    %257 = arith.mulf %252, %256 : vector<8x128xf32>
    %258 = arith.truncf %257 : vector<8x128xf32> to vector<8x128xbf16>
    %259 = arith.index_cast %226 : i32 to index
    %c0_70 = arith.constant 0 : index
    %260 = vector.load %arg11[%259, %c0_70] : memref<64x128xbf16, #tpu.memory_space<vmem>>, vector<8x128xbf16>
    tpu.vector_store %arg11[%259, %c0_70], %258 {strides = array<i32>} : memref<64x128xbf16, #tpu.memory_space<vmem>>, vector<8x128xbf16>,
    %c7_i32 = arith.constant 7 : i32
    %c8_i32_71 = arith.constant 8 : i32
    %261 = arith.muli %c7_i32, %c8_i32_71 : i32
    %262 = tpu.assume_multiple %261, 8 : i32
    %263 = arith.index_cast %262 : i32 to index
    %c0_72 = arith.constant 0 : index
    %264 = vector.load %arg10[%263, %c0_72] : memref<64x512xf32, #tpu.memory_space<vmem>>, vector<8x512xf32>
    %265 = arith.truncf %257 : vector<8x128xf32> to vector<8x128xbf16>
    %c0_73 = arith.constant 0 : index
    %c0_74 = arith.constant 0 : index
    %266 = vector.load %arg2[%c0_73, %c0_74] : memref<128x512xbf16, #tpu.memory_space<vmem>>, vector<128x512xbf16>
    %cst_75 = arith.constant dense<0.000000e+00> : vector<8x512xf32>
    %267 = tpu.matmul %265, %266, %cst_75 {dimension_numbers = #tpu.dot_dimension_numbers<[1], [0], [0], [1], [0, 0, 1, 1], [], []>} : vector<8x128xbf16>, vector<128x512xbf16>, vector<8x512xf32> -> vector<8x512xf32>
    %268 = arith.addf %264, %267 : vector<8x512xf32>
    %269 = vector.extract_strided_slice %268 {offsets = [0, 0], sizes = [8, 128], strides = [1, 1]} : vector<8x512xf32> to vector<8x128xf32>
    %270 = arith.negf %269 : vector<8x128xf32>
    %271 = math.exp %270 : vector<8x128xf32>
    %cst_76 = arith.constant 1.000000e+00 : f32
    %272 = vector.broadcast %cst_76 : f32 to vector<8x128xf32>
    %273 = arith.addf %272, %271 : vector<8x128xf32>
    %274 = arith.divf %272, %273 : vector<8x128xf32>
    %275 = vector.extract_strided_slice %268 {offsets = [0, 128], sizes = [8, 128], strides = [1, 1]} : vector<8x512xf32> to vector<8x128xf32>
    %276 = arith.negf %275 : vector<8x128xf32>
    %277 = math.exp %276 : vector<8x128xf32>
    %cst_77 = arith.constant 1.000000e+00 : f32
    %278 = vector.broadcast %cst_77 : f32 to vector<8x128xf32>
    %279 = arith.addf %278, %277 : vector<8x128xf32>
    %280 = arith.divf %278, %279 : vector<8x128xf32>
    %281 = vector.extract_strided_slice %268 {offsets = [0, 256], sizes = [8, 128], strides = [1, 1]} : vector<8x512xf32> to vector<8x128xf32>
    %282 = math.tanh %281 : vector<8x128xf32>
    %283 = vector.extract_strided_slice %268 {offsets = [0, 384], sizes = [8, 128], strides = [1, 1]} : vector<8x512xf32> to vector<8x128xf32>
    %284 = arith.negf %283 : vector<8x128xf32>
    %285 = math.exp %284 : vector<8x128xf32>
    %cst_78 = arith.constant 1.000000e+00 : f32
    %286 = vector.broadcast %cst_78 : f32 to vector<8x128xf32>
    %287 = arith.addf %286, %285 : vector<8x128xf32>
    %288 = arith.divf %286, %287 : vector<8x128xf32>
    %289 = arith.mulf %280, %255 : vector<8x128xf32>
    %290 = arith.mulf %274, %282 : vector<8x128xf32>
    %291 = arith.addf %289, %290 : vector<8x128xf32>
    %292 = math.tanh %291 : vector<8x128xf32>
    %293 = arith.mulf %288, %292 : vector<8x128xf32>
    %294 = arith.truncf %293 : vector<8x128xf32> to vector<8x128xbf16>
    %295 = arith.index_cast %262 : i32 to index
    %c0_79 = arith.constant 0 : index
    %296 = vector.load %arg11[%295, %c0_79] : memref<64x128xbf16, #tpu.memory_space<vmem>>, vector<8x128xbf16>
    tpu.vector_store %arg11[%295, %c0_79], %294 {strides = array<i32>} : memref<64x128xbf16, #tpu.memory_space<vmem>>, vector<8x128xbf16>,
    %c8_i32_80 = arith.constant 8 : i32
    %c0_81 = arith.constant 0 : index
    %c0_82 = arith.constant 0 : index
    %297 = vector.load %arg11[%c0_81, %c0_82] : memref<64x128xbf16, #tpu.memory_space<vmem>>, vector<64x128xbf16>
    %c0_83 = arith.constant 0 : index
    %c0_84 = arith.constant 0 : index
    %298 = vector.load %arg4[%c0_83, %c0_84] : memref<128x512xbf16, #tpu.memory_space<vmem>>, vector<128x512xbf16>
    %cst_85 = arith.constant dense<0.000000e+00> : vector<64x512xf32>
    %299 = tpu.matmul %297, %298, %cst_85 {dimension_numbers = #tpu.dot_dimension_numbers<[1], [0], [0], [1], [0, 0, 1, 1], [], []>} : vector<64x128xbf16>, vector<128x512xbf16>, vector<64x512xf32> -> vector<64x512xf32>
    %c0_86 = arith.constant 0 : index
    %c0_87 = arith.constant 0 : index
    %300 = vector.load %arg6[%c0_86, %c0_87] : memref<1x512xf32, #tpu.memory_space<vmem>>, vector<1x512xf32>
    %301 = vector.broadcast %300 : vector<1x512xf32> to vector<64x512xf32>
    %302 = arith.addf %299, %301 : vector<64x512xf32>
    %c0_88 = arith.constant 0 : index
    %c0_89 = arith.constant 0 : index
    %303 = vector.load %arg10[%c0_88, %c0_89] : memref<64x512xf32, #tpu.memory_space<vmem>>, vector<64x512xf32>
    tpu.vector_store %arg10[%c0_88, %c0_89], %302 {strides = array<i32>} : memref<64x512xf32, #tpu.memory_space<vmem>>, vector<64x512xf32>,
    %cst_90 = arith.constant 0.000000e+00 : f32
    %304 = vector.broadcast %cst_90 : f32 to vector<8x128xf32>
    %cst_91 = arith.constant 0.000000e+00 : f32
    %305 = vector.broadcast %cst_91 : f32 to vector<8x128xf32>
    %c0_i32_92 = arith.constant 0 : i32
    %c8_i32_93 = arith.constant 8 : i32
    %306 = arith.muli %c0_i32_92, %c8_i32_93 : i32
    %307 = tpu.assume_multiple %306, 8 : i32
    %308 = arith.index_cast %307 : i32 to index
    %c0_94 = arith.constant 0 : index
    %309 = vector.load %arg10[%308, %c0_94] : memref<64x512xf32, #tpu.memory_space<vmem>>, vector<8x512xf32>
    %310 = arith.truncf %304 : vector<8x128xf32> to vector<8x128xbf16>
    %c0_95 = arith.constant 0 : index
    %c0_96 = arith.constant 0 : index
    %311 = vector.load %arg5[%c0_95, %c0_96] : memref<128x512xbf16, #tpu.memory_space<vmem>>, vector<128x512xbf16>
    %cst_97 = arith.constant dense<0.000000e+00> : vector<8x512xf32>
    %312 = tpu.matmul %310, %311, %cst_97 {dimension_numbers = #tpu.dot_dimension_numbers<[1], [0], [0], [1], [0, 0, 1, 1], [], []>} : vector<8x128xbf16>, vector<128x512xbf16>, vector<8x512xf32> -> vector<8x512xf32>
    %313 = arith.addf %309, %312 : vector<8x512xf32>
    %314 = vector.extract_strided_slice %313 {offsets = [0, 0], sizes = [8, 128], strides = [1, 1]} : vector<8x512xf32> to vector<8x128xf32>
    %315 = arith.negf %314 : vector<8x128xf32>
    %316 = math.exp %315 : vector<8x128xf32>
    %cst_98 = arith.constant 1.000000e+00 : f32
    %317 = vector.broadcast %cst_98 : f32 to vector<8x128xf32>
    %318 = arith.addf %317, %316 : vector<8x128xf32>
    %319 = arith.divf %317, %318 : vector<8x128xf32>
    %320 = vector.extract_strided_slice %313 {offsets = [0, 128], sizes = [8, 128], strides = [1, 1]} : vector<8x512xf32> to vector<8x128xf32>
    %321 = arith.negf %320 : vector<8x128xf32>
    %322 = math.exp %321 : vector<8x128xf32>
    %cst_99 = arith.constant 1.000000e+00 : f32
    %323 = vector.broadcast %cst_99 : f32 to vector<8x128xf32>
    %324 = arith.addf %323, %322 : vector<8x128xf32>
    %325 = arith.divf %323, %324 : vector<8x128xf32>
    %326 = vector.extract_strided_slice %313 {offsets = [0, 256], sizes = [8, 128], strides = [1, 1]} : vector<8x512xf32> to vector<8x128xf32>
    %327 = math.tanh %326 : vector<8x128xf32>
    %328 = vector.extract_strided_slice %313 {offsets = [0, 384], sizes = [8, 128], strides = [1, 1]} : vector<8x512xf32> to vector<8x128xf32>
    %329 = arith.negf %328 : vector<8x128xf32>
    %330 = math.exp %329 : vector<8x128xf32>
    %cst_100 = arith.constant 1.000000e+00 : f32
    %331 = vector.broadcast %cst_100 : f32 to vector<8x128xf32>
    %332 = arith.addf %331, %330 : vector<8x128xf32>
    %333 = arith.divf %331, %332 : vector<8x128xf32>
    %334 = arith.mulf %325, %305 : vector<8x128xf32>
    %335 = arith.mulf %319, %327 : vector<8x128xf32>
    %336 = arith.addf %334, %335 : vector<8x128xf32>
    %337 = math.tanh %336 : vector<8x128xf32>
    %338 = arith.mulf %333, %337 : vector<8x128xf32>
    %c1_i32_101 = arith.constant 1 : i32
    %c8_i32_102 = arith.constant 8 : i32
    %339 = arith.muli %c1_i32_101, %c8_i32_102 : i32
    %340 = tpu.assume_multiple %339, 8 : i32
    %341 = arith.index_cast %340 : i32 to index
    %c0_103 = arith.constant 0 : index
    %342 = vector.load %arg10[%341, %c0_103] : memref<64x512xf32, #tpu.memory_space<vmem>>, vector<8x512xf32>
    %343 = arith.truncf %338 : vector<8x128xf32> to vector<8x128xbf16>
    %c0_104 = arith.constant 0 : index
    %c0_105 = arith.constant 0 : index
    %344 = vector.load %arg5[%c0_104, %c0_105] : memref<128x512xbf16, #tpu.memory_space<vmem>>, vector<128x512xbf16>
    %cst_106 = arith.constant dense<0.000000e+00> : vector<8x512xf32>
    %345 = tpu.matmul %343, %344, %cst_106 {dimension_numbers = #tpu.dot_dimension_numbers<[1], [0], [0], [1], [0, 0, 1, 1], [], []>} : vector<8x128xbf16>, vector<128x512xbf16>, vector<8x512xf32> -> vector<8x512xf32>
    %346 = arith.addf %342, %345 : vector<8x512xf32>
    %347 = vector.extract_strided_slice %346 {offsets = [0, 0], sizes = [8, 128], strides = [1, 1]} : vector<8x512xf32> to vector<8x128xf32>
    %348 = arith.negf %347 : vector<8x128xf32>
    %349 = math.exp %348 : vector<8x128xf32>
    %cst_107 = arith.constant 1.000000e+00 : f32
    %350 = vector.broadcast %cst_107 : f32 to vector<8x128xf32>
    %351 = arith.addf %350, %349 : vector<8x128xf32>
    %352 = arith.divf %350, %351 : vector<8x128xf32>
    %353 = vector.extract_strided_slice %346 {offsets = [0, 128], sizes = [8, 128], strides = [1, 1]} : vector<8x512xf32> to vector<8x128xf32>
    %354 = arith.negf %353 : vector<8x128xf32>
    %355 = math.exp %354 : vector<8x128xf32>
    %cst_108 = arith.constant 1.000000e+00 : f32
    %356 = vector.broadcast %cst_108 : f32 to vector<8x128xf32>
    %357 = arith.addf %356, %355 : vector<8x128xf32>
    %358 = arith.divf %356, %357 : vector<8x128xf32>
    %359 = vector.extract_strided_slice %346 {offsets = [0, 256], sizes = [8, 128], strides = [1, 1]} : vector<8x512xf32> to vector<8x128xf32>
    %360 = math.tanh %359 : vector<8x128xf32>
    %361 = vector.extract_strided_slice %346 {offsets = [0, 384], sizes = [8, 128], strides = [1, 1]} : vector<8x512xf32> to vector<8x128xf32>
    %362 = arith.negf %361 : vector<8x128xf32>
    %363 = math.exp %362 : vector<8x128xf32>
    %cst_109 = arith.constant 1.000000e+00 : f32
    %364 = vector.broadcast %cst_109 : f32 to vector<8x128xf32>
    %365 = arith.addf %364, %363 : vector<8x128xf32>
    %366 = arith.divf %364, %365 : vector<8x128xf32>
    %367 = arith.mulf %358, %336 : vector<8x128xf32>
    %368 = arith.mulf %352, %360 : vector<8x128xf32>
    %369 = arith.addf %367, %368 : vector<8x128xf32>
    %370 = math.tanh %369 : vector<8x128xf32>
    %371 = arith.mulf %366, %370 : vector<8x128xf32>
    %c2_i32_110 = arith.constant 2 : i32
    %c8_i32_111 = arith.constant 8 : i32
    %372 = arith.muli %c2_i32_110, %c8_i32_111 : i32
    %373 = tpu.assume_multiple %372, 8 : i32
    %374 = arith.index_cast %373 : i32 to index
    %c0_112 = arith.constant 0 : index
    %375 = vector.load %arg10[%374, %c0_112] : memref<64x512xf32, #tpu.memory_space<vmem>>, vector<8x512xf32>
    %376 = arith.truncf %371 : vector<8x128xf32> to vector<8x128xbf16>
    %c0_113 = arith.constant 0 : index
    %c0_114 = arith.constant 0 : index
    %377 = vector.load %arg5[%c0_113, %c0_114] : memref<128x512xbf16, #tpu.memory_space<vmem>>, vector<128x512xbf16>
    %cst_115 = arith.constant dense<0.000000e+00> : vector<8x512xf32>
    %378 = tpu.matmul %376, %377, %cst_115 {dimension_numbers = #tpu.dot_dimension_numbers<[1], [0], [0], [1], [0, 0, 1, 1], [], []>} : vector<8x128xbf16>, vector<128x512xbf16>, vector<8x512xf32> -> vector<8x512xf32>
    %379 = arith.addf %375, %378 : vector<8x512xf32>
    %380 = vector.extract_strided_slice %379 {offsets = [0, 0], sizes = [8, 128], strides = [1, 1]} : vector<8x512xf32> to vector<8x128xf32>
    %381 = arith.negf %380 : vector<8x128xf32>
    %382 = math.exp %381 : vector<8x128xf32>
    %cst_116 = arith.constant 1.000000e+00 : f32
    %383 = vector.broadcast %cst_116 : f32 to vector<8x128xf32>
    %384 = arith.addf %383, %382 : vector<8x128xf32>
    %385 = arith.divf %383, %384 : vector<8x128xf32>
    %386 = vector.extract_strided_slice %379 {offsets = [0, 128], sizes = [8, 128], strides = [1, 1]} : vector<8x512xf32> to vector<8x128xf32>
    %387 = arith.negf %386 : vector<8x128xf32>
    %388 = math.exp %387 : vector<8x128xf32>
    %cst_117 = arith.constant 1.000000e+00 : f32
    %389 = vector.broadcast %cst_117 : f32 to vector<8x128xf32>
    %390 = arith.addf %389, %388 : vector<8x128xf32>
    %391 = arith.divf %389, %390 : vector<8x128xf32>
    %392 = vector.extract_strided_slice %379 {offsets = [0, 256], sizes = [8, 128], strides = [1, 1]} : vector<8x512xf32> to vector<8x128xf32>
    %393 = math.tanh %392 : vector<8x128xf32>
    %394 = vector.extract_strided_slice %379 {offsets = [0, 384], sizes = [8, 128], strides = [1, 1]} : vector<8x512xf32> to vector<8x128xf32>
    %395 = arith.negf %394 : vector<8x128xf32>
    %396 = math.exp %395 : vector<8x128xf32>
    %cst_118 = arith.constant 1.000000e+00 : f32
    %397 = vector.broadcast %cst_118 : f32 to vector<8x128xf32>
    %398 = arith.addf %397, %396 : vector<8x128xf32>
    %399 = arith.divf %397, %398 : vector<8x128xf32>
    %400 = arith.mulf %391, %369 : vector<8x128xf32>
    %401 = arith.mulf %385, %393 : vector<8x128xf32>
    %402 = arith.addf %400, %401 : vector<8x128xf32>
    %403 = math.tanh %402 : vector<8x128xf32>
    %404 = arith.mulf %399, %403 : vector<8x128xf32>
    %c3_i32_119 = arith.constant 3 : i32
    %c8_i32_120 = arith.constant 8 : i32
    %405 = arith.muli %c3_i32_119, %c8_i32_120 : i32
    %406 = tpu.assume_multiple %405, 8 : i32
    %407 = arith.index_cast %406 : i32 to index
    %c0_121 = arith.constant 0 : index
    %408 = vector.load %arg10[%407, %c0_121] : memref<64x512xf32, #tpu.memory_space<vmem>>, vector<8x512xf32>
    %409 = arith.truncf %404 : vector<8x128xf32> to vector<8x128xbf16>
    %c0_122 = arith.constant 0 : index
    %c0_123 = arith.constant 0 : index
    %410 = vector.load %arg5[%c0_122, %c0_123] : memref<128x512xbf16, #tpu.memory_space<vmem>>, vector<128x512xbf16>
    %cst_124 = arith.constant dense<0.000000e+00> : vector<8x512xf32>
    %411 = tpu.matmul %409, %410, %cst_124 {dimension_numbers = #tpu.dot_dimension_numbers<[1], [0], [0], [1], [0, 0, 1, 1], [], []>} : vector<8x128xbf16>, vector<128x512xbf16>, vector<8x512xf32> -> vector<8x512xf32>
    %412 = arith.addf %408, %411 : vector<8x512xf32>
    %413 = vector.extract_strided_slice %412 {offsets = [0, 0], sizes = [8, 128], strides = [1, 1]} : vector<8x512xf32> to vector<8x128xf32>
    %414 = arith.negf %413 : vector<8x128xf32>
    %415 = math.exp %414 : vector<8x128xf32>
    %cst_125 = arith.constant 1.000000e+00 : f32
    %416 = vector.broadcast %cst_125 : f32 to vector<8x128xf32>
    %417 = arith.addf %416, %415 : vector<8x128xf32>
    %418 = arith.divf %416, %417 : vector<8x128xf32>
    %419 = vector.extract_strided_slice %412 {offsets = [0, 128], sizes = [8, 128], strides = [1, 1]} : vector<8x512xf32> to vector<8x128xf32>
    %420 = arith.negf %419 : vector<8x128xf32>
    %421 = math.exp %420 : vector<8x128xf32>
    %cst_126 = arith.constant 1.000000e+00 : f32
    %422 = vector.broadcast %cst_126 : f32 to vector<8x128xf32>
    %423 = arith.addf %422, %421 : vector<8x128xf32>
    %424 = arith.divf %422, %423 : vector<8x128xf32>
    %425 = vector.extract_strided_slice %412 {offsets = [0, 256], sizes = [8, 128], strides = [1, 1]} : vector<8x512xf32> to vector<8x128xf32>
    %426 = math.tanh %425 : vector<8x128xf32>
    %427 = vector.extract_strided_slice %412 {offsets = [0, 384], sizes = [8, 128], strides = [1, 1]} : vector<8x512xf32> to vector<8x128xf32>
    %428 = arith.negf %427 : vector<8x128xf32>
    %429 = math.exp %428 : vector<8x128xf32>
    %cst_127 = arith.constant 1.000000e+00 : f32
    %430 = vector.broadcast %cst_127 : f32 to vector<8x128xf32>
    %431 = arith.addf %430, %429 : vector<8x128xf32>
    %432 = arith.divf %430, %431 : vector<8x128xf32>
    %433 = arith.mulf %424, %402 : vector<8x128xf32>
    %434 = arith.mulf %418, %426 : vector<8x128xf32>
    %435 = arith.addf %433, %434 : vector<8x128xf32>
    %436 = math.tanh %435 : vector<8x128xf32>
    %437 = arith.mulf %432, %436 : vector<8x128xf32>
    %c4_i32_128 = arith.constant 4 : i32
    %c8_i32_129 = arith.constant 8 : i32
    %438 = arith.muli %c4_i32_128, %c8_i32_129 : i32
    %439 = tpu.assume_multiple %438, 8 : i32
    %440 = arith.index_cast %439 : i32 to index
    %c0_130 = arith.constant 0 : index
    %441 = vector.load %arg10[%440, %c0_130] : memref<64x512xf32, #tpu.memory_space<vmem>>, vector<8x512xf32>
    %442 = arith.truncf %437 : vector<8x128xf32> to vector<8x128xbf16>
    %c0_131 = arith.constant 0 : index
    %c0_132 = arith.constant 0 : index
    %443 = vector.load %arg5[%c0_131, %c0_132] : memref<128x512xbf16, #tpu.memory_space<vmem>>, vector<128x512xbf16>
    %cst_133 = arith.constant dense<0.000000e+00> : vector<8x512xf32>
    %444 = tpu.matmul %442, %443, %cst_133 {dimension_numbers = #tpu.dot_dimension_numbers<[1], [0], [0], [1], [0, 0, 1, 1], [], []>} : vector<8x128xbf16>, vector<128x512xbf16>, vector<8x512xf32> -> vector<8x512xf32>
    %445 = arith.addf %441, %444 : vector<8x512xf32>
    %446 = vector.extract_strided_slice %445 {offsets = [0, 0], sizes = [8, 128], strides = [1, 1]} : vector<8x512xf32> to vector<8x128xf32>
    %447 = arith.negf %446 : vector<8x128xf32>
    %448 = math.exp %447 : vector<8x128xf32>
    %cst_134 = arith.constant 1.000000e+00 : f32
    %449 = vector.broadcast %cst_134 : f32 to vector<8x128xf32>
    %450 = arith.addf %449, %448 : vector<8x128xf32>
    %451 = arith.divf %449, %450 : vector<8x128xf32>
    %452 = vector.extract_strided_slice %445 {offsets = [0, 128], sizes = [8, 128], strides = [1, 1]} : vector<8x512xf32> to vector<8x128xf32>
    %453 = arith.negf %452 : vector<8x128xf32>
    %454 = math.exp %453 : vector<8x128xf32>
    %cst_135 = arith.constant 1.000000e+00 : f32
    %455 = vector.broadcast %cst_135 : f32 to vector<8x128xf32>
    %456 = arith.addf %455, %454 : vector<8x128xf32>
    %457 = arith.divf %455, %456 : vector<8x128xf32>
    %458 = vector.extract_strided_slice %445 {offsets = [0, 256], sizes = [8, 128], strides = [1, 1]} : vector<8x512xf32> to vector<8x128xf32>
    %459 = math.tanh %458 : vector<8x128xf32>
    %460 = vector.extract_strided_slice %445 {offsets = [0, 384], sizes = [8, 128], strides = [1, 1]} : vector<8x512xf32> to vector<8x128xf32>
    %461 = arith.negf %460 : vector<8x128xf32>
    %462 = math.exp %461 : vector<8x128xf32>
    %cst_136 = arith.constant 1.000000e+00 : f32
    %463 = vector.broadcast %cst_136 : f32 to vector<8x128xf32>
    %464 = arith.addf %463, %462 : vector<8x128xf32>
    %465 = arith.divf %463, %464 : vector<8x128xf32>
    %466 = arith.mulf %457, %435 : vector<8x128xf32>
    %467 = arith.mulf %451, %459 : vector<8x128xf32>
    %468 = arith.addf %466, %467 : vector<8x128xf32>
    %469 = math.tanh %468 : vector<8x128xf32>
    %470 = arith.mulf %465, %469 : vector<8x128xf32>
    %c5_i32_137 = arith.constant 5 : i32
    %c8_i32_138 = arith.constant 8 : i32
    %471 = arith.muli %c5_i32_137, %c8_i32_138 : i32
    %472 = tpu.assume_multiple %471, 8 : i32
    %473 = arith.index_cast %472 : i32 to index
    %c0_139 = arith.constant 0 : index
    %474 = vector.load %arg10[%473, %c0_139] : memref<64x512xf32, #tpu.memory_space<vmem>>, vector<8x512xf32>
    %475 = arith.truncf %470 : vector<8x128xf32> to vector<8x128xbf16>
    %c0_140 = arith.constant 0 : index
    %c0_141 = arith.constant 0 : index
    %476 = vector.load %arg5[%c0_140, %c0_141] : memref<128x512xbf16, #tpu.memory_space<vmem>>, vector<128x512xbf16>
    %cst_142 = arith.constant dense<0.000000e+00> : vector<8x512xf32>
    %477 = tpu.matmul %475, %476, %cst_142 {dimension_numbers = #tpu.dot_dimension_numbers<[1], [0], [0], [1], [0, 0, 1, 1], [], []>} : vector<8x128xbf16>, vector<128x512xbf16>, vector<8x512xf32> -> vector<8x512xf32>
    %478 = arith.addf %474, %477 : vector<8x512xf32>
    %479 = vector.extract_strided_slice %478 {offsets = [0, 0], sizes = [8, 128], strides = [1, 1]} : vector<8x512xf32> to vector<8x128xf32>
    %480 = arith.negf %479 : vector<8x128xf32>
    %481 = math.exp %480 : vector<8x128xf32>
    %cst_143 = arith.constant 1.000000e+00 : f32
    %482 = vector.broadcast %cst_143 : f32 to vector<8x128xf32>
    %483 = arith.addf %482, %481 : vector<8x128xf32>
    %484 = arith.divf %482, %483 : vector<8x128xf32>
    %485 = vector.extract_strided_slice %478 {offsets = [0, 128], sizes = [8, 128], strides = [1, 1]} : vector<8x512xf32> to vector<8x128xf32>
    %486 = arith.negf %485 : vector<8x128xf32>
    %487 = math.exp %486 : vector<8x128xf32>
    %cst_144 = arith.constant 1.000000e+00 : f32
    %488 = vector.broadcast %cst_144 : f32 to vector<8x128xf32>
    %489 = arith.addf %488, %487 : vector<8x128xf32>
    %490 = arith.divf %488, %489 : vector<8x128xf32>
    %491 = vector.extract_strided_slice %478 {offsets = [0, 256], sizes = [8, 128], strides = [1, 1]} : vector<8x512xf32> to vector<8x128xf32>
    %492 = math.tanh %491 : vector<8x128xf32>
    %493 = vector.extract_strided_slice %478 {offsets = [0, 384], sizes = [8, 128], strides = [1, 1]} : vector<8x512xf32> to vector<8x128xf32>
    %494 = arith.negf %493 : vector<8x128xf32>
    %495 = math.exp %494 : vector<8x128xf32>
    %cst_145 = arith.constant 1.000000e+00 : f32
    %496 = vector.broadcast %cst_145 : f32 to vector<8x128xf32>
    %497 = arith.addf %496, %495 : vector<8x128xf32>
    %498 = arith.divf %496, %497 : vector<8x128xf32>
    %499 = arith.mulf %490, %468 : vector<8x128xf32>
    %500 = arith.mulf %484, %492 : vector<8x128xf32>
    %501 = arith.addf %499, %500 : vector<8x128xf32>
    %502 = math.tanh %501 : vector<8x128xf32>
    %503 = arith.mulf %498, %502 : vector<8x128xf32>
    %c6_i32_146 = arith.constant 6 : i32
    %c8_i32_147 = arith.constant 8 : i32
    %504 = arith.muli %c6_i32_146, %c8_i32_147 : i32
    %505 = tpu.assume_multiple %504, 8 : i32
    %506 = arith.index_cast %505 : i32 to index
    %c0_148 = arith.constant 0 : index
    %507 = vector.load %arg10[%506, %c0_148] : memref<64x512xf32, #tpu.memory_space<vmem>>, vector<8x512xf32>
    %508 = arith.truncf %503 : vector<8x128xf32> to vector<8x128xbf16>
    %c0_149 = arith.constant 0 : index
    %c0_150 = arith.constant 0 : index
    %509 = vector.load %arg5[%c0_149, %c0_150] : memref<128x512xbf16, #tpu.memory_space<vmem>>, vector<128x512xbf16>
    %cst_151 = arith.constant dense<0.000000e+00> : vector<8x512xf32>
    %510 = tpu.matmul %508, %509, %cst_151 {dimension_numbers = #tpu.dot_dimension_numbers<[1], [0], [0], [1], [0, 0, 1, 1], [], []>} : vector<8x128xbf16>, vector<128x512xbf16>, vector<8x512xf32> -> vector<8x512xf32>
    %511 = arith.addf %507, %510 : vector<8x512xf32>
    %512 = vector.extract_strided_slice %511 {offsets = [0, 0], sizes = [8, 128], strides = [1, 1]} : vector<8x512xf32> to vector<8x128xf32>
    %513 = arith.negf %512 : vector<8x128xf32>
    %514 = math.exp %513 : vector<8x128xf32>
    %cst_152 = arith.constant 1.000000e+00 : f32
    %515 = vector.broadcast %cst_152 : f32 to vector<8x128xf32>
    %516 = arith.addf %515, %514 : vector<8x128xf32>
    %517 = arith.divf %515, %516 : vector<8x128xf32>
    %518 = vector.extract_strided_slice %511 {offsets = [0, 128], sizes = [8, 128], strides = [1, 1]} : vector<8x512xf32> to vector<8x128xf32>
    %519 = arith.negf %518 : vector<8x128xf32>
    %520 = math.exp %519 : vector<8x128xf32>
    %cst_153 = arith.constant 1.000000e+00 : f32
    %521 = vector.broadcast %cst_153 : f32 to vector<8x128xf32>
    %522 = arith.addf %521, %520 : vector<8x128xf32>
    %523 = arith.divf %521, %522 : vector<8x128xf32>
    %524 = vector.extract_strided_slice %511 {offsets = [0, 256], sizes = [8, 128], strides = [1, 1]} : vector<8x512xf32> to vector<8x128xf32>
    %525 = math.tanh %524 : vector<8x128xf32>
    %526 = vector.extract_strided_slice %511 {offsets = [0, 384], sizes = [8, 128], strides = [1, 1]} : vector<8x512xf32> to vector<8x128xf32>
    %527 = arith.negf %526 : vector<8x128xf32>
    %528 = math.exp %527 : vector<8x128xf32>
    %cst_154 = arith.constant 1.000000e+00 : f32
    %529 = vector.broadcast %cst_154 : f32 to vector<8x128xf32>
    %530 = arith.addf %529, %528 : vector<8x128xf32>
    %531 = arith.divf %529, %530 : vector<8x128xf32>
    %532 = arith.mulf %523, %501 : vector<8x128xf32>
    %533 = arith.mulf %517, %525 : vector<8x128xf32>
    %534 = arith.addf %532, %533 : vector<8x128xf32>
    %535 = math.tanh %534 : vector<8x128xf32>
    %536 = arith.mulf %531, %535 : vector<8x128xf32>
    %c7_i32_155 = arith.constant 7 : i32
    %c8_i32_156 = arith.constant 8 : i32
    %537 = arith.muli %c7_i32_155, %c8_i32_156 : i32
    %538 = tpu.assume_multiple %537, 8 : i32
    %539 = arith.index_cast %538 : i32 to index
    %c0_157 = arith.constant 0 : index
    %540 = vector.load %arg10[%539, %c0_157] : memref<64x512xf32, #tpu.memory_space<vmem>>, vector<8x512xf32>
    %541 = arith.truncf %536 : vector<8x128xf32> to vector<8x128xbf16>
    %c0_158 = arith.constant 0 : index
    %c0_159 = arith.constant 0 : index
    %542 = vector.load %arg5[%c0_158, %c0_159] : memref<128x512xbf16, #tpu.memory_space<vmem>>, vector<128x512xbf16>
    %cst_160 = arith.constant dense<0.000000e+00> : vector<8x512xf32>
    %543 = tpu.matmul %541, %542, %cst_160 {dimension_numbers = #tpu.dot_dimension_numbers<[1], [0], [0], [1], [0, 0, 1, 1], [], []>} : vector<8x128xbf16>, vector<128x512xbf16>, vector<8x512xf32> -> vector<8x512xf32>
    %544 = arith.addf %540, %543 : vector<8x512xf32>
    %545 = vector.extract_strided_slice %544 {offsets = [0, 0], sizes = [8, 128], strides = [1, 1]} : vector<8x512xf32> to vector<8x128xf32>
    %546 = arith.negf %545 : vector<8x128xf32>
    %547 = math.exp %546 : vector<8x128xf32>
    %cst_161 = arith.constant 1.000000e+00 : f32
    %548 = vector.broadcast %cst_161 : f32 to vector<8x128xf32>
    %549 = arith.addf %548, %547 : vector<8x128xf32>
    %550 = arith.divf %548, %549 : vector<8x128xf32>
    %551 = vector.extract_strided_slice %544 {offsets = [0, 128], sizes = [8, 128], strides = [1, 1]} : vector<8x512xf32> to vector<8x128xf32>
    %552 = arith.negf %551 : vector<8x128xf32>
    %553 = math.exp %552 : vector<8x128xf32>
    %cst_162 = arith.constant 1.000000e+00 : f32
    %554 = vector.broadcast %cst_162 : f32 to vector<8x128xf32>
    %555 = arith.addf %554, %553 : vector<8x128xf32>
    %556 = arith.divf %554, %555 : vector<8x128xf32>
    %557 = vector.extract_strided_slice %544 {offsets = [0, 256], sizes = [8, 128], strides = [1, 1]} : vector<8x512xf32> to vector<8x128xf32>
    %558 = math.tanh %557 : vector<8x128xf32>
    %559 = vector.extract_strided_slice %544 {offsets = [0, 384], sizes = [8, 128], strides = [1, 1]} : vector<8x512xf32> to vector<8x128xf32>
    %560 = arith.negf %559 : vector<8x128xf32>
    %561 = math.exp %560 : vector<8x128xf32>
    %cst_163 = arith.constant 1.000000e+00 : f32
    %562 = vector.broadcast %cst_163 : f32 to vector<8x128xf32>
    %563 = arith.addf %562, %561 : vector<8x128xf32>
    %564 = arith.divf %562, %563 : vector<8x128xf32>
    %565 = arith.mulf %556, %534 : vector<8x128xf32>
    %566 = arith.mulf %550, %558 : vector<8x128xf32>
    %567 = arith.addf %565, %566 : vector<8x128xf32>
    %568 = math.tanh %567 : vector<8x128xf32>
    %569 = arith.mulf %564, %568 : vector<8x128xf32>
    %c8_i32_164 = arith.constant 8 : i32
    %570 = arith.truncf %569 : vector<8x128xf32> to vector<8x128xbf16>
    %c0_165 = arith.constant 0 : index
    %c0_166 = arith.constant 0 : index
    %571 = vector.load %arg7[%c0_165, %c0_166] : memref<128x128xbf16, #tpu.memory_space<vmem>>, vector<128x128xbf16>
    %cst_167 = arith.constant dense<0.000000e+00> : vector<8x128xf32>
    %572 = tpu.matmul %570, %571, %cst_167 {dimension_numbers = #tpu.dot_dimension_numbers<[1], [0], [0], [1], [0, 0, 1, 1], [], []>} : vector<8x128xbf16>, vector<128x128xbf16>, vector<8x128xf32> -> vector<8x128xf32>
    %c0_168 = arith.constant 0 : index
    %c0_169 = arith.constant 0 : index
    %573 = vector.load %arg8[%c0_168, %c0_169] : memref<1x128xf32, #tpu.memory_space<vmem>>, vector<1x128xf32>
    %574 = vector.broadcast %573 : vector<1x128xf32> to vector<8x128xf32>
    %575 = arith.addf %572, %574 : vector<8x128xf32>
    %c0_170 = arith.constant 0 : index
    %c0_171 = arith.constant 0 : index
    %576 = vector.load %arg9[%c0_170, %c0_171] : memref<8x128xf32, #tpu.memory_space<vmem>>, vector<8x128xf32>
    tpu.vector_store %arg9[%c0_170, %c0_171], %575 {strides = array<i32>} : memref<8x128xf32, #tpu.memory_space<vmem>>, vector<8x128xf32>,
    return
  }
}

</mosaic_0001>

<llo_original>
// kernel: tpu_custom_call.1
$region0: #{tpu_custom_call.1}
  #allocation0 [shape = 'u32[]', space=smem, size = 0x4, offset = 0x4, fixed_abs, tag = 'smem constant byte address 0x4 - core index']
  #allocation1 [shape = 'u32[144,128]{1,0:T(1,128)}', space=vmem, size = 0x12000, scoped, tag = 'internal scratch']
  #allocation2 [shape = 'f32[64,512]{1,0:T(8,128)}', space=vmem, size = 0x20000, scoped, tag = 'scratch operand']
  #allocation3 [shape = 'bf16[64,128]{1,0:T(8,128)(2,1)}', space=vmem, size = 0x4000, scoped, tag = 'scratch operand']
  %s0 = inlined_call_operand.hbm [shape: bf16[64,128], index: 0, kind: input, shape index: {}]
  %s1 = inlined_call_operand.hbm [shape: bf16[128,512], index: 1, kind: input, shape index: {}]
  %s2 = inlined_call_operand.hbm [shape: bf16[128,512], index: 2, kind: input, shape index: {}]
  %s3 = inlined_call_operand.vmem [shape: f32[1,512], index: 3, kind: input, shape index: {}]
  %s4 = inlined_call_operand.hbm [shape: bf16[128,512], index: 4, kind: input, shape index: {}]
  %s5 = inlined_call_operand.hbm [shape: bf16[128,512], index: 5, kind: input, shape index: {}]
  %s6 = inlined_call_operand.vmem [shape: f32[1,512], index: 6, kind: input, shape index: {}]
  %s7 = inlined_call_operand.hbm [shape: bf16[128,128], index: 7, kind: input, shape index: {}]
  %s8 = inlined_call_operand.vmem [shape: f32[1,128], index: 8, kind: input, shape index: {}]
  %s9 = inlined_call_operand.hbm [shape: f32[8,128], index: 9, kind: output, shape index: {}]
  %s10 = sld [smem:[#allocation0]]
  $region70: #{tpu_custom_call.1} parent=0
    _
  %s12 = ssub.s32 1, %s10
  %s13 = scalar_select 0, %s12, %s10
  $region1: #{tpu_custom_call.1} parent=0
    #allocation4 [shape = 'u8[16384]{0}', space=vmem, size = 0x4000, scoped, tag = 'input window, operand 0, single buffered']
    #allocation5 [shape = 's32[1]{0}', space=sflag, size = 0x4, scoped, tag = 'scoped memory for tpu_custom_call.1']
    #allocation6 [shape = 's32[1]{0}', space=sflag, size = 0x4, scoped, tag = 'scoped memory for tpu_custom_call.1']
    #allocation7 [shape = 'u8[131072]{0}', space=vmem, size = 0x20000, scoped, tag = 'input window, operand 1, single buffered']
    #allocation8 [shape = 's32[1]{0}', space=sflag, size = 0x4, scoped, tag = 'scoped memory for tpu_custom_call.1']
    #allocation9 [shape = 'u8[131072]{0}', space=vmem, size = 0x20000, scoped, tag = 'input window, operand 2, single buffered']
    #allocation10 [shape = 'u8[131072]{0}', space=vmem, size = 0x20000, scoped, tag = 'input window, operand 4, single buffered']
    #allocation11 [shape = 's32[1]{0}', space=sflag, size = 0x4, scoped, tag = 'scoped memory for tpu_custom_call.1']
    #allocation12 [shape = 'u8[131072]{0}', space=vmem, size = 0x20000, scoped, tag = 'input window, operand 5, single buffered']
    #allocation13 [shape = 'u8[32768]{0}', space=vmem, size = 0x8000, scoped, tag = 'input window, operand 7, single buffered']
    #allocation14 [shape = 's32[1]{0}', space=sflag, size = 0x4, scoped, tag = 'scoped memory for tpu_custom_call.1']
    #allocation15 [shape = 'u8[4096]{0}', space=vmem, size = 0x1000, scoped, tag = 'output window, operand 0, single buffered']
    %14 = vsyncpa [#allocation5], 0
    %15 = vsyncpa [#allocation8], 0
    %16 = vsyncpa [#allocation11], 0
    %17 = vsyncpa [#allocation14], 0
    %18 = vsyncpa [#allocation6], 0
    // Predicated region
    $region2: #{tpu_custom_call.1} parent=1 // pred_check
      _
    $region3: #{tpu_custom_call.1} parent=1 // pred_check_branch
      %20 = sbr.rel (0) target = $region5
    $region4: #{tpu_custom_call.1} parent=1 // pred_region
      %s22 = ssub.s32 512, 512
      %23 = vsyncadd [#allocation5], %s22
      %s24 = sshll.u32 [#allocation4], 4
      %s25 = int_to_ptr.vmem [resolvable:$true] %s24
      %30 = dma.hbm_to_vmem [thread:$0]  %s0, 512, %s25, [#allocation5], 64, 64, 4
    $region5: #{tpu_custom_call.1} parent=1 // pred_fallthru
      _
    // Predicated region
    $region6: #{tpu_custom_call.1} parent=1 // pred_check
      _
    $region7: #{tpu_custom_call.1} parent=1 // pred_check_branch
      %32 = sbr.rel (0) target = $region9
    $region8: #{tpu_custom_call.1} parent=1 // pred_region
      %s34 = ssub.s32 4096, 4096
      %35 = vsyncadd [#allocation8], %s34
      %s36 = sshll.u32 [#allocation7], 4
      %s37 = int_to_ptr.vmem [resolvable:$true] %s36
      %42 = dma.hbm_to_vmem [thread:$0]  %s1, 4096, %s37, [#allocation8], 256, 256, 16
    $region9: #{tpu_custom_call.1} parent=1 // pred_fallthru
      _
    // Predicated region
    $region10: #{tpu_custom_call.1} parent=1 // pred_check
      _
    $region11: #{tpu_custom_call.1} parent=1 // pred_check_branch
      %44 = sbr.rel (0) target = $region13
    $region12: #{tpu_custom_call.1} parent=1 // pred_region
      %s46 = ssub.s32 4096, 4096
      %47 = vsyncadd [#allocation8], %s46
      %s48 = sshll.u32 [#allocation9], 4
      %s49 = int_to_ptr.vmem [resolvable:$true] %s48
      %54 = dma.hbm_to_vmem [thread:$0]  %s2, 4096, %s49, [#allocation8], 256, 256, 16
    $region13: #{tpu_custom_call.1} parent=1 // pred_fallthru
      _
    // Predicated region
    $region14: #{tpu_custom_call.1} parent=1 // pred_check
      _
    $region15: #{tpu_custom_call.1} parent=1 // pred_check_branch
      %56 = sbr.rel (0) target = $region17
    $region16: #{tpu_custom_call.1} parent=1 // pred_region
      _
    $region17: #{tpu_custom_call.1} parent=1 // pred_fallthru
      _
    // Predicated region
    $region18: #{tpu_custom_call.1} parent=1 // pred_check
      _
    $region19: #{tpu_custom_call.1} parent=1 // pred_check_branch
      %58 = sbr.rel (0) target = $region21
    $region20: #{tpu_custom_call.1} parent=1 // pred_region
      %s60 = ssub.s32 4096, 4096
      %61 = vsyncadd [#allocation11], %s60
      %s62 = sshll.u32 [#allocation10], 4
      %s63 = int_to_ptr.vmem [resolvable:$true] %s62
      %68 = dma.hbm_to_vmem [thread:$0]  %s4, 4096, %s63, [#allocation11], 256, 256, 16
    $region21: #{tpu_custom_call.1} parent=1 // pred_fallthru
      _
    // Predicated region
    $region22: #{tpu_custom_call.1} parent=1 // pred_check
      _
    $region23: #{tpu_custom_call.1} parent=1 // pred_check_branch
      %70 = sbr.rel (0) target = $region25
    $region24: #{tpu_custom_call.1} parent=1 // pred_region
      %s72 = ssub.s32 4096, 4096
      %73 = vsyncadd [#allocation11], %s72
      %s74 = sshll.u32 [#allocation12], 4
      %s75 = int_to_ptr.vmem [resolvable:$true] %s74
      %80 = dma.hbm_to_vmem [thread:$0]  %s5, 4096, %s75, [#allocation11], 256, 256, 16
    $region25: #{tpu_custom_call.1} parent=1 // pred_fallthru
      _
    // Predicated region
    $region26: #{tpu_custom_call.1} parent=1 // pred_check
      _
    $region27: #{tpu_custom_call.1} parent=1 // pred_check_branch
      %82 = sbr.rel (0) target = $region29
    $region28: #{tpu_custom_call.1} parent=1 // pred_region
      _
    $region29: #{tpu_custom_call.1} parent=1 // pred_fallthru
      _
    // Predicated region
    $region30: #{tpu_custom_call.1} parent=1 // pred_check
      _
    $region31: #{tpu_custom_call.1} parent=1 // pred_check_branch
      %84 = sbr.rel (0) target = $region33
    $region32: #{tpu_custom_call.1} parent=1 // pred_region
      %s86 = ssub.s32 1024, 1024
      %87 = vsyncadd [#allocation14], %s86
      %s88 = sshll.u32 [#allocation13], 4
      %s89 = int_to_ptr.vmem [resolvable:$true] %s88
      %94 = dma.hbm_to_vmem [thread:$0]  %s7, 1024, %s89, [#allocation14], 64, 64, 4
    $region33: #{tpu_custom_call.1} parent=1 // pred_fallthru
      _
    // Predicated region
    $region34: #{tpu_custom_call.1} parent=1 // pred_check
      _
    $region35: #{tpu_custom_call.1} parent=1 // pred_check_branch
      %96 = sbr.rel (0) target = $region37
    $region36: #{tpu_custom_call.1} parent=1 // pred_region
      _
    $region37: #{tpu_custom_call.1} parent=1 // pred_fallthru
      _
    // Predicated region
    $region38: #{tpu_custom_call.1} parent=1 // pred_check
      _
    $region39: #{tpu_custom_call.1} parent=1 // pred_check_branch
      %98 = sbr.rel (0) target = $region41
    $region40: #{tpu_custom_call.1} parent=1 // pred_region
      %99 = dma.done [#allocation5], 512
    $region41: #{tpu_custom_call.1} parent=1 // pred_fallthru
      _
    // Predicated region
    $region42: #{tpu_custom_call.1} parent=1 // pred_check
      _
    $region43: #{tpu_custom_call.1} parent=1 // pred_check_branch
      %101 = sbr.rel (0) target = $region45
    $region44: #{tpu_custom_call.1} parent=1 // pred_region
      %102 = dma.done [#allocation8], 4096
    $region45: #{tpu_custom_call.1} parent=1 // pred_fallthru
      _
    // Predicated region
    $region46: #{tpu_custom_call.1} parent=1 // pred_check
      _
    $region47: #{tpu_custom_call.1} parent=1 // pred_check_branch
      %104 = sbr.rel (0) target = $region49
    $region48: #{tpu_custom_call.1} parent=1 // pred_region
      %105 = dma.done [#allocation8], 4096
    $region49: #{tpu_custom_call.1} parent=1 // pred_fallthru
      _
    // Predicated region
    $region50: #{tpu_custom_call.1} parent=1 // pred_check
      _
    $region51: #{tpu_custom_call.1} parent=1 // pred_check_branch
      %107 = sbr.rel (0) target = $region53
    $region52: #{tpu_custom_call.1} parent=1 // pred_region
      %108 = dma.done [#allocation11], 4096
    $region53: #{tpu_custom_call.1} parent=1 // pred_fallthru
      _
    // Predicated region
    $region54: #{tpu_custom_call.1} parent=1 // pred_check
      _
    $region55: #{tpu_custom_call.1} parent=1 // pred_check_branch
      %110 = sbr.rel (0) target = $region57
    $region56: #{tpu_custom_call.1} parent=1 // pred_region
      %111 = dma.done [#allocation11], 4096
    $region57: #{tpu_custom_call.1} parent=1 // pred_fallthru
      _
    // Predicated region
    $region58: #{tpu_custom_call.1} parent=1 // pred_check
      _
    $region59: #{tpu_custom_call.1} parent=1 // pred_check_branch
      %113 = sbr.rel (0) target = $region61
    $region60: #{tpu_custom_call.1} parent=1 // pred_region
      %114 = dma.done [#allocation14], 1024
    $region61: #{tpu_custom_call.1} parent=1 // pred_fallthru
      _
    %v116 = vld [vmem:[#allocation4] sm:$0xf]
    %v117 = vld [vmem:[#allocation4 + $0x4] sm:$0xf]
    %v118 = vld [vmem:[#allocation4 + $0x8] sm:$0xf]
    %v119 = vld [vmem:[#allocation4 + $0xc] sm:$0xf]
    %v120 = vld [vmem:[#allocation4 + $0x10] sm:$0xf]
    %v121 = vld [vmem:[#allocation4 + $0x14] sm:$0xf]
    %v122 = vld [vmem:[#allocation4 + $0x18] sm:$0xf]
    %v123 = vld [vmem:[#allocation4 + $0x1c] sm:$0xf]
    %v124 = vld [vmem:[#allocation7] sm:$0xff]
    %v125 = vld [vmem:[#allocation7 + $0x8] sm:$0xff]
    %v126 = vld [vmem:[#allocation7 + $0x10] sm:$0xff]
    %v127 = vld [vmem:[#allocation7 + $0x18] sm:$0xff]
    %v128 = vld [vmem:[#allocation7 + $0x20] sm:$0xff]
    %v129 = vld [vmem:[#allocation7 + $0x28] sm:$0xff]
    %v130 = vld [vmem:[#allocation7 + $0x30] sm:$0xff]
    %v131 = vld [vmem:[#allocation7 + $0x38] sm:$0xff]
    %v132 = vld [vmem:[#allocation7 + $0x40] sm:$0xff]
    %v133 = vld [vmem:[#allocation7 + $0x48] sm:$0xff]
    %v134 = vld [vmem:[#allocation7 + $0x50] sm:$0xff]
    %v135 = vld [vmem:[#allocation7 + $0x58] sm:$0xff]
    %v136 = vld [vmem:[#allocation7 + $0x60] sm:$0xff]
    %v137 = vld [vmem:[#allocation7 + $0x68] sm:$0xff]
    %v138 = vld [vmem:[#allocation7 + $0x70] sm:$0xff]
    %v139 = vld [vmem:[#allocation7 + $0x78] sm:$0xff]
    %v140 = vld [vmem:[#allocation7 + $0x80] sm:$0xff]
    %v141 = vld [vmem:[#allocation7 + $0x88] sm:$0xff]
    %v142 = vld [vmem:[#allocation7 + $0x90] sm:$0xff]
    %v143 = vld [vmem:[#allocation7 + $0x98] sm:$0xff]
    %v144 = vld [vmem:[#allocation7 + $0xa0] sm:$0xff]
    %v145 = vld [vmem:[#allocation7 + $0xa8] sm:$0xff]
    %v146 = vld [vmem:[#allocation7 + $0xb0] sm:$0xff]
    %v147 = vld [vmem:[#allocation7 + $0xb8] sm:$0xff]
    %v148 = vld [vmem:[#allocation7 + $0xc0] sm:$0xff]
    %v149 = vld [vmem:[#allocation7 + $0xc8] sm:$0xff]
    %v150 = vld [vmem:[#allocation7 + $0xd0] sm:$0xff]
    %v151 = vld [vmem:[#allocation7 + $0xd8] sm:$0xff]
    %v152 = vld [vmem:[#allocation7 + $0xe0] sm:$0xff]
    %v153 = vld [vmem:[#allocation7 + $0xe8] sm:$0xff]
    %v154 = vld [vmem:[#allocation7 + $0xf0] sm:$0xff]
    %v155 = vld [vmem:[#allocation7 + $0xf8] sm:$0xff]
    %v156 = vld [vmem:[%s3] sm:$0xf]
    %v158 = vlaneseq
    %v159 = vshrl.u32 %v158, 7
    %v160 = vsub.s32 0, %v159
    %v161 = vrot.slane %v156, %v160
    %v162 = vlaneseq
    %v163 = vshrl.u32 %v162, 7
    %v164 = vsub.s32 1, %v163
    %v165 = vrot.slane %v156, %v164
    %v166 = vlaneseq
    %v167 = vshrl.u32 %v166, 7
    %v168 = vsub.s32 2, %v167
    %v169 = vrot.slane %v156, %v168
    %v170 = vlaneseq
    %v171 = vshrl.u32 %v170, 7
    %v172 = vsub.s32 3, %v171
    %v173 = vrot.slane %v156, %v172
    %v186 = vunpack.c.l.b16 %v116
    %v187 = vunpack.c.l.b16 %v117
    %v188 = vunpack.c.l.b16 %v118
    %v189 = vunpack.c.l.b16 %v119
    %v190 = vunpack.c.l.b16 %v120
    %v191 = vunpack.c.l.b16 %v121
    %v192 = vunpack.c.l.b16 %v122
    %v193 = vunpack.c.l.b16 %v123
    %v194 = vpack.c.b16 %v187, %v186
    %v195 = vpack.c.b16 %v189, %v188
    %v196 = vpack.c.b16 %v191, %v190
    %v197 = vpack.c.b16 %v193, %v192
    %v234 = vunpack.c.l.b16 %v124
    %v235 = vunpack.c.h.b16 %v124
    %v236 = vunpack.c.l.b16 %v125
    %v237 = vunpack.c.h.b16 %v125
    %v238 = vunpack.c.l.b16 %v126
    %v239 = vunpack.c.h.b16 %v126
    %v240 = vunpack.c.l.b16 %v127
    %v241 = vunpack.c.h.b16 %v127
    %v242 = vunpack.c.l.b16 %v128
    %v243 = vunpack.c.h.b16 %v128
    %v244 = vunpack.c.l.b16 %v129
    %v245 = vunpack.c.h.b16 %v129
    %v246 = vunpack.c.l.b16 %v130
    %v247 = vunpack.c.h.b16 %v130
    %v248 = vunpack.c.l.b16 %v131
    %v249 = vunpack.c.h.b16 %v131
    %v250 = vunpack.c.l.b16 %v132
    %v251 = vunpack.c.h.b16 %v132
    %v252 = vunpack.c.l.b16 %v133
    %v253 = vunpack.c.h.b16 %v133
    %v254 = vunpack.c.l.b16 %v134
    %v255 = vunpack.c.h.b16 %v134
    %v256 = vunpack.c.l.b16 %v135
    %v257 = vunpack.c.h.b16 %v135
    %v258 = vunpack.c.l.b16 %v136
    %v259 = vunpack.c.h.b16 %v136
    %v260 = vunpack.c.l.b16 %v137
    %v261 = vunpack.c.h.b16 %v137
    %v262 = vunpack.c.l.b16 %v138
    %v263 = vunpack.c.h.b16 %v138
    %v264 = vunpack.c.l.b16 %v139
    %v265 = vunpack.c.h.b16 %v139
    %v266 = vunpack.c.l.b16 %v140
    %v267 = vunpack.c.h.b16 %v140
    %v268 = vunpack.c.l.b16 %v141
    %v269 = vunpack.c.h.b16 %v141
    %v270 = vunpack.c.l.b16 %v142
    %v271 = vunpack.c.h.b16 %v142
    %v272 = vunpack.c.l.b16 %v143
    %v273 = vunpack.c.h.b16 %v143
    %v274 = vunpack.c.l.b16 %v144
    %v275 = vunpack.c.h.b16 %v144
    %v276 = vunpack.c.l.b16 %v145
    %v277 = vunpack.c.h.b16 %v145
    %v278 = vunpack.c.l.b16 %v146
    %v279 = vunpack.c.h.b16 %v146
    %v280 = vunpack.c.l.b16 %v147
    %v281 = vunpack.c.h.b16 %v147
    %v282 = vunpack.c.l.b16 %v148
    %v283 = vunpack.c.h.b16 %v148
    %v284 = vunpack.c.l.b16 %v149
    %v285 = vunpack.c.h.b16 %v149
    %v286 = vunpack.c.l.b16 %v150
    %v287 = vunpack.c.h.b16 %v150
    %v288 = vunpack.c.l.b16 %v151
    %v289 = vunpack.c.h.b16 %v151
    %v290 = vunpack.c.l.b16 %v152
    %v291 = vunpack.c.h.b16 %v152
    %v292 = vunpack.c.l.b16 %v153
    %v293 = vunpack.c.h.b16 %v153
    %v294 = vunpack.c.l.b16 %v154
    %v295 = vunpack.c.h.b16 %v154
    %v296 = vunpack.c.l.b16 %v155
    %v297 = vunpack.c.h.b16 %v155
    %v298 = vpack.c.b16 %v238, %v234
    %v299 = vpack.c.b16 %v239, %v235
    %v300 = vpack.c.b16 %v240, %v236
    %v301 = vpack.c.b16 %v241, %v237
    %v302 = vpack.c.b16 %v246, %v242
    %v303 = vpack.c.b16 %v247, %v243
    %v304 = vpack.c.b16 %v248, %v244
    %v305 = vpack.c.b16 %v249, %v245
    %v306 = vpack.c.b16 %v254, %v250
    %v307 = vpack.c.b16 %v255, %v251
    %v308 = vpack.c.b16 %v256, %v252
    %v309 = vpack.c.b16 %v257, %v253
    %v310 = vpack.c.b16 %v262, %v258
    %v311 = vpack.c.b16 %v263, %v259
    %v312 = vpack.c.b16 %v264, %v260
    %v313 = vpack.c.b16 %v265, %v261
    %v314 = vpack.c.b16 %v270, %v266
    %v315 = vpack.c.b16 %v271, %v267
    %v316 = vpack.c.b16 %v272, %v268
    %v317 = vpack.c.b16 %v273, %v269
    %v318 = vpack.c.b16 %v278, %v274
    %v319 = vpack.c.b16 %v279, %v275
    %v320 = vpack.c.b16 %v280, %v276
    %v321 = vpack.c.b16 %v281, %v277
    %v322 = vpack.c.b16 %v286, %v282
    %v323 = vpack.c.b16 %v287, %v283
    %v324 = vpack.c.b16 %v288, %v284
    %v325 = vpack.c.b16 %v289, %v285
    %v326 = vpack.c.b16 %v294, %v290
    %v327 = vpack.c.b16 %v295, %v291
    %v328 = vpack.c.b16 %v296, %v292
    %v329 = vpack.c.b16 %v297, %v293
    %362 = vmatprep.subr.bf16.mxu0 %v327
    %363 = vmatpush1.bf16.msra.mxu0 %v326
    %364 = vmatprep.subr.bf16.mxu0 %v323
    %365 = vmatpush1.bf16.msra.mxu0 %v322
    %366 = vmatprep.subr.bf16.mxu0 %v319
    %367 = vmatpush1.bf16.msra.mxu0 %v318
    %368 = vmatprep.subr.bf16.mxu0 %v315
    %369 = vmatpush1.bf16.msra.mxu0 %v314
    %370 = vmatprep.subr.bf16.mxu0 %v311
    %371 = vmatpush1.bf16.msra.mxu0 %v310
    %372 = vmatprep.subr.bf16.mxu0 %v307
    %373 = vmatpush1.bf16.msra.mxu0 %v306
    %374 = vmatprep.subr.bf16.mxu0 %v303
    %375 = vmatpush1.bf16.msra.mxu0 %v302
    %376 = vmatprep.subr.bf16.mxu0 %v299
    %377 = vmatpush1.bf16.msra.mxu0 %v298
    %378 = vmatprep.subr.bf16.mxu0 0
    %379 = vmatpush2.bf16.msra.mxu0 0
    %380 = vmatprep.subr.bf16.mxu0 0
    %381 = vmatpush2.bf16.msra.mxu0 0
    %382 = vmatprep.subr.bf16.mxu0 0
    %383 = vmatpush2.bf16.msra.mxu0 0
    %384 = vmatprep.subr.bf16.mxu0 0
    %385 = vmatpush2.bf16.msra.mxu0 0
    %386 = vmatprep.subr.bf16.mxu0 0
    %387 = vmatpush2.bf16.msra.mxu0 0
    %388 = vmatprep.subr.bf16.mxu0 0
    %389 = vmatpush2.bf16.msra.mxu0 0
    %390 = vmatprep.subr.bf16.mxu0 0
    %391 = vmatpush2.bf16.msra.mxu0 0
    %392 = vmatprep.subr.bf16.mxu0 0
    %393 = vmatpush2.bf16.msra.mxu0 0
    %394 = vmatprep.mubr.bf16.mxu0 0
    %395 = vmatmul.mubr.bf16.gmra.mxu0 %v194
    %v396 = vpop.f32.mrf.mxu0
    %v397 = vadd.f32 %v161, %v396
    %v398 = vpop.f32.mrf.mxu0
    %v399 = vadd.f32 %v165, %v398
    %v400 = vpop.f32.mrf.mxu0
    %v401 = vadd.f32 %v161, %v400
    %v402 = vpop.f32.mrf.mxu0
    %v403 = vadd.f32 %v165, %v402
    %404 = vmatprep.mubr.bf16.mxu0 0
    %405 = vmatmul.mubr.bf16.gmra.mxu0 %v195
    %v406 = vpop.f32.mrf.mxu0
    %v407 = vadd.f32 %v161, %v406
    %v408 = vpop.f32.mrf.mxu0
    %v409 = vadd.f32 %v165, %v408
    %v410 = vpop.f32.mrf.mxu0
    %v411 = vadd.f32 %v161, %v410
    %v412 = vpop.f32.mrf.mxu0
    %v413 = vadd.f32 %v165, %v412
    %414 = vmatprep.mubr.bf16.mxu0 0
    %415 = vmatmul.mubr.bf16.gmra.mxu0 %v196
    %v416 = vpop.f32.mrf.mxu0
    %v417 = vadd.f32 %v161, %v416
    %v418 = vpop.f32.mrf.mxu0
    %v419 = vadd.f32 %v165, %v418
    %v420 = vpop.f32.mrf.mxu0
    %v421 = vadd.f32 %v161, %v420
    %v422 = vpop.f32.mrf.mxu0
    %v423 = vadd.f32 %v165, %v422
    %424 = vmatprep.mubr.bf16.mxu0 0
    %425 = vmatmul.mubr.bf16.gmra.mxu0 %v197
    %v426 = vpop.f32.mrf.mxu0
    %v427 = vadd.f32 %v161, %v426
    %v428 = vpop.f32.mrf.mxu0
    %v429 = vadd.f32 %v165, %v428
    %v430 = vpop.f32.mrf.mxu0
    %v431 = vadd.f32 %v161, %v430
    %v432 = vpop.f32.mrf.mxu0
    %v433 = vadd.f32 %v165, %v432
    %434 = vdwg.mxu0
    %435 = vmatprep.subr.bf16.mxu0 %v329
    %436 = vmatpush1.bf16.msra.mxu0 %v328
    %437 = vmatprep.subr.bf16.mxu0 %v325
    %438 = vmatpush1.bf16.msra.mxu0 %v324
    %439 = vmatprep.subr.bf16.mxu0 %v321
    %440 = vmatpush1.bf16.msra.mxu0 %v320
    %441 = vmatprep.subr.bf16.mxu0 %v317
    %442 = vmatpush1.bf16.msra.mxu0 %v316
    %443 = vmatprep.subr.bf16.mxu0 %v313
    %444 = vmatpush1.bf16.msra.mxu0 %v312
    %445 = vmatprep.subr.bf16.mxu0 %v309
    %446 = vmatpush1.bf16.msra.mxu0 %v308
    %447 = vmatprep.subr.bf16.mxu0 %v305
    %448 = vmatpush1.bf16.msra.mxu0 %v304
    %449 = vmatprep.subr.bf16.mxu0 %v301
    %450 = vmatpush1.bf16.msra.mxu0 %v300
    %451 = vmatprep.subr.bf16.mxu0 0
    %452 = vmatpush2.bf16.msra.mxu0 0
    %453 = vmatprep.subr.bf16.mxu0 0
    %454 = vmatpush2.bf16.msra.mxu0 0
    %455 = vmatprep.subr.bf16.mxu0 0
    %456 = vmatpush2.bf16.msra.mxu0 0
    %457 = vmatprep.subr.bf16.mxu0 0
    %458 = vmatpush2.bf16.msra.mxu0 0
    %459 = vmatprep.subr.bf16.mxu0 0
    %460 = vmatpush2.bf16.msra.mxu0 0
    %461 = vmatprep.subr.bf16.mxu0 0
    %462 = vmatpush2.bf16.msra.mxu0 0
    %463 = vmatprep.subr.bf16.mxu0 0
    %464 = vmatpush2.bf16.msra.mxu0 0
    %465 = vmatprep.subr.bf16.mxu0 0
    %466 = vmatpush2.bf16.msra.mxu0 0
    %467 = vmatprep.mubr.bf16.mxu0 0
    %468 = vmatmul.mubr.bf16.gmra.mxu0 %v194
    %v469 = vpop.f32.mrf.mxu0
    %v470 = vadd.f32 %v169, %v469
    %v471 = vpop.f32.mrf.mxu0
    %v472 = vadd.f32 %v173, %v471
    %v473 = vpop.f32.mrf.mxu0
    %v474 = vadd.f32 %v169, %v473
    %v475 = vpop.f32.mrf.mxu0
    %v476 = vadd.f32 %v173, %v475
    %477 = vmatprep.mubr.bf16.mxu0 0
    %478 = vmatmul.mubr.bf16.gmra.mxu0 %v195
    %v479 = vpop.f32.mrf.mxu0
    %v480 = vadd.f32 %v169, %v479
    %v481 = vpop.f32.mrf.mxu0
    %v482 = vadd.f32 %v173, %v481
    %v483 = vpop.f32.mrf.mxu0
    %v484 = vadd.f32 %v169, %v483
    %v485 = vpop.f32.mrf.mxu0
    %v486 = vadd.f32 %v173, %v485
    %487 = vmatprep.mubr.bf16.mxu0 0
    %488 = vmatmul.mubr.bf16.gmra.mxu0 %v196
    %v489 = vpop.f32.mrf.mxu0
    %v490 = vadd.f32 %v169, %v489
    %v491 = vpop.f32.mrf.mxu0
    %v492 = vadd.f32 %v173, %v491
    %v493 = vpop.f32.mrf.mxu0
    %v494 = vadd.f32 %v169, %v493
    %v495 = vpop.f32.mrf.mxu0
    %v496 = vadd.f32 %v173, %v495
    %497 = vmatprep.mubr.bf16.mxu0 0
    %498 = vmatmul.mubr.bf16.gmra.mxu0 %v197
    %v499 = vpop.f32.mrf.mxu0
    %v500 = vadd.f32 %v169, %v499
    %v501 = vpop.f32.mrf.mxu0
    %v502 = vadd.f32 %v173, %v501
    %v503 = vpop.f32.mrf.mxu0
    %v504 = vadd.f32 %v169, %v503
    %v505 = vpop.f32.mrf.mxu0
    %v506 = vadd.f32 %v173, %v505
    %507 = vdwg.mxu0
    %508 = vst [vmem:[#allocation2] sm:$0xff] %v397
    %509 = vst [vmem:[#allocation2 + $0x8] sm:$0xff] %v399
    %510 = vst [vmem:[#allocation2 + $0x10] sm:$0xff] %v470
    %511 = vst [vmem:[#allocation2 + $0x18] sm:$0xff] %v472
    %512 = vst [vmem:[#allocation2 + $0x20] sm:$0xff] %v401
    %513 = vst [vmem:[#allocation2 + $0x28] sm:$0xff] %v403
    %514 = vst [vmem:[#allocation2 + $0x30] sm:$0xff] %v474
    %515 = vst [vmem:[#allocation2 + $0x38] sm:$0xff] %v476
    %516 = vst [vmem:[#allocation2 + $0x40] sm:$0xff] %v407
    %517 = vst [vmem:[#allocation2 + $0x48] sm:$0xff] %v409
    %518 = vst [vmem:[#allocation2 + $0x50] sm:$0xff] %v480
    %519 = vst [vmem:[#allocation2 + $0x58] sm:$0xff] %v482
    %520 = vst [vmem:[#allocation2 + $0x60] sm:$0xff] %v411
    %521 = vst [vmem:[#allocation2 + $0x68] sm:$0xff] %v413
    %522 = vst [vmem:[#allocation2 + $0x70] sm:$0xff] %v484
    %523 = vst [vmem:[#allocation2 + $0x78] sm:$0xff] %v486
    %524 = vst [vmem:[#allocation2 + $0x80] sm:$0xff] %v417
    %525 = vst [vmem:[#allocation2 + $0x88] sm:$0xff] %v419
    %526 = vst [vmem:[#allocation2 + $0x90] sm:$0xff] %v490
    %527 = vst [vmem:[#allocation2 + $0x98] sm:$0xff] %v492
    %528 = vst [vmem:[#allocation2 + $0xa0] sm:$0xff] %v421
    %529 = vst [vmem:[#allocation2 + $0xa8] sm:$0xff] %v423
    %530 = vst [vmem:[#allocation2 + $0xb0] sm:$0xff] %v494
    %531 = vst [vmem:[#allocation2 + $0xb8] sm:$0xff] %v496
    %532 = vst [vmem:[#allocation2 + $0xc0] sm:$0xff] %v427
    %533 = vst [vmem:[#allocation2 + $0xc8] sm:$0xff] %v429
    %534 = vst [vmem:[#allocation2 + $0xd0] sm:$0xff] %v500
    %535 = vst [vmem:[#allocation2 + $0xd8] sm:$0xff] %v502
    %536 = vst [vmem:[#allocation2 + $0xe0] sm:$0xff] %v431
    %537 = vst [vmem:[#allocation2 + $0xe8] sm:$0xff] %v433
    %538 = vst [vmem:[#allocation2 + $0xf0] sm:$0xff] %v504
    %539 = vst [vmem:[#allocation2 + $0xf8] sm:$0xff] %v506
    %s540 = smul.u32 0, 4
    %s541 = smul.addr %s540, 8
    %s542 = scalar_lea.vmem [#allocation2], %s541
    %v543 = vld [vmem:[%s542] sm:$0xff]
    %v544 = vld [vmem:[%s542 + $0x8] sm:$0xff]
    %v545 = vld [vmem:[%s542 + $0x10] sm:$0xff]
    %v546 = vld [vmem:[%s542 + $0x18] sm:$0xff]
    %v547 = vld [vmem:[#allocation9] sm:$0xff]
    %v548 = vld [vmem:[#allocation9 + $0x8] sm:$0xff]
    %v549 = vld [vmem:[#allocation9 + $0x10] sm:$0xff]
    %v550 = vld [vmem:[#allocation9 + $0x18] sm:$0xff]
    %v551 = vld [vmem:[#allocation9 + $0x20] sm:$0xff]
    %v552 = vld [vmem:[#allocation9 + $0x28] sm:$0xff]
    %v553 = vld [vmem:[#allocation9 + $0x30] sm:$0xff]
    %v554 = vld [vmem:[#allocation9 + $0x38] sm:$0xff]
    %v555 = vld [vmem:[#allocation9 + $0x40] sm:$0xff]
    %v556 = vld [vmem:[#allocation9 + $0x48] sm:$0xff]
    %v557 = vld [vmem:[#allocation9 + $0x50] sm:$0xff]
    %v558 = vld [vmem:[#allocation9 + $0x58] sm:$0xff]
    %v559 = vld [vmem:[#allocation9 + $0x60] sm:$0xff]
    %v560 = vld [vmem:[#allocation9 + $0x68] sm:$0xff]
    %v561 = vld [vmem:[#allocation9 + $0x70] sm:$0xff]
    %v562 = vld [vmem:[#allocation9 + $0x78] sm:$0xff]
    %v563 = vld [vmem:[#allocation9 + $0x80] sm:$0xff]
    %v564 = vld [vmem:[#allocation9 + $0x88] sm:$0xff]
    %v565 = vld [vmem:[#allocation9 + $0x90] sm:$0xff]
    %v566 = vld [vmem:[#allocation9 + $0x98] sm:$0xff]
    %v567 = vld [vmem:[#allocation9 + $0xa0] sm:$0xff]
    %v568 = vld [vmem:[#allocation9 + $0xa8] sm:$0xff]
    %v569 = vld [vmem:[#allocation9 + $0xb0] sm:$0xff]
    %v570 = vld [vmem:[#allocation9 + $0xb8] sm:$0xff]
    %v571 = vld [vmem:[#allocation9 + $0xc0] sm:$0xff]
    %v572 = vld [vmem:[#allocation9 + $0xc8] sm:$0xff]
    %v573 = vld [vmem:[#allocation9 + $0xd0] sm:$0xff]
    %v574 = vld [vmem:[#allocation9 + $0xd8] sm:$0xff]
    %v575 = vld [vmem:[#allocation9 + $0xe0] sm:$0xff]
    %v576 = vld [vmem:[#allocation9 + $0xe8] sm:$0xff]
    %v577 = vld [vmem:[#allocation9 + $0xf0] sm:$0xff]
    %v578 = vld [vmem:[#allocation9 + $0xf8] sm:$0xff]
    %v611 = vunpack.c.l.b16 %v547
    %v612 = vunpack.c.h.b16 %v547
    %v613 = vunpack.c.l.b16 %v548
    %v614 = vunpack.c.h.b16 %v548
    %v615 = vunpack.c.l.b16 %v549
    %v616 = vunpack.c.h.b16 %v549
    %v617 = vunpack.c.l.b16 %v550
    %v618 = vunpack.c.h.b16 %v550
    %v619 = vunpack.c.l.b16 %v551
    %v620 = vunpack.c.h.b16 %v551
    %v621 = vunpack.c.l.b16 %v552
    %v622 = vunpack.c.h.b16 %v552
    %v623 = vunpack.c.l.b16 %v553
    %v624 = vunpack.c.h.b16 %v553
    %v625 = vunpack.c.l.b16 %v554
    %v626 = vunpack.c.h.b16 %v554
    %v627 = vunpack.c.l.b16 %v555
    %v628 = vunpack.c.h.b16 %v555
    %v629 = vunpack.c.l.b16 %v556
    %v630 = vunpack.c.h.b16 %v556
    %v631 = vunpack.c.l.b16 %v557
    %v632 = vunpack.c.h.b16 %v557
    %v633 = vunpack.c.l.b16 %v558
    %v634 = vunpack.c.h.b16 %v558
    %v635 = vunpack.c.l.b16 %v559
    %v636 = vunpack.c.h.b16 %v559
    %v637 = vunpack.c.l.b16 %v560
    %v638 = vunpack.c.h.b16 %v560
    %v639 = vunpack.c.l.b16 %v561
    %v640 = vunpack.c.h.b16 %v561
    %v641 = vunpack.c.l.b16 %v562
    %v642 = vunpack.c.h.b16 %v562
    %v643 = vunpack.c.l.b16 %v563
    %v644 = vunpack.c.h.b16 %v563
    %v645 = vunpack.c.l.b16 %v564
    %v646 = vunpack.c.h.b16 %v564
    %v647 = vunpack.c.l.b16 %v565
    %v648 = vunpack.c.h.b16 %v565
    %v649 = vunpack.c.l.b16 %v566
    %v650 = vunpack.c.h.b16 %v566
    %v651 = vunpack.c.l.b16 %v567
    %v652 = vunpack.c.h.b16 %v567
    %v653 = vunpack.c.l.b16 %v568
    %v654 = vunpack.c.h.b16 %v568
    %v655 = vunpack.c.l.b16 %v569
    %v656 = vunpack.c.h.b16 %v569
    %v657 = vunpack.c.l.b16 %v570
    %v658 = vunpack.c.h.b16 %v570
    %v659 = vunpack.c.l.b16 %v571
    %v660 = vunpack.c.h.b16 %v571
    %v661 = vunpack.c.l.b16 %v572
    %v662 = vunpack.c.h.b16 %v572
    %v663 = vunpack.c.l.b16 %v573
    %v664 = vunpack.c.h.b16 %v573
    %v665 = vunpack.c.l.b16 %v574
    %v666 = vunpack.c.h.b16 %v574
    %v667 = vunpack.c.l.b16 %v575
    %v668 = vunpack.c.h.b16 %v575
    %v669 = vunpack.c.l.b16 %v576
    %v670 = vunpack.c.h.b16 %v576
    %v671 = vunpack.c.l.b16 %v577
    %v672 = vunpack.c.h.b16 %v577
    %v673 = vunpack.c.l.b16 %v578
    %v674 = vunpack.c.h.b16 %v578
    %v675 = vpack.c.b16 %v615, %v611
    %v676 = vpack.c.b16 %v616, %v612
    %v677 = vpack.c.b16 %v617, %v613
    %v678 = vpack.c.b16 %v618, %v614
    %v679 = vpack.c.b16 %v623, %v619
    %v680 = vpack.c.b16 %v624, %v620
    %v681 = vpack.c.b16 %v625, %v621
    %v682 = vpack.c.b16 %v626, %v622
    %v683 = vpack.c.b16 %v631, %v627
    %v684 = vpack.c.b16 %v632, %v628
    %v685 = vpack.c.b16 %v633, %v629
    %v686 = vpack.c.b16 %v634, %v630
    %v687 = vpack.c.b16 %v639, %v635
    %v688 = vpack.c.b16 %v640, %v636
    %v689 = vpack.c.b16 %v641, %v637
    %v690 = vpack.c.b16 %v642, %v638
    %v691 = vpack.c.b16 %v647, %v643
    %v692 = vpack.c.b16 %v648, %v644
    %v693 = vpack.c.b16 %v649, %v645
    %v694 = vpack.c.b16 %v650, %v646
    %v695 = vpack.c.b16 %v655, %v651
    %v696 = vpack.c.b16 %v656, %v652
    %v697 = vpack.c.b16 %v657, %v653
    %v698 = vpack.c.b16 %v658, %v654
    %v699 = vpack.c.b16 %v663, %v659
    %v700 = vpack.c.b16 %v664, %v660
    %v701 = vpack.c.b16 %v665, %v661
    %v702 = vpack.c.b16 %v666, %v662
    %v703 = vpack.c.b16 %v671, %v667
    %v704 = vpack.c.b16 %v672, %v668
    %v705 = vpack.c.b16 %v673, %v669
    %v706 = vpack.c.b16 %v674, %v670
    %739 = vmatprep.subr.bf16.mxu0 %v704
    %740 = vmatpush1.bf16.msra.mxu0 %v703
    %741 = vmatprep.subr.bf16.mxu0 %v700
    %742 = vmatpush1.bf16.msra.mxu0 %v699
    %743 = vmatprep.subr.bf16.mxu0 %v696
    %744 = vmatpush1.bf16.msra.mxu0 %v695
    %745 = vmatprep.subr.bf16.mxu0 %v692
    %746 = vmatpush1.bf16.msra.mxu0 %v691
    %747 = vmatprep.subr.bf16.mxu0 %v688
    %748 = vmatpush1.bf16.msra.mxu0 %v687
    %749 = vmatprep.subr.bf16.mxu0 %v684
    %750 = vmatpush1.bf16.msra.mxu0 %v683
    %751 = vmatprep.subr.bf16.mxu0 %v680
    %752 = vmatpush1.bf16.msra.mxu0 %v679
    %753 = vmatprep.subr.bf16.mxu0 %v676
    %754 = vmatpush1.bf16.msra.mxu0 %v675
    %755 = vmatprep.subr.bf16.mxu0 0
    %756 = vmatpush2.bf16.msra.mxu0 0
    %757 = vmatprep.subr.bf16.mxu0 0
    %758 = vmatpush2.bf16.msra.mxu0 0
    %759 = vmatprep.subr.bf16.mxu0 0
    %760 = vmatpush2.bf16.msra.mxu0 0
    %761 = vmatprep.subr.bf16.mxu0 0
    %762 = vmatpush2.bf16.msra.mxu0 0
    %763 = vmatprep.subr.bf16.mxu0 0
    %764 = vmatpush2.bf16.msra.mxu0 0
    %765 = vmatprep.subr.bf16.mxu0 0
    %766 = vmatpush2.bf16.msra.mxu0 0
    %767 = vmatprep.subr.bf16.mxu0 0
    %768 = vmatpush2.bf16.msra.mxu0 0
    %769 = vmatprep.subr.bf16.mxu0 0
    %770 = vmatpush2.bf16.msra.mxu0 0
    %771 = vmatprep.mubr.bf16.mxu0 0
    %772 = vmatmul.mubr.bf16.gmra.mxu0 0
    %v773 = vpop.f32.mrf.mxu0
    %v774 = vadd.f32 0.0, %v773
    %v775 = vpop.f32.mrf.mxu0
    %v776 = vadd.f32 0.0, %v775
    %v777 = vpop.f32.mrf.mxu0
    %v778 = vpop.f32.mrf.mxu0
    %779 = vdwg.mxu0
    %780 = vmatprep.subr.bf16.mxu0 %v706
    %781 = vmatpush1.bf16.msra.mxu0 %v705
    %782 = vmatprep.subr.bf16.mxu0 %v702
    %783 = vmatpush1.bf16.msra.mxu0 %v701
    %784 = vmatprep.subr.bf16.mxu0 %v698
    %785 = vmatpush1.bf16.msra.mxu0 %v697
    %786 = vmatprep.subr.bf16.mxu0 %v694
    %787 = vmatpush1.bf16.msra.mxu0 %v693
    %788 = vmatprep.subr.bf16.mxu0 %v690
    %789 = vmatpush1.bf16.msra.mxu0 %v689
    %790 = vmatprep.subr.bf16.mxu0 %v686
    %791 = vmatpush1.bf16.msra.mxu0 %v685
    %792 = vmatprep.subr.bf16.mxu0 %v682
    %793 = vmatpush1.bf16.msra.mxu0 %v681
    %794 = vmatprep.subr.bf16.mxu0 %v678
    %795 = vmatpush1.bf16.msra.mxu0 %v677
    %796 = vmatprep.subr.bf16.mxu0 0
    %797 = vmatpush2.bf16.msra.mxu0 0
    %798 = vmatprep.subr.bf16.mxu0 0
    %799 = vmatpush2.bf16.msra.mxu0 0
    %800 = vmatprep.subr.bf16.mxu0 0
    %801 = vmatpush2.bf16.msra.mxu0 0
    %802 = vmatprep.subr.bf16.mxu0 0
    %803 = vmatpush2.bf16.msra.mxu0 0
    %804 = vmatprep.subr.bf16.mxu0 0
    %805 = vmatpush2.bf16.msra.mxu0 0
    %806 = vmatprep.subr.bf16.mxu0 0
    %807 = vmatpush2.bf16.msra.mxu0 0
    %808 = vmatprep.subr.bf16.mxu0 0
    %809 = vmatpush2.bf16.msra.mxu0 0
    %810 = vmatprep.subr.bf16.mxu0 0
    %811 = vmatpush2.bf16.msra.mxu0 0
    %812 = vmatprep.mubr.bf16.mxu0 0
    %813 = vmatmul.mubr.bf16.gmra.mxu0 0
    %v814 = vpop.f32.mrf.mxu0
    %v815 = vadd.f32 0.0, %v814
    %v816 = vpop.f32.mrf.mxu0
    %v817 = vadd.f32 0.0, %v816
    %v818 = vpop.f32.mrf.mxu0
    %v819 = vpop.f32.mrf.mxu0
    %820 = vdwg.mxu0
    %v821 = vadd.f32 %v543, %v774
    %v822 = vadd.f32 %v544, %v776
    %v823 = vadd.f32 %v545, %v815
    %v824 = vadd.f32 %v546, %v817
    %v825 = vxor.u32 %v821, 2147483648
    %v826 = vmul.f32 %v825, 1.442695
    %v827 = vpow.pop %v826
    %v828 = vadd.f32 %v827, 1.0
    %v829 = vrcp.pop %v828
    %v830 = vmul.f32 1.0, %v829
    %v831 = vxor.u32 %v822, 2147483648
    %v832 = vmul.f32 %v831, 1.442695
    %v833 = vpow.pop %v832
    %v834 = vadd.f32 %v833, 1.0
    %v835 = vrcp.pop %v834
    %v836 = vmul.f32 1.0, %v835
    %v837 = vtanh.pop %v823
    %v838 = vxor.u32 %v824, 2147483648
    %v839 = vmul.f32 %v838, 1.442695
    %v840 = vpow.pop %v839
    %v841 = vadd.f32 %v840, 1.0
    %v842 = vrcp.pop %v841
    %v843 = vmul.f32 1.0, %v842
    %v844 = vmul.f32 %v836, 0.0
    %v845 = vmul.f32 %v830, %v837
    %v846 = vadd.f32 %v844, %v845
    %v847 = vtanh.pop %v846
    %v848 = vmul.f32 %v843, %v847
    %v849 = vpack.c.bf16 %v848, %v848
    %850 = vst [vmem:[#allocation3] sm:$0xf] %v849
    %s851 = smul.u32 1, 4
    %s852 = smul.addr %s851, 8
    %s853 = scalar_lea.vmem [#allocation2], %s852
    %v854 = vld [vmem:[%s853] sm:$0xff]
    %v855 = vld [vmem:[%s853 + $0x8] sm:$0xff]
    %v856 = vld [vmem:[%s853 + $0x10] sm:$0xff]
    %v857 = vld [vmem:[%s853 + $0x18] sm:$0xff]
    %v858 = vld [vmem:[#allocation9] sm:$0xff]
    %v859 = vld [vmem:[#allocation9 + $0x8] sm:$0xff]
    %v860 = vld [vmem:[#allocation9 + $0x10] sm:$0xff]
    %v861 = vld [vmem:[#allocation9 + $0x18] sm:$0xff]
    %v862 = vld [vmem:[#allocation9 + $0x20] sm:$0xff]
    %v863 = vld [vmem:[#allocation9 + $0x28] sm:$0xff]
    %v864 = vld [vmem:[#allocation9 + $0x30] sm:$0xff]
    %v865 = vld [vmem:[#allocation9 + $0x38] sm:$0xff]
    %v866 = vld [vmem:[#allocation9 + $0x40] sm:$0xff]
    %v867 = vld [vmem:[#allocation9 + $0x48] sm:$0xff]
    %v868 = vld [vmem:[#allocation9 + $0x50] sm:$0xff]
    %v869 = vld [vmem:[#allocation9 + $0x58] sm:$0xff]
    %v870 = vld [vmem:[#allocation9 + $0x60] sm:$0xff]
    %v871 = vld [vmem:[#allocation9 + $0x68] sm:$0xff]
    %v872 = vld [vmem:[#allocation9 + $0x70] sm:$0xff]
    %v873 = vld [vmem:[#allocation9 + $0x78] sm:$0xff]
    %v874 = vld [vmem:[#allocation9 + $0x80] sm:$0xff]
    %v875 = vld [vmem:[#allocation9 + $0x88] sm:$0xff]
    %v876 = vld [vmem:[#allocation9 + $0x90] sm:$0xff]
    %v877 = vld [vmem:[#allocation9 + $0x98] sm:$0xff]
    %v878 = vld [vmem:[#allocation9 + $0xa0] sm:$0xff]
    %v879 = vld [vmem:[#allocation9 + $0xa8] sm:$0xff]
    %v880 = vld [vmem:[#allocation9 + $0xb0] sm:$0xff]
    %v881 = vld [vmem:[#allocation9 + $0xb8] sm:$0xff]
    %v882 = vld [vmem:[#allocation9 + $0xc0] sm:$0xff]
    %v883 = vld [vmem:[#allocation9 + $0xc8] sm:$0xff]
    %v884 = vld [vmem:[#allocation9 + $0xd0] sm:$0xff]
    %v885 = vld [vmem:[#allocation9 + $0xd8] sm:$0xff]
    %v886 = vld [vmem:[#allocation9 + $0xe0] sm:$0xff]
    %v887 = vld [vmem:[#allocation9 + $0xe8] sm:$0xff]
    %v888 = vld [vmem:[#allocation9 + $0xf0] sm:$0xff]
    %v889 = vld [vmem:[#allocation9 + $0xf8] sm:$0xff]
    %v922 = vunpack.c.l.b16 %v858
    %v923 = vunpack.c.h.b16 %v858
    %v924 = vunpack.c.l.b16 %v859
    %v925 = vunpack.c.h.b16 %v859
    %v926 = vunpack.c.l.b16 %v860
    %v927 = vunpack.c.h.b16 %v860
    %v928 = vunpack.c.l.b16 %v861
    %v929 = vunpack.c.h.b16 %v861
    %v930 = vunpack.c.l.b16 %v862
    %v931 = vunpack.c.h.b16 %v862
    %v932 = vunpack.c.l.b16 %v863
    %v933 = vunpack.c.h.b16 %v863
    %v934 = vunpack.c.l.b16 %v864
    %v935 = vunpack.c.h.b16 %v864
    %v936 = vunpack.c.l.b16 %v865
    %v937 = vunpack.c.h.b16 %v865
    %v938 = vunpack.c.l.b16 %v866
    %v939 = vunpack.c.h.b16 %v866
    %v940 = vunpack.c.l.b16 %v867
    %v941 = vunpack.c.h.b16 %v867
    %v942 = vunpack.c.l.b16 %v868
    %v943 = vunpack.c.h.b16 %v868
    %v944 = vunpack.c.l.b16 %v869
    %v945 = vunpack.c.h.b16 %v869
    %v946 = vunpack.c.l.b16 %v870
    %v947 = vunpack.c.h.b16 %v870
    %v948 = vunpack.c.l.b16 %v871
    %v949 = vunpack.c.h.b16 %v871
    %v950 = vunpack.c.l.b16 %v872
    %v951 = vunpack.c.h.b16 %v872
    %v952 = vunpack.c.l.b16 %v873
    %v953 = vunpack.c.h.b16 %v873
    %v954 = vunpack.c.l.b16 %v874
    %v955 = vunpack.c.h.b16 %v874
    %v956 = vunpack.c.l.b16 %v875
    %v957 = vunpack.c.h.b16 %v875
    %v958 = vunpack.c.l.b16 %v876
    %v959 = vunpack.c.h.b16 %v876
    %v960 = vunpack.c.l.b16 %v877
    %v961 = vunpack.c.h.b16 %v877
    %v962 = vunpack.c.l.b16 %v878
    %v963 = vunpack.c.h.b16 %v878
    %v964 = vunpack.c.l.b16 %v879
    %v965 = vunpack.c.h.b16 %v879
    %v966 = vunpack.c.l.b16 %v880
    %v967 = vunpack.c.h.b16 %v880
    %v968 = vunpack.c.l.b16 %v881
    %v969 = vunpack.c.h.b16 %v881
    %v970 = vunpack.c.l.b16 %v882
    %v971 = vunpack.c.h.b16 %v882
    %v972 = vunpack.c.l.b16 %v883
    %v973 = vunpack.c.h.b16 %v883
    %v974 = vunpack.c.l.b16 %v884
    %v975 = vunpack.c.h.b16 %v884
    %v976 = vunpack.c.l.b16 %v885
    %v977 = vunpack.c.h.b16 %v885
    %v978 = vunpack.c.l.b16 %v886
    %v979 = vunpack.c.h.b16 %v886
    %v980 = vunpack.c.l.b16 %v887
    %v981 = vunpack.c.h.b16 %v887
    %v982 = vunpack.c.l.b16 %v888
    %v983 = vunpack.c.h.b16 %v888
    %v984 = vunpack.c.l.b16 %v889
    %v985 = vunpack.c.h.b16 %v889
    %v986 = vpack.c.b16 %v926, %v922
    %v987 = vpack.c.b16 %v927, %v923
    %v988 = vpack.c.b16 %v928, %v924
    %v989 = vpack.c.b16 %v929, %v925
    %v990 = vpack.c.b16 %v934, %v930
    %v991 = vpack.c.b16 %v935, %v931
    %v992 = vpack.c.b16 %v936, %v932
    %v993 = vpack.c.b16 %v937, %v933
    %v994 = vpack.c.b16 %v942, %v938
    %v995 = vpack.c.b16 %v943, %v939
    %v996 = vpack.c.b16 %v944, %v940
    %v997 = vpack.c.b16 %v945, %v941
    %v998 = vpack.c.b16 %v950, %v946
    %v999 = vpack.c.b16 %v951, %v947
    %v1000 = vpack.c.b16 %v952, %v948
    %v1001 = vpack.c.b16 %v953, %v949
    %v1002 = vpack.c.b16 %v958, %v954
    %v1003 = vpack.c.b16 %v959, %v955
    %v1004 = vpack.c.b16 %v960, %v956
    %v1005 = vpack.c.b16 %v961, %v957
    %v1006 = vpack.c.b16 %v966, %v962
    %v1007 = vpack.c.b16 %v967, %v963
    %v1008 = vpack.c.b16 %v968, %v964
    %v1009 = vpack.c.b16 %v969, %v965
    %v1010 = vpack.c.b16 %v974, %v970
    %v1011 = vpack.c.b16 %v975, %v971
    %v1012 = vpack.c.b16 %v976, %v972
    %v1013 = vpack.c.b16 %v977, %v973
    %v1014 = vpack.c.b16 %v982, %v978
    %v1015 = vpack.c.b16 %v983, %v979
    %v1016 = vpack.c.b16 %v984, %v980
    %v1017 = vpack.c.b16 %v985, %v981
    %1050 = vmatprep.subr.bf16.mxu0 %v1015
    %1051 = vmatpush1.bf16.msra.mxu0 %v1014
    %1052 = vmatprep.subr.bf16.mxu0 %v1011
    %1053 = vmatpush1.bf16.msra.mxu0 %v1010
    %1054 = vmatprep.subr.bf16.mxu0 %v1007
    %1055 = vmatpush1.bf16.msra.mxu0 %v1006
    %1056 = vmatprep.subr.bf16.mxu0 %v1003
    %1057 = vmatpush1.bf16.msra.mxu0 %v1002
    %1058 = vmatprep.subr.bf16.mxu0 %v999
    %1059 = vmatpush1.bf16.msra.mxu0 %v998
    %1060 = vmatprep.subr.bf16.mxu0 %v995
    %1061 = vmatpush1.bf16.msra.mxu0 %v994
    %1062 = vmatprep.subr.bf16.mxu0 %v991
    %1063 = vmatpush1.bf16.msra.mxu0 %v990
    %1064 = vmatprep.subr.bf16.mxu0 %v987
    %1065 = vmatpush1.bf16.msra.mxu0 %v986
    %1066 = vmatprep.subr.bf16.mxu0 0
    %1067 = vmatpush2.bf16.msra.mxu0 0
    %1068 = vmatprep.subr.bf16.mxu0 0
    %1069 = vmatpush2.bf16.msra.mxu0 0
    %1070 = vmatprep.subr.bf16.mxu0 0
    %1071 = vmatpush2.bf16.msra.mxu0 0
    %1072 = vmatprep.subr.bf16.mxu0 0
    %1073 = vmatpush2.bf16.msra.mxu0 0
    %1074 = vmatprep.subr.bf16.mxu0 0
    %1075 = vmatpush2.bf16.msra.mxu0 0
    %1076 = vmatprep.subr.bf16.mxu0 0
    %1077 = vmatpush2.bf16.msra.mxu0 0
    %1078 = vmatprep.subr.bf16.mxu0 0
    %1079 = vmatpush2.bf16.msra.mxu0 0
    %1080 = vmatprep.subr.bf16.mxu0 0
    %1081 = vmatpush2.bf16.msra.mxu0 0
    %1082 = vmatprep.mubr.bf16.mxu0 0
    %1083 = vmatmul.mubr.bf16.gmra.mxu0 %v849
    %v1084 = vpop.f32.mrf.mxu0
    %v1085 = vadd.f32 0.0, %v1084
    %v1086 = vpop.f32.mrf.mxu0
    %v1087 = vadd.f32 0.0, %v1086
    %v1088 = vpop.f32.mrf.mxu0
    %v1089 = vpop.f32.mrf.mxu0
    %1090 = vdwg.mxu0
    %1091 = vmatprep.subr.bf16.mxu0 %v1017
    %1092 = vmatpush1.bf16.msra.mxu0 %v1016
    %1093 = vmatprep.subr.bf16.mxu0 %v1013
    %1094 = vmatpush1.bf16.msra.mxu0 %v1012
    %1095 = vmatprep.subr.bf16.mxu0 %v1009
    %1096 = vmatpush1.bf16.msra.mxu0 %v1008
    %1097 = vmatprep.subr.bf16.mxu0 %v1005
    %1098 = vmatpush1.bf16.msra.mxu0 %v1004
    %1099 = vmatprep.subr.bf16.mxu0 %v1001
    %1100 = vmatpush1.bf16.msra.mxu0 %v1000
    %1101 = vmatprep.subr.bf16.mxu0 %v997
    %1102 = vmatpush1.bf16.msra.mxu0 %v996
    %1103 = vmatprep.subr.bf16.mxu0 %v993
    %1104 = vmatpush1.bf16.msra.mxu0 %v992
    %1105 = vmatprep.subr.bf16.mxu0 %v989
    %1106 = vmatpush1.bf16.msra.mxu0 %v988
    %1107 = vmatprep.subr.bf16.mxu0 0
    %1108 = vmatpush2.bf16.msra.mxu0 0
    %1109 = vmatprep.subr.bf16.mxu0 0
    %1110 = vmatpush2.bf16.msra.mxu0 0
    %1111 = vmatprep.subr.bf16.mxu0 0
    %1112 = vmatpush2.bf16.msra.mxu0 0
    %1113 = vmatprep.subr.bf16.mxu0 0
    %1114 = vmatpush2.bf16.msra.mxu0 0
    %1115 = vmatprep.subr.bf16.mxu0 0
    %1116 = vmatpush2.bf16.msra.mxu0 0
    %1117 = vmatprep.subr.bf16.mxu0 0
    %1118 = vmatpush2.bf16.msra.mxu0 0
    %1119 = vmatprep.subr.bf16.mxu0 0
    %1120 = vmatpush2.bf16.msra.mxu0 0
    %1121 = vmatprep.subr.bf16.mxu0 0
    %1122 = vmatpush2.bf16.msra.mxu0 0
    %1123 = vmatprep.mubr.bf16.mxu0 0
    %1124 = vmatmul.mubr.bf16.gmra.mxu0 %v849
    %v1125 = vpop.f32.mrf.mxu0
    %v1126 = vadd.f32 0.0, %v1125
    %v1127 = vpop.f32.mrf.mxu0
    %v1128 = vadd.f32 0.0, %v1127
    %v1129 = vpop.f32.mrf.mxu0
    %v1130 = vpop.f32.mrf.mxu0
    %1131 = vdwg.mxu0
    %v1132 = vadd.f32 %v854, %v1085
    %v1133 = vadd.f32 %v855, %v1087
    %v1134 = vadd.f32 %v856, %v1126
    %v1135 = vadd.f32 %v857, %v1128
    %v1136 = vxor.u32 %v1132, 2147483648
    %v1137 = vmul.f32 %v1136, 1.442695
    %v1138 = vpow.pop %v1137
    %v1139 = vadd.f32 %v1138, 1.0
    %v1140 = vrcp.pop %v1139
    %v1141 = vmul.f32 1.0, %v1140
    %v1142 = vxor.u32 %v1133, 2147483648
    %v1143 = vmul.f32 %v1142, 1.442695
    %v1144 = vpow.pop %v1143
    %v1145 = vadd.f32 %v1144, 1.0
    %v1146 = vrcp.pop %v1145
    %v1147 = vmul.f32 1.0, %v1146
    %v1148 = vtanh.pop %v1134
    %v1149 = vxor.u32 %v1135, 2147483648
    %v1150 = vmul.f32 %v1149, 1.442695
    %v1151 = vpow.pop %v1150
    %v1152 = vadd.f32 %v1151, 1.0
    %v1153 = vrcp.pop %v1152
    %v1154 = vmul.f32 1.0, %v1153
    %v1155 = vmul.f32 %v1147, %v846
    %v1156 = vmul.f32 %v1141, %v1148
    %v1157 = vadd.f32 %v1155, %v1156
    %v1158 = vtanh.pop %v1157
    %v1159 = vmul.f32 %v1154, %v1158
    %v1160 = vpack.c.bf16 %v1159, %v1159
    %s1161 = scalar_lea.vmem [#allocation3], 4
    %1162 = vst [vmem:[%s1161] sm:$0xf] %v1160
    %s1163 = smul.u32 2, 4
    %s1164 = smul.addr %s1163, 8
    %s1165 = scalar_lea.vmem [#allocation2], %s1164
    %v1166 = vld [vmem:[%s1165] sm:$0xff]
    %v1167 = vld [vmem:[%s1165 + $0x8] sm:$0xff]
    %v1168 = vld [vmem:[%s1165 + $0x10] sm:$0xff]
    %v1169 = vld [vmem:[%s1165 + $0x18] sm:$0xff]
    %v1170 = vld [vmem:[#allocation9] sm:$0xff]
    %v1171 = vld [vmem:[#allocation9 + $0x8] sm:$0xff]
    %v1172 = vld [vmem:[#allocation9 + $0x10] sm:$0xff]
    %v1173 = vld [vmem:[#allocation9 + $0x18] sm:$0xff]
    %v1174 = vld [vmem:[#allocation9 + $0x20] sm:$0xff]
    %v1175 = vld [vmem:[#allocation9 + $0x28] sm:$0xff]
    %v1176 = vld [vmem:[#allocation9 + $0x30] sm:$0xff]
    %v1177 = vld [vmem:[#allocation9 + $0x38] sm:$0xff]
    %v1178 = vld [vmem:[#allocation9 + $0x40] sm:$0xff]
    %v1179 = vld [vmem:[#allocation9 + $0x48] sm:$0xff]
    %v1180 = vld [vmem:[#allocation9 + $0x50] sm:$0xff]
    %v1181 = vld [vmem:[#allocation9 + $0x58] sm:$0xff]
    %v1182 = vld [vmem:[#allocation9 + $0x60] sm:$0xff]
    %v1183 = vld [vmem:[#allocation9 + $0x68] sm:$0xff]
    %v1184 = vld [vmem:[#allocation9 + $0x70] sm:$0xff]
    %v1185 = vld [vmem:[#allocation9 + $0x78] sm:$0xff]
    %v1186 = vld [vmem:[#allocation9 + $0x80] sm:$0xff]
    %v1187 = vld [vmem:[#allocation9 + $0x88] sm:$0xff]
    %v1188 = vld [vmem:[#allocation9 + $0x90] sm:$0xff]
    %v1189 = vld [vmem:[#allocation9 + $0x98] sm:$0xff]
    %v1190 = vld [vmem:[#allocation9 + $0xa0] sm:$0xff]
    %v1191 = vld [vmem:[#allocation9 + $0xa8] sm:$0xff]
    %v1192 = vld [vmem:[#allocation9 + $0xb0] sm:$0xff]
    %v1193 = vld [vmem:[#allocation9 + $0xb8] sm:$0xff]
    %v1194 = vld [vmem:[#allocation9 + $0xc0] sm:$0xff]
    %v1195 = vld [vmem:[#allocation9 + $0xc8] sm:$0xff]
    %v1196 = vld [vmem:[#allocation9 + $0xd0] sm:$0xff]
    %v1197 = vld [vmem:[#allocation9 + $0xd8] sm:$0xff]
    %v1198 = vld [vmem:[#allocation9 + $0xe0] sm:$0xff]
    %v1199 = vld [vmem:[#allocation9 + $0xe8] sm:$0xff]
    %v1200 = vld [vmem:[#allocation9 + $0xf0] sm:$0xff]
    %v1201 = vld [vmem:[#allocation9 + $0xf8] sm:$0xff]
    %v1234 = vunpack.c.l.b16 %v1170
    %v1235 = vunpack.c.h.b16 %v1170
    %v1236 = vunpack.c.l.b16 %v1171
    %v1237 = vunpack.c.h.b16 %v1171
    %v1238 = vunpack.c.l.b16 %v1172
    %v1239 = vunpack.c.h.b16 %v1172
    %v1240 = vunpack.c.l.b16 %v1173
    %v1241 = vunpack.c.h.b16 %v1173
    %v1242 = vunpack.c.l.b16 %v1174
    %v1243 = vunpack.c.h.b16 %v1174
    %v1244 = vunpack.c.l.b16 %v1175
    %v1245 = vunpack.c.h.b16 %v1175
    %v1246 = vunpack.c.l.b16 %v1176
    %v1247 = vunpack.c.h.b16 %v1176
    %v1248 = vunpack.c.l.b16 %v1177
    %v1249 = vunpack.c.h.b16 %v1177
    %v1250 = vunpack.c.l.b16 %v1178
    %v1251 = vunpack.c.h.b16 %v1178
    %v1252 = vunpack.c.l.b16 %v1179
    %v1253 = vunpack.c.h.b16 %v1179
    %v1254 = vunpack.c.l.b16 %v1180
    %v1255 = vunpack.c.h.b16 %v1180
    %v1256 = vunpack.c.l.b16 %v1181
    %v1257 = vunpack.c.h.b16 %v1181
    %v1258 = vunpack.c.l.b16 %v1182
    %v1259 = vunpack.c.h.b16 %v1182
    %v1260 = vunpack.c.l.b16 %v1183
    %v1261 = vunpack.c.h.b16 %v1183
    %v1262 = vunpack.c.l.b16 %v1184
    %v1263 = vunpack.c.h.b16 %v1184
    %v1264 = vunpack.c.l.b16 %v1185
    %v1265 = vunpack.c.h.b16 %v1185
    %v1266 = vunpack.c.l.b16 %v1186
    %v1267 = vunpack.c.h.b16 %v1186
    %v1268 = vunpack.c.l.b16 %v1187
    %v1269 = vunpack.c.h.b16 %v1187
    %v1270 = vunpack.c.l.b16 %v1188
    %v1271 = vunpack.c.h.b16 %v1188
    %v1272 = vunpack.c.l.b16 %v1189
    %v1273 = vunpack.c.h.b16 %v1189
    %v1274 = vunpack.c.l.b16 %v1190
    %v1275 = vunpack.c.h.b16 %v1190
    %v1276 = vunpack.c.l.b16 %v1191
    %v1277 = vunpack.c.h.b16 %v1191
    %v1278 = vunpack.c.l.b16 %v1192
    %v1279 = vunpack.c.h.b16 %v1192
    %v1280 = vunpack.c.l.b16 %v1193
    %v1281 = vunpack.c.h.b16 %v1193
    %v1282 = vunpack.c.l.b16 %v1194
    %v1283 = vunpack.c.h.b16 %v1194
    %v1284 = vunpack.c.l.b16 %v1195
    %v1285 = vunpack.c.h.b16 %v1195
    %v1286 = vunpack.c.l.b16 %v1196
    %v1287 = vunpack.c.h.b16 %v1196
    %v1288 = vunpack.c.l.b16 %v1197
    %v1289 = vunpack.c.h.b16 %v1197
    %v1290 = vunpack.c.l.b16 %v1198
    %v1291 = vunpack.c.h.b16 %v1198
    %v1292 = vunpack.c.l.b16 %v1199
    %v1293 = vunpack.c.h.b16 %v1199
    %v1294 = vunpack.c.l.b16 %v1200
    %v1295 = vunpack.c.h.b16 %v1200
    %v1296 = vunpack.c.l.b16 %v1201
    %v1297 = vunpack.c.h.b16 %v1201
    %v1298 = vpack.c.b16 %v1238, %v1234
    %v1299 = vpack.c.b16 %v1239, %v1235
    %v1300 = vpack.c.b16 %v1240, %v1236
    %v1301 = vpack.c.b16 %v1241, %v1237
    %v1302 = vpack.c.b16 %v1246, %v1242
    %v1303 = vpack.c.b16 %v1247, %v1243
    %v1304 = vpack.c.b16 %v1248, %v1244
    %v1305 = vpack.c.b16 %v1249, %v1245
    %v1306 = vpack.c.b16 %v1254, %v1250
    %v1307 = vpack.c.b16 %v1255, %v1251
    %v1308 = vpack.c.b16 %v1256, %v1252
    %v1309 = vpack.c.b16 %v1257, %v1253
    %v1310 = vpack.c.b16 %v1262, %v1258
    %v1311 = vpack.c.b16 %v1263, %v1259
    %v1312 = vpack.c.b16 %v1264, %v1260
    %v1313 = vpack.c.b16 %v1265, %v1261
    %v1314 = vpack.c.b16 %v1270, %v1266
    %v1315 = vpack.c.b16 %v1271, %v1267
    %v1316 = vpack.c.b16 %v1272, %v1268
    %v1317 = vpack.c.b16 %v1273, %v1269
    %v1318 = vpack.c.b16 %v1278, %v1274
    %v1319 = vpack.c.b16 %v1279, %v1275
    %v1320 = vpack.c.b16 %v1280, %v1276
    %v1321 = vpack.c.b16 %v1281, %v1277
    %v1322 = vpack.c.b16 %v1286, %v1282
    %v1323 = vpack.c.b16 %v1287, %v1283
    %v1324 = vpack.c.b16 %v1288, %v1284
    %v1325 = vpack.c.b16 %v1289, %v1285
    %v1326 = vpack.c.b16 %v1294, %v1290
    %v1327 = vpack.c.b16 %v1295, %v1291
    %v1328 = vpack.c.b16 %v1296, %v1292
    %v1329 = vpack.c.b16 %v1297, %v1293
    %1362 = vmatprep.subr.bf16.mxu0 %v1327
    %1363 = vmatpush1.bf16.msra.mxu0 %v1326
    %1364 = vmatprep.subr.bf16.mxu0 %v1323
    %1365 = vmatpush1.bf16.msra.mxu0 %v1322
    %1366 = vmatprep.subr.bf16.mxu0 %v1319
    %1367 = vmatpush1.bf16.msra.mxu0 %v1318
    %1368 = vmatprep.subr.bf16.mxu0 %v1315
    %1369 = vmatpush1.bf16.msra.mxu0 %v1314
    %1370 = vmatprep.subr.bf16.mxu0 %v1311
    %1371 = vmatpush1.bf16.msra.mxu0 %v1310
    %1372 = vmatprep.subr.bf16.mxu0 %v1307
    %1373 = vmatpush1.bf16.msra.mxu0 %v1306
    %1374 = vmatprep.subr.bf16.mxu0 %v1303
    %1375 = vmatpush1.bf16.msra.mxu0 %v1302
    %1376 = vmatprep.subr.bf16.mxu0 %v1299
    %1377 = vmatpush1.bf16.msra.mxu0 %v1298
    %1378 = vmatprep.subr.bf16.mxu0 0
    %1379 = vmatpush2.bf16.msra.mxu0 0
    %1380 = vmatprep.subr.bf16.mxu0 0
    %1381 = vmatpush2.bf16.msra.mxu0 0
    %1382 = vmatprep.subr.bf16.mxu0 0
    %1383 = vmatpush2.bf16.msra.mxu0 0
    %1384 = vmatprep.subr.bf16.mxu0 0
    %1385 = vmatpush2.bf16.msra.mxu0 0
    %1386 = vmatprep.subr.bf16.mxu0 0
    %1387 = vmatpush2.bf16.msra.mxu0 0
    %1388 = vmatprep.subr.bf16.mxu0 0
    %1389 = vmatpush2.bf16.msra.mxu0 0
    %1390 = vmatprep.subr.bf16.mxu0 0
    %1391 = vmatpush2.bf16.msra.mxu0 0
    %1392 = vmatprep.subr.bf16.mxu0 0
    %1393 = vmatpush2.bf16.msra.mxu0 0
    %1394 = vmatprep.mubr.bf16.mxu0 0
    %1395 = vmatmul.mubr.bf16.gmra.mxu0 %v1160
    %v1396 = vpop.f32.mrf.mxu0
    %v1397 = vadd.f32 0.0, %v1396
    %v1398 = vpop.f32.mrf.mxu0
    %v1399 = vadd.f32 0.0, %v1398
    %v1400 = vpop.f32.mrf.mxu0
    %v1401 = vpop.f32.mrf.mxu0
    %1402 = vdwg.mxu0
    %1403 = vmatprep.subr.bf16.mxu0 %v1329
    %1404 = vmatpush1.bf16.msra.mxu0 %v1328
    %1405 = vmatprep.subr.bf16.mxu0 %v1325
    %1406 = vmatpush1.bf16.msra.mxu0 %v1324
    %1407 = vmatprep.subr.bf16.mxu0 %v1321
    %1408 = vmatpush1.bf16.msra.mxu0 %v1320
    %1409 = vmatprep.subr.bf16.mxu0 %v1317
    %1410 = vmatpush1.bf16.msra.mxu0 %v1316
    %1411 = vmatprep.subr.bf16.mxu0 %v1313
    %1412 = vmatpush1.bf16.msra.mxu0 %v1312
    %1413 = vmatprep.subr.bf16.mxu0 %v1309
    %1414 = vmatpush1.bf16.msra.mxu0 %v1308
    %1415 = vmatprep.subr.bf16.mxu0 %v1305
    %1416 = vmatpush1.bf16.msra.mxu0 %v1304
    %1417 = vmatprep.subr.bf16.mxu0 %v1301
    %1418 = vmatpush1.bf16.msra.mxu0 %v1300
    %1419 = vmatprep.subr.bf16.mxu0 0
    %1420 = vmatpush2.bf16.msra.mxu0 0
    %1421 = vmatprep.subr.bf16.mxu0 0
    %1422 = vmatpush2.bf16.msra.mxu0 0
    %1423 = vmatprep.subr.bf16.mxu0 0
    %1424 = vmatpush2.bf16.msra.mxu0 0
    %1425 = vmatprep.subr.bf16.mxu0 0
    %1426 = vmatpush2.bf16.msra.mxu0 0
    %1427 = vmatprep.subr.bf16.mxu0 0
    %1428 = vmatpush2.bf16.msra.mxu0 0
    %1429 = vmatprep.subr.bf16.mxu0 0
    %1430 = vmatpush2.bf16.msra.mxu0 0
    %1431 = vmatprep.subr.bf16.mxu0 0
    %1432 = vmatpush2.bf16.msra.mxu0 0
    %1433 = vmatprep.subr.bf16.mxu0 0
    %1434 = vmatpush2.bf16.msra.mxu0 0
    %1435 = vmatprep.mubr.bf16.mxu0 0
    %1436 = vmatmul.mubr.bf16.gmra.mxu0 %v1160
    %v1437 = vpop.f32.mrf.mxu0
    %v1438 = vadd.f32 0.0, %v1437
    %v1439 = vpop.f32.mrf.mxu0
    %v1440 = vadd.f32 0.0, %v1439
    %v1441 = vpop.f32.mrf.mxu0
    %v1442 = vpop.f32.mrf.mxu0
    %1443 = vdwg.mxu0
    %v1444 = vadd.f32 %v1166, %v1397
    %v1445 = vadd.f32 %v1167, %v1399
    %v1446 = vadd.f32 %v1168, %v1438
    %v1447 = vadd.f32 %v1169, %v1440
    %v1448 = vxor.u32 %v1444, 2147483648
    %v1449 = vmul.f32 %v1448, 1.442695
    %v1450 = vpow.pop %v1449
    %v1451 = vadd.f32 %v1450, 1.0
    %v1452 = vrcp.pop %v1451
    %v1453 = vmul.f32 1.0, %v1452
    %v1454 = vxor.u32 %v1445, 2147483648
    %v1455 = vmul.f32 %v1454, 1.442695
    %v1456 = vpow.pop %v1455
    %v1457 = vadd.f32 %v1456, 1.0
    %v1458 = vrcp.pop %v1457
    %v1459 = vmul.f32 1.0, %v1458
    %v1460 = vtanh.pop %v1446
    %v1461 = vxor.u32 %v1447, 2147483648
    %v1462 = vmul.f32 %v1461, 1.442695
    %v1463 = vpow.pop %v1462
    %v1464 = vadd.f32 %v1463, 1.0
    %v1465 = vrcp.pop %v1464
    %v1466 = vmul.f32 1.0, %v1465
    %v1467 = vmul.f32 %v1459, %v1157
    %v1468 = vmul.f32 %v1453, %v1460
    %v1469 = vadd.f32 %v1467, %v1468
    %v1470 = vtanh.pop %v1469
    %v1471 = vmul.f32 %v1466, %v1470
    %v1472 = vpack.c.bf16 %v1471, %v1471
    %s1473 = scalar_lea.vmem [#allocation3], 8
    %1474 = vst [vmem:[%s1473] sm:$0xf] %v1472
    %s1475 = smul.u32 3, 4
    %s1476 = smul.addr %s1475, 8
    %s1477 = scalar_lea.vmem [#allocation2], %s1476
    %v1478 = vld [vmem:[%s1477] sm:$0xff]
    %v1479 = vld [vmem:[%s1477 + $0x8] sm:$0xff]
    %v1480 = vld [vmem:[%s1477 + $0x10] sm:$0xff]
    %v1481 = vld [vmem:[%s1477 + $0x18] sm:$0xff]
    %v1482 = vld [vmem:[#allocation9] sm:$0xff]
    %v1483 = vld [vmem:[#allocation9 + $0x8] sm:$0xff]
    %v1484 = vld [vmem:[#allocation9 + $0x10] sm:$0xff]
    %v1485 = vld [vmem:[#allocation9 + $0x18] sm:$0xff]
    %v1486 = vld [vmem:[#allocation9 + $0x20] sm:$0xff]
    %v1487 = vld [vmem:[#allocation9 + $0x28] sm:$0xff]
    %v1488 = vld [vmem:[#allocation9 + $0x30] sm:$0xff]
    %v1489 = vld [vmem:[#allocation9 + $0x38] sm:$0xff]
    %v1490 = vld [vmem:[#allocation9 + $0x40] sm:$0xff]
    %v1491 = vld [vmem:[#allocation9 + $0x48] sm:$0xff]
    %v1492 = vld [vmem:[#allocation9 + $0x50] sm:$0xff]
    %v1493 = vld [vmem:[#allocation9 + $0x58] sm:$0xff]
    %v1494 = vld [vmem:[#allocation9 + $0x60] sm:$0xff]
    %v1495 = vld [vmem:[#allocation9 + $0x68] sm:$0xff]
    %v1496 = vld [vmem:[#allocation9 + $0x70] sm:$0xff]
    %v1497 = vld [vmem:[#allocation9 + $0x78] sm:$0xff]
    %v1498 = vld [vmem:[#allocation9 + $0x80] sm:$0xff]
    %v1499 = vld [vmem:[#allocation9 + $0x88] sm:$0xff]
    %v1500 = vld [vmem:[#allocation9 + $0x90] sm:$0xff]
    %v1501 = vld [vmem:[#allocation9 + $0x98] sm:$0xff]
    %v1502 = vld [vmem:[#allocation9 + $0xa0] sm:$0xff]
    %v1503 = vld [vmem:[#allocation9 + $0xa8] sm:$0xff]
    %v1504 = vld [vmem:[#allocation9 + $0xb0] sm:$0xff]
    %v1505 = vld [vmem:[#allocation9 + $0xb8] sm:$0xff]
    %v1506 = vld [vmem:[#allocation9 + $0xc0] sm:$0xff]
    %v1507 = vld [vmem:[#allocation9 + $0xc8] sm:$0xff]
    %v1508 = vld [vmem:[#allocation9 + $0xd0] sm:$0xff]
    %v1509 = vld [vmem:[#allocation9 + $0xd8] sm:$0xff]
    %v1510 = vld [vmem:[#allocation9 + $0xe0] sm:$0xff]
    %v1511 = vld [vmem:[#allocation9 + $0xe8] sm:$0xff]
    %v1512 = vld [vmem:[#allocation9 + $0xf0] sm:$0xff]
    %v1513 = vld [vmem:[#allocation9 + $0xf8] sm:$0xff]
    %v1546 = vunpack.c.l.b16 %v1482
    %v1547 = vunpack.c.h.b16 %v1482
    %v1548 = vunpack.c.l.b16 %v1483
    %v1549 = vunpack.c.h.b16 %v1483
    %v1550 = vunpack.c.l.b16 %v1484
    %v1551 = vunpack.c.h.b16 %v1484
    %v1552 = vunpack.c.l.b16 %v1485
    %v1553 = vunpack.c.h.b16 %v1485
    %v1554 = vunpack.c.l.b16 %v1486
    %v1555 = vunpack.c.h.b16 %v1486
    %v1556 = vunpack.c.l.b16 %v1487
    %v1557 = vunpack.c.h.b16 %v1487
    %v1558 = vunpack.c.l.b16 %v1488
    %v1559 = vunpack.c.h.b16 %v1488
    %v1560 = vunpack.c.l.b16 %v1489
    %v1561 = vunpack.c.h.b16 %v1489
    %v1562 = vunpack.c.l.b16 %v1490
    %v1563 = vunpack.c.h.b16 %v1490
    %v1564 = vunpack.c.l.b16 %v1491
    %v1565 = vunpack.c.h.b16 %v1491
    %v1566 = vunpack.c.l.b16 %v1492
    %v1567 = vunpack.c.h.b16 %v1492
    %v1568 = vunpack.c.l.b16 %v1493
    %v1569 = vunpack.c.h.b16 %v1493
    %v1570 = vunpack.c.l.b16 %v1494
    %v1571 = vunpack.c.h.b16 %v1494
    %v1572 = vunpack.c.l.b16 %v1495
    %v1573 = vunpack.c.h.b16 %v1495
    %v1574 = vunpack.c.l.b16 %v1496
    %v1575 = vunpack.c.h.b16 %v1496
    %v1576 = vunpack.c.l.b16 %v1497
    %v1577 = vunpack.c.h.b16 %v1497
    %v1578 = vunpack.c.l.b16 %v1498
    %v1579 = vunpack.c.h.b16 %v1498
    %v1580 = vunpack.c.l.b16 %v1499
    %v1581 = vunpack.c.h.b16 %v1499
    %v1582 = vunpack.c.l.b16 %v1500
    %v1583 = vunpack.c.h.b16 %v1500
    %v1584 = vunpack.c.l.b16 %v1501
    %v1585 = vunpack.c.h.b16 %v1501
    %v1586 = vunpack.c.l.b16 %v1502
    %v1587 = vunpack.c.h.b16 %v1502
    %v1588 = vunpack.c.l.b16 %v1503
    %v1589 = vunpack.c.h.b16 %v1503
    %v1590 = vunpack.c.l.b16 %v1504
    %v1591 = vunpack.c.h.b16 %v1504
    %v1592 = vunpack.c.l.b16 %v1505
    %v1593 = vunpack.c.h.b16 %v1505
    %v1594 = vunpack.c.l.b16 %v1506
    %v1595 = vunpack.c.h.b16 %v1506
    %v1596 = vunpack.c.l.b16 %v1507
    %v1597 = vunpack.c.h.b16 %v1507
    %v1598 = vunpack.c.l.b16 %v1508
    %v1599 = vunpack.c.h.b16 %v1508
    %v1600 = vunpack.c.l.b16 %v1509
    %v1601 = vunpack.c.h.b16 %v1509
    %v1602 = vunpack.c.l.b16 %v1510
    %v1603 = vunpack.c.h.b16 %v1510
    %v1604 = vunpack.c.l.b16 %v1511
    %v1605 = vunpack.c.h.b16 %v1511
    %v1606 = vunpack.c.l.b16 %v1512
    %v1607 = vunpack.c.h.b16 %v1512
    %v1608 = vunpack.c.l.b16 %v1513
    %v1609 = vunpack.c.h.b16 %v1513
    %v1610 = vpack.c.b16 %v1550, %v1546
    %v1611 = vpack.c.b16 %v1551, %v1547
    %v1612 = vpack.c.b16 %v1552, %v1548
    %v1613 = vpack.c.b16 %v1553, %v1549
    %v1614 = vpack.c.b16 %v1558, %v1554
    %v1615 = vpack.c.b16 %v1559, %v1555
    %v1616 = vpack.c.b16 %v1560, %v1556
    %v1617 = vpack.c.b16 %v1561, %v1557
    %v1618 = vpack.c.b16 %v1566, %v1562
    %v1619 = vpack.c.b16 %v1567, %v1563
    %v1620 = vpack.c.b16 %v1568, %v1564
    %v1621 = vpack.c.b16 %v1569, %v1565
    %v1622 = vpack.c.b16 %v1574, %v1570
    %v1623 = vpack.c.b16 %v1575, %v1571
    %v1624 = vpack.c.b16 %v1576, %v1572
    %v1625 = vpack.c.b16 %v1577, %v1573
    %v1626 = vpack.c.b16 %v1582, %v1578
    %v1627 = vpack.c.b16 %v1583, %v1579
    %v1628 = vpack.c.b16 %v1584, %v1580
    %v1629 = vpack.c.b16 %v1585, %v1581
    %v1630 = vpack.c.b16 %v1590, %v1586
    %v1631 = vpack.c.b16 %v1591, %v1587
    %v1632 = vpack.c.b16 %v1592, %v1588
    %v1633 = vpack.c.b16 %v1593, %v1589
    %v1634 = vpack.c.b16 %v1598, %v1594
    %v1635 = vpack.c.b16 %v1599, %v1595
    %v1636 = vpack.c.b16 %v1600, %v1596
    %v1637 = vpack.c.b16 %v1601, %v1597
    %v1638 = vpack.c.b16 %v1606, %v1602
    %v1639 = vpack.c.b16 %v1607, %v1603
    %v1640 = vpack.c.b16 %v1608, %v1604
    %v1641 = vpack.c.b16 %v1609, %v1605
    %1674 = vmatprep.subr.bf16.mxu0 %v1639
    %1675 = vmatpush1.bf16.msra.mxu0 %v1638
    %1676 = vmatprep.subr.bf16.mxu0 %v1635
    %1677 = vmatpush1.bf16.msra.mxu0 %v1634
    %1678 = vmatprep.subr.bf16.mxu0 %v1631
    %1679 = vmatpush1.bf16.msra.mxu0 %v1630
    %1680 = vmatprep.subr.bf16.mxu0 %v1627
    %1681 = vmatpush1.bf16.msra.mxu0 %v1626
    %1682 = vmatprep.subr.bf16.mxu0 %v1623
    %1683 = vmatpush1.bf16.msra.mxu0 %v1622
    %1684 = vmatprep.subr.bf16.mxu0 %v1619
    %1685 = vmatpush1.bf16.msra.mxu0 %v1618
    %1686 = vmatprep.subr.bf16.mxu0 %v1615
    %1687 = vmatpush1.bf16.msra.mxu0 %v1614
    %1688 = vmatprep.subr.bf16.mxu0 %v1611
    %1689 = vmatpush1.bf16.msra.mxu0 %v1610
    %1690 = vmatprep.subr.bf16.mxu0 0
    %1691 = vmatpush2.bf16.msra.mxu0 0
    %1692 = vmatprep.subr.bf16.mxu0 0
    %1693 = vmatpush2.bf16.msra.mxu0 0
    %1694 = vmatprep.subr.bf16.mxu0 0
    %1695 = vmatpush2.bf16.msra.mxu0 0
    %1696 = vmatprep.subr.bf16.mxu0 0
    %1697 = vmatpush2.bf16.msra.mxu0 0
    %1698 = vmatprep.subr.bf16.mxu0 0
    %1699 = vmatpush2.bf16.msra.mxu0 0
    %1700 = vmatprep.subr.bf16.mxu0 0
    %1701 = vmatpush2.bf16.msra.mxu0 0
    %1702 = vmatprep.subr.bf16.mxu0 0
    %1703 = vmatpush2.bf16.msra.mxu0 0
    %1704 = vmatprep.subr.bf16.mxu0 0
    %1705 = vmatpush2.bf16.msra.mxu0 0
    %1706 = vmatprep.mubr.bf16.mxu0 0
    %1707 = vmatmul.mubr.bf16.gmra.mxu0 %v1472
    %v1708 = vpop.f32.mrf.mxu0
    %v1709 = vadd.f32 0.0, %v1708
    %v1710 = vpop.f32.mrf.mxu0
    %v1711 = vadd.f32 0.0, %v1710
    %v1712 = vpop.f32.mrf.mxu0
    %v1713 = vpop.f32.mrf.mxu0
    %1714 = vdwg.mxu0
    %1715 = vmatprep.subr.bf16.mxu0 %v1641
    %1716 = vmatpush1.bf16.msra.mxu0 %v1640
    %1717 = vmatprep.subr.bf16.mxu0 %v1637
    %1718 = vmatpush1.bf16.msra.mxu0 %v1636
    %1719 = vmatprep.subr.bf16.mxu0 %v1633
    %1720 = vmatpush1.bf16.msra.mxu0 %v1632
    %1721 = vmatprep.subr.bf16.mxu0 %v1629
    %1722 = vmatpush1.bf16.msra.mxu0 %v1628
    %1723 = vmatprep.subr.bf16.mxu0 %v1625
    %1724 = vmatpush1.bf16.msra.mxu0 %v1624
    %1725 = vmatprep.subr.bf16.mxu0 %v1621
    %1726 = vmatpush1.bf16.msra.mxu0 %v1620
    %1727 = vmatprep.subr.bf16.mxu0 %v1617
    %1728 = vmatpush1.bf16.msra.mxu0 %v1616
    %1729 = vmatprep.subr.bf16.mxu0 %v1613
    %1730 = vmatpush1.bf16.msra.mxu0 %v1612
    %1731 = vmatprep.subr.bf16.mxu0 0
    %1732 = vmatpush2.bf16.msra.mxu0 0
    %1733 = vmatprep.subr.bf16.mxu0 0
    %1734 = vmatpush2.bf16.msra.mxu0 0
    %1735 = vmatprep.subr.bf16.mxu0 0
    %1736 = vmatpush2.bf16.msra.mxu0 0
    %1737 = vmatprep.subr.bf16.mxu0 0
    %1738 = vmatpush2.bf16.msra.mxu0 0
    %1739 = vmatprep.subr.bf16.mxu0 0
    %1740 = vmatpush2.bf16.msra.mxu0 0
    %1741 = vmatprep.subr.bf16.mxu0 0
    %1742 = vmatpush2.bf16.msra.mxu0 0
    %1743 = vmatprep.subr.bf16.mxu0 0
    %1744 = vmatpush2.bf16.msra.mxu0 0
    %1745 = vmatprep.subr.bf16.mxu0 0
    %1746 = vmatpush2.bf16.msra.mxu0 0
    %1747 = vmatprep.mubr.bf16.mxu0 0
    %1748 = vmatmul.mubr.bf16.gmra.mxu0 %v1472
    %v1749 = vpop.f32.mrf.mxu0
    %v1750 = vadd.f32 0.0, %v1749
    %v1751 = vpop.f32.mrf.mxu0
    %v1752 = vadd.f32 0.0, %v1751
    %v1753 = vpop.f32.mrf.mxu0
    %v1754 = vpop.f32.mrf.mxu0
    %1755 = vdwg.mxu0
    %v1756 = vadd.f32 %v1478, %v1709
    %v1757 = vadd.f32 %v1479, %v1711
    %v1758 = vadd.f32 %v1480, %v1750
    %v1759 = vadd.f32 %v1481, %v1752
    %v1760 = vxor.u32 %v1756, 2147483648
    %v1761 = vmul.f32 %v1760, 1.442695
    %v1762 = vpow.pop %v1761
    %v1763 = vadd.f32 %v1762, 1.0
    %v1764 = vrcp.pop %v1763
    %v1765 = vmul.f32 1.0, %v1764
    %v1766 = vxor.u32 %v1757, 2147483648
    %v1767 = vmul.f32 %v1766, 1.442695
    %v1768 = vpow.pop %v1767
    %v1769 = vadd.f32 %v1768, 1.0
    %v1770 = vrcp.pop %v1769
    %v1771 = vmul.f32 1.0, %v1770
    %v1772 = vtanh.pop %v1758
    %v1773 = vxor.u32 %v1759, 2147483648
    %v1774 = vmul.f32 %v1773, 1.442695
    %v1775 = vpow.pop %v1774
    %v1776 = vadd.f32 %v1775, 1.0
    %v1777 = vrcp.pop %v1776
    %v1778 = vmul.f32 1.0, %v1777
    %v1779 = vmul.f32 %v1771, %v1469
    %v1780 = vmul.f32 %v1765, %v1772
    %v1781 = vadd.f32 %v1779, %v1780
    %v1782 = vtanh.pop %v1781
    %v1783 = vmul.f32 %v1778, %v1782
    %v1784 = vpack.c.bf16 %v1783, %v1783
    %s1785 = scalar_lea.vmem [#allocation3], 12
    %1786 = vst [vmem:[%s1785] sm:$0xf] %v1784
    %s1787 = smul.u32 4, 4
    %s1788 = smul.addr %s1787, 8
    %s1789 = scalar_lea.vmem [#allocation2], %s1788
    %v1790 = vld [vmem:[%s1789] sm:$0xff]
    %v1791 = vld [vmem:[%s1789 + $0x8] sm:$0xff]
    %v1792 = vld [vmem:[%s1789 + $0x10] sm:$0xff]
    %v1793 = vld [vmem:[%s1789 + $0x18] sm:$0xff]
    %v1794 = vld [vmem:[#allocation9] sm:$0xff]
    %v1795 = vld [vmem:[#allocation9 + $0x8] sm:$0xff]
    %v1796 = vld [vmem:[#allocation9 + $0x10] sm:$0xff]
    %v1797 = vld [vmem:[#allocation9 + $0x18] sm:$0xff]
    %v1798 = vld [vmem:[#allocation9 + $0x20] sm:$0xff]
    %v1799 = vld [vmem:[#allocation9 + $0x28] sm:$0xff]
    %v1800 = vld [vmem:[#allocation9 + $0x30] sm:$0xff]
    %v1801 = vld [vmem:[#allocation9 + $0x38] sm:$0xff]
    %v1802 = vld [vmem:[#allocation9 + $0x40] sm:$0xff]
    %v1803 = vld [vmem:[#allocation9 + $0x48] sm:$0xff]
    %v1804 = vld [vmem:[#allocation9 + $0x50] sm:$0xff]
    %v1805 = vld [vmem:[#allocation9 + $0x58] sm:$0xff]
    %v1806 = vld [vmem:[#allocation9 + $0x60] sm:$0xff]
    %v1807 = vld [vmem:[#allocation9 + $0x68] sm:$0xff]
    %v1808 = vld [vmem:[#allocation9 + $0x70] sm:$0xff]
    %v1809 = vld [vmem:[#allocation9 + $0x78] sm:$0xff]
    %v1810 = vld [vmem:[#allocation9 + $0x80] sm:$0xff]
    %v1811 = vld [vmem:[#allocation9 + $0x88] sm:$0xff]
    %v1812 = vld [vmem:[#allocation9 + $0x90] sm:$0xff]
    %v1813 = vld [vmem:[#allocation9 + $0x98] sm:$0xff]
    %v1814 = vld [vmem:[#allocation9 + $0xa0] sm:$0xff]
    %v1815 = vld [vmem:[#allocation9 + $0xa8] sm:$0xff]
    %v1816 = vld [vmem:[#allocation9 + $0xb0] sm:$0xff]
    %v1817 = vld [vmem:[#allocation9 + $0xb8] sm:$0xff]
    %v1818 = vld [vmem:[#allocation9 + $0xc0] sm:$0xff]
    %v1819 = vld [vmem:[#allocation9 + $0xc8] sm:$0xff]
    %v1820 = vld [vmem:[#allocation9 + $0xd0] sm:$0xff]
    %v1821 = vld [vmem:[#allocation9 + $0xd8] sm:$0xff]
    %v1822 = vld [vmem:[#allocation9 + $0xe0] sm:$0xff]
    %v1823 = vld [vmem:[#allocation9 + $0xe8] sm:$0xff]
    %v1824 = vld [vmem:[#allocation9 + $0xf0] sm:$0xff]
    %v1825 = vld [vmem:[#allocation9 + $0xf8] sm:$0xff]
    %v1858 = vunpack.c.l.b16 %v1794
    %v1859 = vunpack.c.h.b16 %v1794
    %v1860 = vunpack.c.l.b16 %v1795
    %v1861 = vunpack.c.h.b16 %v1795
    %v1862 = vunpack.c.l.b16 %v1796
    %v1863 = vunpack.c.h.b16 %v1796
    %v1864 = vunpack.c.l.b16 %v1797
    %v1865 = vunpack.c.h.b16 %v1797
    %v1866 = vunpack.c.l.b16 %v1798
    %v1867 = vunpack.c.h.b16 %v1798
    %v1868 = vunpack.c.l.b16 %v1799
    %v1869 = vunpack.c.h.b16 %v1799
    %v1870 = vunpack.c.l.b16 %v1800
    %v1871 = vunpack.c.h.b16 %v1800
    %v1872 = vunpack.c.l.b16 %v1801
    %v1873 = vunpack.c.h.b16 %v1801
    %v1874 = vunpack.c.l.b16 %v1802
    %v1875 = vunpack.c.h.b16 %v1802
    %v1876 = vunpack.c.l.b16 %v1803
    %v1877 = vunpack.c.h.b16 %v1803
    %v1878 = vunpack.c.l.b16 %v1804
    %v1879 = vunpack.c.h.b16 %v1804
    %v1880 = vunpack.c.l.b16 %v1805
    %v1881 = vunpack.c.h.b16 %v1805
    %v1882 = vunpack.c.l.b16 %v1806
    %v1883 = vunpack.c.h.b16 %v1806
    %v1884 = vunpack.c.l.b16 %v1807
    %v1885 = vunpack.c.h.b16 %v1807
    %v1886 = vunpack.c.l.b16 %v1808
    %v1887 = vunpack.c.h.b16 %v1808
    %v1888 = vunpack.c.l.b16 %v1809
    %v1889 = vunpack.c.h.b16 %v1809
    %v1890 = vunpack.c.l.b16 %v1810
    %v1891 = vunpack.c.h.b16 %v1810
    %v1892 = vunpack.c.l.b16 %v1811
    %v1893 = vunpack.c.h.b16 %v1811
    %v1894 = vunpack.c.l.b16 %v1812
    %v1895 = vunpack.c.h.b16 %v1812
    %v1896 = vunpack.c.l.b16 %v1813
    %v1897 = vunpack.c.h.b16 %v1813
    %v1898 = vunpack.c.l.b16 %v1814
    %v1899 = vunpack.c.h.b16 %v1814
    %v1900 = vunpack.c.l.b16 %v1815
    %v1901 = vunpack.c.h.b16 %v1815
    %v1902 = vunpack.c.l.b16 %v1816
    %v1903 = vunpack.c.h.b16 %v1816
    %v1904 = vunpack.c.l.b16 %v1817
    %v1905 = vunpack.c.h.b16 %v1817
    %v1906 = vunpack.c.l.b16 %v1818
    %v1907 = vunpack.c.h.b16 %v1818
    %v1908 = vunpack.c.l.b16 %v1819
    %v1909 = vunpack.c.h.b16 %v1819
    %v1910 = vunpack.c.l.b16 %v1820
    %v1911 = vunpack.c.h.b16 %v1820
    %v1912 = vunpack.c.l.b16 %v1821
    %v1913 = vunpack.c.h.b16 %v1821
    %v1914 = vunpack.c.l.b16 %v1822
    %v1915 = vunpack.c.h.b16 %v1822
    %v1916 = vunpack.c.l.b16 %v1823
    %v1917 = vunpack.c.h.b16 %v1823
    %v1918 = vunpack.c.l.b16 %v1824
    %v1919 = vunpack.c.h.b16 %v1824
    %v1920 = vunpack.c.l.b16 %v1825
    %v1921 = vunpack.c.h.b16 %v1825
    %v1922 = vpack.c.b16 %v1862, %v1858
    %v1923 = vpack.c.b16 %v1863, %v1859
    %v1924 = vpack.c.b16 %v1864, %v1860
    %v1925 = vpack.c.b16 %v1865, %v1861
    %v1926 = vpack.c.b16 %v1870, %v1866
    %v1927 = vpack.c.b16 %v1871, %v1867
    %v1928 = vpack.c.b16 %v1872, %v1868
    %v1929 = vpack.c.b16 %v1873, %v1869
    %v1930 = vpack.c.b16 %v1878, %v1874
    %v1931 = vpack.c.b16 %v1879, %v1875
    %v1932 = vpack.c.b16 %v1880, %v1876
    %v1933 = vpack.c.b16 %v1881, %v1877
    %v1934 = vpack.c.b16 %v1886, %v1882
    %v1935 = vpack.c.b16 %v1887, %v1883
    %v1936 = vpack.c.b16 %v1888, %v1884
    %v1937 = vpack.c.b16 %v1889, %v1885
    %v1938 = vpack.c.b16 %v1894, %v1890
    %v1939 = vpack.c.b16 %v1895, %v1891
    %v1940 = vpack.c.b16 %v1896, %v1892
    %v1941 = vpack.c.b16 %v1897, %v1893
    %v1942 = vpack.c.b16 %v1902, %v1898
    %v1943 = vpack.c.b16 %v1903, %v1899
    %v1944 = vpack.c.b16 %v1904, %v1900
    %v1945 = vpack.c.b16 %v1905, %v1901
    %v1946 = vpack.c.b16 %v1910, %v1906
    %v1947 = vpack.c.b16 %v1911, %v1907
    %v1948 = vpack.c.b16 %v1912, %v1908
    %v1949 = vpack.c.b16 %v1913, %v1909
    %v1950 = vpack.c.b16 %v1918, %v1914
    %v1951 = vpack.c.b16 %v1919, %v1915
    %v1952 = vpack.c.b16 %v1920, %v1916
    %v1953 = vpack.c.b16 %v1921, %v1917
    %1986 = vmatprep.subr.bf16.mxu0 %v1951
    %1987 = vmatpush1.bf16.msra.mxu0 %v1950
    %1988 = vmatprep.subr.bf16.mxu0 %v1947
    %1989 = vmatpush1.bf16.msra.mxu0 %v1946
    %1990 = vmatprep.subr.bf16.mxu0 %v1943
    %1991 = vmatpush1.bf16.msra.mxu0 %v1942
    %1992 = vmatprep.subr.bf16.mxu0 %v1939
    %1993 = vmatpush1.bf16.msra.mxu0 %v1938
    %1994 = vmatprep.subr.bf16.mxu0 %v1935
    %1995 = vmatpush1.bf16.msra.mxu0 %v1934
    %1996 = vmatprep.subr.bf16.mxu0 %v1931
    %1997 = vmatpush1.bf16.msra.mxu0 %v1930
    %1998 = vmatprep.subr.bf16.mxu0 %v1927
    %1999 = vmatpush1.bf16.msra.mxu0 %v1926
    %2000 = vmatprep.subr.bf16.mxu0 %v1923
    %2001 = vmatpush1.bf16.msra.mxu0 %v1922
    %2002 = vmatprep.subr.bf16.mxu0 0
    %2003 = vmatpush2.bf16.msra.mxu0 0
    %2004 = vmatprep.subr.bf16.mxu0 0
    %2005 = vmatpush2.bf16.msra.mxu0 0
    %2006 = vmatprep.subr.bf16.mxu0 0
    %2007 = vmatpush2.bf16.msra.mxu0 0
    %2008 = vmatprep.subr.bf16.mxu0 0
    %2009 = vmatpush2.bf16.msra.mxu0 0
    %2010 = vmatprep.subr.bf16.mxu0 0
    %2011 = vmatpush2.bf16.msra.mxu0 0
    %2012 = vmatprep.subr.bf16.mxu0 0
    %2013 = vmatpush2.bf16.msra.mxu0 0
    %2014 = vmatprep.subr.bf16.mxu0 0
    %2015 = vmatpush2.bf16.msra.mxu0 0
    %2016 = vmatprep.subr.bf16.mxu0 0
    %2017 = vmatpush2.bf16.msra.mxu0 0
    %2018 = vmatprep.mubr.bf16.mxu0 0
    %2019 = vmatmul.mubr.bf16.gmra.mxu0 %v1784
    %v2020 = vpop.f32.mrf.mxu0
    %v2021 = vadd.f32 0.0, %v2020
    %v2022 = vpop.f32.mrf.mxu0
    %v2023 = vadd.f32 0.0, %v2022
    %v2024 = vpop.f32.mrf.mxu0
    %v2025 = vpop.f32.mrf.mxu0
    %2026 = vdwg.mxu0
    %2027 = vmatprep.subr.bf16.mxu0 %v1953
    %2028 = vmatpush1.bf16.msra.mxu0 %v1952
    %2029 = vmatprep.subr.bf16.mxu0 %v1949
    %2030 = vmatpush1.bf16.msra.mxu0 %v1948
    %2031 = vmatprep.subr.bf16.mxu0 %v1945
    %2032 = vmatpush1.bf16.msra.mxu0 %v1944
    %2033 = vmatprep.subr.bf16.mxu0 %v1941
    %2034 = vmatpush1.bf16.msra.mxu0 %v1940
    %2035 = vmatprep.subr.bf16.mxu0 %v1937
    %2036 = vmatpush1.bf16.msra.mxu0 %v1936
    %2037 = vmatprep.subr.bf16.mxu0 %v1933
    %2038 = vmatpush1.bf16.msra.mxu0 %v1932
    %2039 = vmatprep.subr.bf16.mxu0 %v1929
    %2040 = vmatpush1.bf16.msra.mxu0 %v1928
    %2041 = vmatprep.subr.bf16.mxu0 %v1925
    %2042 = vmatpush1.bf16.msra.mxu0 %v1924
    %2043 = vmatprep.subr.bf16.mxu0 0
    %2044 = vmatpush2.bf16.msra.mxu0 0
    %2045 = vmatprep.subr.bf16.mxu0 0
    %2046 = vmatpush2.bf16.msra.mxu0 0
    %2047 = vmatprep.subr.bf16.mxu0 0
    %2048 = vmatpush2.bf16.msra.mxu0 0
    %2049 = vmatprep.subr.bf16.mxu0 0
    %2050 = vmatpush2.bf16.msra.mxu0 0
    %2051 = vmatprep.subr.bf16.mxu0 0
    %2052 = vmatpush2.bf16.msra.mxu0 0
    %2053 = vmatprep.subr.bf16.mxu0 0
    %2054 = vmatpush2.bf16.msra.mxu0 0
    %2055 = vmatprep.subr.bf16.mxu0 0
    %2056 = vmatpush2.bf16.msra.mxu0 0
    %2057 = vmatprep.subr.bf16.mxu0 0
    %2058 = vmatpush2.bf16.msra.mxu0 0
    %2059 = vmatprep.mubr.bf16.mxu0 0
    %2060 = vmatmul.mubr.bf16.gmra.mxu0 %v1784
    %v2061 = vpop.f32.mrf.mxu0
    %v2062 = vadd.f32 0.0, %v2061
    %v2063 = vpop.f32.mrf.mxu0
    %v2064 = vadd.f32 0.0, %v2063
    %v2065 = vpop.f32.mrf.mxu0
    %v2066 = vpop.f32.mrf.mxu0
    %2067 = vdwg.mxu0
    %v2068 = vadd.f32 %v1790, %v2021
    %v2069 = vadd.f32 %v1791, %v2023
    %v2070 = vadd.f32 %v1792, %v2062
    %v2071 = vadd.f32 %v1793, %v2064
    %v2072 = vxor.u32 %v2068, 2147483648
    %v2073 = vmul.f32 %v2072, 1.442695
    %v2074 = vpow.pop %v2073
    %v2075 = vadd.f32 %v2074, 1.0
    %v2076 = vrcp.pop %v2075
    %v2077 = vmul.f32 1.0, %v2076
    %v2078 = vxor.u32 %v2069, 2147483648
    %v2079 = vmul.f32 %v2078, 1.442695
    %v2080 = vpow.pop %v2079
    %v2081 = vadd.f32 %v2080, 1.0
    %v2082 = vrcp.pop %v2081
    %v2083 = vmul.f32 1.0, %v2082
    %v2084 = vtanh.pop %v2070
    %v2085 = vxor.u32 %v2071, 2147483648
    %v2086 = vmul.f32 %v2085, 1.442695
    %v2087 = vpow.pop %v2086
    %v2088 = vadd.f32 %v2087, 1.0
    %v2089 = vrcp.pop %v2088
    %v2090 = vmul.f32 1.0, %v2089
    %v2091 = vmul.f32 %v2083, %v1781
    %v2092 = vmul.f32 %v2077, %v2084
    %v2093 = vadd.f32 %v2091, %v2092
    %v2094 = vtanh.pop %v2093
    %v2095 = vmul.f32 %v2090, %v2094
    %v2096 = vpack.c.bf16 %v2095, %v2095
    %s2097 = scalar_lea.vmem [#allocation3], 16
    %2098 = vst [vmem:[%s2097] sm:$0xf] %v2096
    %s2099 = smul.u32 5, 4
    %s2100 = smul.addr %s2099, 8
    %s2101 = scalar_lea.vmem [#allocation2], %s2100
    %v2102 = vld [vmem:[%s2101] sm:$0xff]
    %v2103 = vld [vmem:[%s2101 + $0x8] sm:$0xff]
    %v2104 = vld [vmem:[%s2101 + $0x10] sm:$0xff]
    %v2105 = vld [vmem:[%s2101 + $0x18] sm:$0xff]
    %v2106 = vld [vmem:[#allocation9] sm:$0xff]
    %v2107 = vld [vmem:[#allocation9 + $0x8] sm:$0xff]
    %v2108 = vld [vmem:[#allocation9 + $0x10] sm:$0xff]
    %v2109 = vld [vmem:[#allocation9 + $0x18] sm:$0xff]
    %v2110 = vld [vmem:[#allocation9 + $0x20] sm:$0xff]
    %v2111 = vld [vmem:[#allocation9 + $0x28] sm:$0xff]
    %v2112 = vld [vmem:[#allocation9 + $0x30] sm:$0xff]
    %v2113 = vld [vmem:[#allocation9 + $0x38] sm:$0xff]
    %v2114 = vld [vmem:[#allocation9 + $0x40] sm:$0xff]
    %v2115 = vld [vmem:[#allocation9 + $0x48] sm:$0xff]
    %v2116 = vld [vmem:[#allocation9 + $0x50] sm:$0xff]
    %v2117 = vld [vmem:[#allocation9 + $0x58] sm:$0xff]
    %v2118 = vld [vmem:[#allocation9 + $0x60] sm:$0xff]
    %v2119 = vld [vmem:[#allocation9 + $0x68] sm:$0xff]
    %v2120 = vld [vmem:[#allocation9 + $0x70] sm:$0xff]
    %v2121 = vld [vmem:[#allocation9 + $0x78] sm:$0xff]
    %v2122 = vld [vmem:[#allocation9 + $0x80] sm:$0xff]
    %v2123 = vld [vmem:[#allocation9 + $0x88] sm:$0xff]
    %v2124 = vld [vmem:[#allocation9 + $0x90] sm:$0xff]
    %v2125 = vld [vmem:[#allocation9 + $0x98] sm:$0xff]
    %v2126 = vld [vmem:[#allocation9 + $0xa0] sm:$0xff]
    %v2127 = vld [vmem:[#allocation9 + $0xa8] sm:$0xff]
    %v2128 = vld [vmem:[#allocation9 + $0xb0] sm:$0xff]
    %v2129 = vld [vmem:[#allocation9 + $0xb8] sm:$0xff]
    %v2130 = vld [vmem:[#allocation9 + $0xc0] sm:$0xff]
    %v2131 = vld [vmem:[#allocation9 + $0xc8] sm:$0xff]
    %v2132 = vld [vmem:[#allocation9 + $0xd0] sm:$0xff]
    %v2133 = vld [vmem:[#allocation9 + $0xd8] sm:$0xff]
    %v2134 = vld [vmem:[#allocation9 + $0xe0] sm:$0xff]
    %v2135 = vld [vmem:[#allocation9 + $0xe8] sm:$0xff]
    %v2136 = vld [vmem:[#allocation9 + $0xf0] sm:$0xff]
    %v2137 = vld [vmem:[#allocation9 + $0xf8] sm:$0xff]
    %v2170 = vunpack.c.l.b16 %v2106
    %v2171 = vunpack.c.h.b16 %v2106
    %v2172 = vunpack.c.l.b16 %v2107
    %v2173 = vunpack.c.h.b16 %v2107
    %v2174 = vunpack.c.l.b16 %v2108
    %v2175 = vunpack.c.h.b16 %v2108
    %v2176 = vunpack.c.l.b16 %v2109
    %v2177 = vunpack.c.h.b16 %v2109
    %v2178 = vunpack.c.l.b16 %v2110
    %v2179 = vunpack.c.h.b16 %v2110
    %v2180 = vunpack.c.l.b16 %v2111
    %v2181 = vunpack.c.h.b16 %v2111
    %v2182 = vunpack.c.l.b16 %v2112
    %v2183 = vunpack.c.h.b16 %v2112
    %v2184 = vunpack.c.l.b16 %v2113
    %v2185 = vunpack.c.h.b16 %v2113
    %v2186 = vunpack.c.l.b16 %v2114
    %v2187 = vunpack.c.h.b16 %v2114
    %v2188 = vunpack.c.l.b16 %v2115
    %v2189 = vunpack.c.h.b16 %v2115
    %v2190 = vunpack.c.l.b16 %v2116
    %v2191 = vunpack.c.h.b16 %v2116
    %v2192 = vunpack.c.l.b16 %v2117
    %v2193 = vunpack.c.h.b16 %v2117
    %v2194 = vunpack.c.l.b16 %v2118
    %v2195 = vunpack.c.h.b16 %v2118
    %v2196 = vunpack.c.l.b16 %v2119
    %v2197 = vunpack.c.h.b16 %v2119
    %v2198 = vunpack.c.l.b16 %v2120
    %v2199 = vunpack.c.h.b16 %v2120
    %v2200 = vunpack.c.l.b16 %v2121
    %v2201 = vunpack.c.h.b16 %v2121
    %v2202 = vunpack.c.l.b16 %v2122
    %v2203 = vunpack.c.h.b16 %v2122
    %v2204 = vunpack.c.l.b16 %v2123
    %v2205 = vunpack.c.h.b16 %v2123
    %v2206 = vunpack.c.l.b16 %v2124
    %v2207 = vunpack.c.h.b16 %v2124
    %v2208 = vunpack.c.l.b16 %v2125
    %v2209 = vunpack.c.h.b16 %v2125
    %v2210 = vunpack.c.l.b16 %v2126
    %v2211 = vunpack.c.h.b16 %v2126
    %v2212 = vunpack.c.l.b16 %v2127
    %v2213 = vunpack.c.h.b16 %v2127
    %v2214 = vunpack.c.l.b16 %v2128
    %v2215 = vunpack.c.h.b16 %v2128
    %v2216 = vunpack.c.l.b16 %v2129
    %v2217 = vunpack.c.h.b16 %v2129
    %v2218 = vunpack.c.l.b16 %v2130
    %v2219 = vunpack.c.h.b16 %v2130
    %v2220 = vunpack.c.l.b16 %v2131
    %v2221 = vunpack.c.h.b16 %v2131
    %v2222 = vunpack.c.l.b16 %v2132
    %v2223 = vunpack.c.h.b16 %v2132
    %v2224 = vunpack.c.l.b16 %v2133
    %v2225 = vunpack.c.h.b16 %v2133
    %v2226 = vunpack.c.l.b16 %v2134
    %v2227 = vunpack.c.h.b16 %v2134
    %v2228 = vunpack.c.l.b16 %v2135
    %v2229 = vunpack.c.h.b16 %v2135
    %v2230 = vunpack.c.l.b16 %v2136
    %v2231 = vunpack.c.h.b16 %v2136
    %v2232 = vunpack.c.l.b16 %v2137
    %v2233 = vunpack.c.h.b16 %v2137
    %v2234 = vpack.c.b16 %v2174, %v2170
    %v2235 = vpack.c.b16 %v2175, %v2171
    %v2236 = vpack.c.b16 %v2176, %v2172
    %v2237 = vpack.c.b16 %v2177, %v2173
    %v2238 = vpack.c.b16 %v2182, %v2178
    %v2239 = vpack.c.b16 %v2183, %v2179
    %v2240 = vpack.c.b16 %v2184, %v2180
    %v2241 = vpack.c.b16 %v2185, %v2181
    %v2242 = vpack.c.b16 %v2190, %v2186
    %v2243 = vpack.c.b16 %v2191, %v2187
    %v2244 = vpack.c.b16 %v2192, %v2188
    %v2245 = vpack.c.b16 %v2193, %v2189
    %v2246 = vpack.c.b16 %v2198, %v2194
    %v2247 = vpack.c.b16 %v2199, %v2195
    %v2248 = vpack.c.b16 %v2200, %v2196
    %v2249 = vpack.c.b16 %v2201, %v2197
    %v2250 = vpack.c.b16 %v2206, %v2202
    %v2251 = vpack.c.b16 %v2207, %v2203
    %v2252 = vpack.c.b16 %v2208, %v2204
    %v2253 = vpack.c.b16 %v2209, %v2205
    %v2254 = vpack.c.b16 %v2214, %v2210
    %v2255 = vpack.c.b16 %v2215, %v2211
    %v2256 = vpack.c.b16 %v2216, %v2212
    %v2257 = vpack.c.b16 %v2217, %v2213
    %v2258 = vpack.c.b16 %v2222, %v2218
    %v2259 = vpack.c.b16 %v2223, %v2219
    %v2260 = vpack.c.b16 %v2224, %v2220
    %v2261 = vpack.c.b16 %v2225, %v2221
    %v2262 = vpack.c.b16 %v2230, %v2226
    %v2263 = vpack.c.b16 %v2231, %v2227
    %v2264 = vpack.c.b16 %v2232, %v2228
    %v2265 = vpack.c.b16 %v2233, %v2229
    %2298 = vmatprep.subr.bf16.mxu0 %v2263
    %2299 = vmatpush1.bf16.msra.mxu0 %v2262
    %2300 = vmatprep.subr.bf16.mxu0 %v2259
    %2301 = vmatpush1.bf16.msra.mxu0 %v2258
    %2302 = vmatprep.subr.bf16.mxu0 %v2255
    %2303 = vmatpush1.bf16.msra.mxu0 %v2254
    %2304 = vmatprep.subr.bf16.mxu0 %v2251
    %2305 = vmatpush1.bf16.msra.mxu0 %v2250
    %2306 = vmatprep.subr.bf16.mxu0 %v2247
    %2307 = vmatpush1.bf16.msra.mxu0 %v2246
    %2308 = vmatprep.subr.bf16.mxu0 %v2243
    %2309 = vmatpush1.bf16.msra.mxu0 %v2242
    %2310 = vmatprep.subr.bf16.mxu0 %v2239
    %2311 = vmatpush1.bf16.msra.mxu0 %v2238
    %2312 = vmatprep.subr.bf16.mxu0 %v2235
    %2313 = vmatpush1.bf16.msra.mxu0 %v2234
    %2314 = vmatprep.subr.bf16.mxu0 0
    %2315 = vmatpush2.bf16.msra.mxu0 0
    %2316 = vmatprep.subr.bf16.mxu0 0
    %2317 = vmatpush2.bf16.msra.mxu0 0
    %2318 = vmatprep.subr.bf16.mxu0 0
    %2319 = vmatpush2.bf16.msra.mxu0 0
    %2320 = vmatprep.subr.bf16.mxu0 0
    %2321 = vmatpush2.bf16.msra.mxu0 0
    %2322 = vmatprep.subr.bf16.mxu0 0
    %2323 = vmatpush2.bf16.msra.mxu0 0
    %2324 = vmatprep.subr.bf16.mxu0 0
    %2325 = vmatpush2.bf16.msra.mxu0 0
    %2326 = vmatprep.subr.bf16.mxu0 0
    %2327 = vmatpush2.bf16.msra.mxu0 0
    %2328 = vmatprep.subr.bf16.mxu0 0
    %2329 = vmatpush2.bf16.msra.mxu0 0
    %2330 = vmatprep.mubr.bf16.mxu0 0
    %2331 = vmatmul.mubr.bf16.gmra.mxu0 %v2096
    %v2332 = vpop.f32.mrf.mxu0
    %v2333 = vadd.f32 0.0, %v2332
    %v2334 = vpop.f32.mrf.mxu0
    %v2335 = vadd.f32 0.0, %v2334
    %v2336 = vpop.f32.mrf.mxu0
    %v2337 = vpop.f32.mrf.mxu0
    %2338 = vdwg.mxu0
    %2339 = vmatprep.subr.bf16.mxu0 %v2265
    %2340 = vmatpush1.bf16.msra.mxu0 %v2264
    %2341 = vmatprep.subr.bf16.mxu0 %v2261
    %2342 = vmatpush1.bf16.msra.mxu0 %v2260
    %2343 = vmatprep.subr.bf16.mxu0 %v2257
    %2344 = vmatpush1.bf16.msra.mxu0 %v2256
    %2345 = vmatprep.subr.bf16.mxu0 %v2253
    %2346 = vmatpush1.bf16.msra.mxu0 %v2252
    %2347 = vmatprep.subr.bf16.mxu0 %v2249
    %2348 = vmatpush1.bf16.msra.mxu0 %v2248
    %2349 = vmatprep.subr.bf16.mxu0 %v2245
    %2350 = vmatpush1.bf16.msra.mxu0 %v2244
    %2351 = vmatprep.subr.bf16.mxu0 %v2241
    %2352 = vmatpush1.bf16.msra.mxu0 %v2240
    %2353 = vmatprep.subr.bf16.mxu0 %v2237
    %2354 = vmatpush1.bf16.msra.mxu0 %v2236
    %2355 = vmatprep.subr.bf16.mxu0 0
    %2356 = vmatpush2.bf16.msra.mxu0 0
    %2357 = vmatprep.subr.bf16.mxu0 0
    %2358 = vmatpush2.bf16.msra.mxu0 0
    %2359 = vmatprep.subr.bf16.mxu0 0
    %2360 = vmatpush2.bf16.msra.mxu0 0
    %2361 = vmatprep.subr.bf16.mxu0 0
    %2362 = vmatpush2.bf16.msra.mxu0 0
    %2363 = vmatprep.subr.bf16.mxu0 0
    %2364 = vmatpush2.bf16.msra.mxu0 0
    %2365 = vmatprep.subr.bf16.mxu0 0
    %2366 = vmatpush2.bf16.msra.mxu0 0
    %2367 = vmatprep.subr.bf16.mxu0 0
    %2368 = vmatpush2.bf16.msra.mxu0 0
    %2369 = vmatprep.subr.bf16.mxu0 0
    %2370 = vmatpush2.bf16.msra.mxu0 0
    %2371 = vmatprep.mubr.bf16.mxu0 0
    %2372 = vmatmul.mubr.bf16.gmra.mxu0 %v2096
    %v2373 = vpop.f32.mrf.mxu0
    %v2374 = vadd.f32 0.0, %v2373
    %v2375 = vpop.f32.mrf.mxu0
    %v2376 = vadd.f32 0.0, %v2375
    %v2377 = vpop.f32.mrf.mxu0
    %v2378 = vpop.f32.mrf.mxu0
    %2379 = vdwg.mxu0
    %v2380 = vadd.f32 %v2102, %v2333
    %v2381 = vadd.f32 %v2103, %v2335
    %v2382 = vadd.f32 %v2104, %v2374
    %v2383 = vadd.f32 %v2105, %v2376
    %v2384 = vxor.u32 %v2380, 2147483648
    %v2385 = vmul.f32 %v2384, 1.442695
    %v2386 = vpow.pop %v2385
    %v2387 = vadd.f32 %v2386, 1.0
    %v2388 = vrcp.pop %v2387
    %v2389 = vmul.f32 1.0, %v2388
    %v2390 = vxor.u32 %v2381, 2147483648
    %v2391 = vmul.f32 %v2390, 1.442695
    %v2392 = vpow.pop %v2391
    %v2393 = vadd.f32 %v2392, 1.0
    %v2394 = vrcp.pop %v2393
    %v2395 = vmul.f32 1.0, %v2394
    %v2396 = vtanh.pop %v2382
    %v2397 = vxor.u32 %v2383, 2147483648
    %v2398 = vmul.f32 %v2397, 1.442695
    %v2399 = vpow.pop %v2398
    %v2400 = vadd.f32 %v2399, 1.0
    %v2401 = vrcp.pop %v2400
    %v2402 = vmul.f32 1.0, %v2401
    %v2403 = vmul.f32 %v2395, %v2093
    %v2404 = vmul.f32 %v2389, %v2396
    %v2405 = vadd.f32 %v2403, %v2404
    %v2406 = vtanh.pop %v2405
    %v2407 = vmul.f32 %v2402, %v2406
    %v2408 = vpack.c.bf16 %v2407, %v2407
    %s2409 = scalar_lea.vmem [#allocation3], 20
    %2410 = vst [vmem:[%s2409] sm:$0xf] %v2408
    %s2411 = smul.u32 6, 4
    %s2412 = smul.addr %s2411, 8
    %s2413 = scalar_lea.vmem [#allocation2], %s2412
    %v2414 = vld [vmem:[%s2413] sm:$0xff]
    %v2415 = vld [vmem:[%s2413 + $0x8] sm:$0xff]
    %v2416 = vld [vmem:[%s2413 + $0x10] sm:$0xff]
    %v2417 = vld [vmem:[%s2413 + $0x18] sm:$0xff]
    %v2418 = vld [vmem:[#allocation9] sm:$0xff]
    %v2419 = vld [vmem:[#allocation9 + $0x8] sm:$0xff]
    %v2420 = vld [vmem:[#allocation9 + $0x10] sm:$0xff]
    %v2421 = vld [vmem:[#allocation9 + $0x18] sm:$0xff]
    %v2422 = vld [vmem:[#allocation9 + $0x20] sm:$0xff]
    %v2423 = vld [vmem:[#allocation9 + $0x28] sm:$0xff]
    %v2424 = vld [vmem:[#allocation9 + $0x30] sm:$0xff]
    %v2425 = vld [vmem:[#allocation9 + $0x38] sm:$0xff]
    %v2426 = vld [vmem:[#allocation9 + $0x40] sm:$0xff]
    %v2427 = vld [vmem:[#allocation9 + $0x48] sm:$0xff]
    %v2428 = vld [vmem:[#allocation9 + $0x50] sm:$0xff]
    %v2429 = vld [vmem:[#allocation9 + $0x58] sm:$0xff]
    %v2430 = vld [vmem:[#allocation9 + $0x60] sm:$0xff]
    %v2431 = vld [vmem:[#allocation9 + $0x68] sm:$0xff]
    %v2432 = vld [vmem:[#allocation9 + $0x70] sm:$0xff]
    %v2433 = vld [vmem:[#allocation9 + $0x78] sm:$0xff]
    %v2434 = vld [vmem:[#allocation9 + $0x80] sm:$0xff]
    %v2435 = vld [vmem:[#allocation9 + $0x88] sm:$0xff]
    %v2436 = vld [vmem:[#allocation9 + $0x90] sm:$0xff]
    %v2437 = vld [vmem:[#allocation9 + $0x98] sm:$0xff]
    %v2438 = vld [vmem:[#allocation9 + $0xa0] sm:$0xff]
    %v2439 = vld [vmem:[#allocation9 + $0xa8] sm:$0xff]
    %v2440 = vld [vmem:[#allocation9 + $0xb0] sm:$0xff]
    %v2441 = vld [vmem:[#allocation9 + $0xb8] sm:$0xff]
    %v2442 = vld [vmem:[#allocation9 + $0xc0] sm:$0xff]
    %v2443 = vld [vmem:[#allocation9 + $0xc8] sm:$0xff]
    %v2444 = vld [vmem:[#allocation9 + $0xd0] sm:$0xff]
    %v2445 = vld [vmem:[#allocation9 + $0xd8] sm:$0xff]
    %v2446 = vld [vmem:[#allocation9 + $0xe0] sm:$0xff]
    %v2447 = vld [vmem:[#allocation9 + $0xe8] sm:$0xff]
    %v2448 = vld [vmem:[#allocation9 + $0xf0] sm:$0xff]
    %v2449 = vld [vmem:[#allocation9 + $0xf8] sm:$0xff]
    %v2482 = vunpack.c.l.b16 %v2418
    %v2483 = vunpack.c.h.b16 %v2418
    %v2484 = vunpack.c.l.b16 %v2419
    %v2485 = vunpack.c.h.b16 %v2419
    %v2486 = vunpack.c.l.b16 %v2420
    %v2487 = vunpack.c.h.b16 %v2420
    %v2488 = vunpack.c.l.b16 %v2421
    %v2489 = vunpack.c.h.b16 %v2421
    %v2490 = vunpack.c.l.b16 %v2422
    %v2491 = vunpack.c.h.b16 %v2422
    %v2492 = vunpack.c.l.b16 %v2423
    %v2493 = vunpack.c.h.b16 %v2423
    %v2494 = vunpack.c.l.b16 %v2424
    %v2495 = vunpack.c.h.b16 %v2424
    %v2496 = vunpack.c.l.b16 %v2425
    %v2497 = vunpack.c.h.b16 %v2425
    %v2498 = vunpack.c.l.b16 %v2426
    %v2499 = vunpack.c.h.b16 %v2426
    %v2500 = vunpack.c.l.b16 %v2427
    %v2501 = vunpack.c.h.b16 %v2427
    %v2502 = vunpack.c.l.b16 %v2428
    %v2503 = vunpack.c.h.b16 %v2428
    %v2504 = vunpack.c.l.b16 %v2429
    %v2505 = vunpack.c.h.b16 %v2429
    %v2506 = vunpack.c.l.b16 %v2430
    %v2507 = vunpack.c.h.b16 %v2430
    %v2508 = vunpack.c.l.b16 %v2431
    %v2509 = vunpack.c.h.b16 %v2431
    %v2510 = vunpack.c.l.b16 %v2432
    %v2511 = vunpack.c.h.b16 %v2432
    %v2512 = vunpack.c.l.b16 %v2433
    %v2513 = vunpack.c.h.b16 %v2433
    %v2514 = vunpack.c.l.b16 %v2434
    %v2515 = vunpack.c.h.b16 %v2434
    %v2516 = vunpack.c.l.b16 %v2435
    %v2517 = vunpack.c.h.b16 %v2435
    %v2518 = vunpack.c.l.b16 %v2436
    %v2519 = vunpack.c.h.b16 %v2436
    %v2520 = vunpack.c.l.b16 %v2437
    %v2521 = vunpack.c.h.b16 %v2437
    %v2522 = vunpack.c.l.b16 %v2438
    %v2523 = vunpack.c.h.b16 %v2438
    %v2524 = vunpack.c.l.b16 %v2439
    %v2525 = vunpack.c.h.b16 %v2439
    %v2526 = vunpack.c.l.b16 %v2440
    %v2527 = vunpack.c.h.b16 %v2440
    %v2528 = vunpack.c.l.b16 %v2441
    %v2529 = vunpack.c.h.b16 %v2441
    %v2530 = vunpack.c.l.b16 %v2442
    %v2531 = vunpack.c.h.b16 %v2442
    %v2532 = vunpack.c.l.b16 %v2443
    %v2533 = vunpack.c.h.b16 %v2443
    %v2534 = vunpack.c.l.b16 %v2444
    %v2535 = vunpack.c.h.b16 %v2444
    %v2536 = vunpack.c.l.b16 %v2445
    %v2537 = vunpack.c.h.b16 %v2445
    %v2538 = vunpack.c.l.b16 %v2446
    %v2539 = vunpack.c.h.b16 %v2446
    %v2540 = vunpack.c.l.b16 %v2447
    %v2541 = vunpack.c.h.b16 %v2447
    %v2542 = vunpack.c.l.b16 %v2448
    %v2543 = vunpack.c.h.b16 %v2448
    %v2544 = vunpack.c.l.b16 %v2449
    %v2545 = vunpack.c.h.b16 %v2449
    %v2546 = vpack.c.b16 %v2486, %v2482
    %v2547 = vpack.c.b16 %v2487, %v2483
    %v2548 = vpack.c.b16 %v2488, %v2484
    %v2549 = vpack.c.b16 %v2489, %v2485
    %v2550 = vpack.c.b16 %v2494, %v2490
    %v2551 = vpack.c.b16 %v2495, %v2491
    %v2552 = vpack.c.b16 %v2496, %v2492
    %v2553 = vpack.c.b16 %v2497, %v2493
    %v2554 = vpack.c.b16 %v2502, %v2498
    %v2555 = vpack.c.b16 %v2503, %v2499
    %v2556 = vpack.c.b16 %v2504, %v2500
    %v2557 = vpack.c.b16 %v2505, %v2501
    %v2558 = vpack.c.b16 %v2510, %v2506
    %v2559 = vpack.c.b16 %v2511, %v2507
    %v2560 = vpack.c.b16 %v2512, %v2508
    %v2561 = vpack.c.b16 %v2513, %v2509
    %v2562 = vpack.c.b16 %v2518, %v2514
    %v2563 = vpack.c.b16 %v2519, %v2515
    %v2564 = vpack.c.b16 %v2520, %v2516
    %v2565 = vpack.c.b16 %v2521, %v2517
    %v2566 = vpack.c.b16 %v2526, %v2522
    %v2567 = vpack.c.b16 %v2527, %v2523
    %v2568 = vpack.c.b16 %v2528, %v2524
    %v2569 = vpack.c.b16 %v2529, %v2525
    %v2570 = vpack.c.b16 %v2534, %v2530
    %v2571 = vpack.c.b16 %v2535, %v2531
    %v2572 = vpack.c.b16 %v2536, %v2532
    %v2573 = vpack.c.b16 %v2537, %v2533
    %v2574 = vpack.c.b16 %v2542, %v2538
    %v2575 = vpack.c.b16 %v2543, %v2539
    %v2576 = vpack.c.b16 %v2544, %v2540
    %v2577 = vpack.c.b16 %v2545, %v2541
    %2610 = vmatprep.subr.bf16.mxu0 %v2575
    %2611 = vmatpush1.bf16.msra.mxu0 %v2574
    %2612 = vmatprep.subr.bf16.mxu0 %v2571
    %2613 = vmatpush1.bf16.msra.mxu0 %v2570
    %2614 = vmatprep.subr.bf16.mxu0 %v2567
    %2615 = vmatpush1.bf16.msra.mxu0 %v2566
    %2616 = vmatprep.subr.bf16.mxu0 %v2563
    %2617 = vmatpush1.bf16.msra.mxu0 %v2562
    %2618 = vmatprep.subr.bf16.mxu0 %v2559
    %2619 = vmatpush1.bf16.msra.mxu0 %v2558
    %2620 = vmatprep.subr.bf16.mxu0 %v2555
    %2621 = vmatpush1.bf16.msra.mxu0 %v2554
    %2622 = vmatprep.subr.bf16.mxu0 %v2551
    %2623 = vmatpush1.bf16.msra.mxu0 %v2550
    %2624 = vmatprep.subr.bf16.mxu0 %v2547
    %2625 = vmatpush1.bf16.msra.mxu0 %v2546
    %2626 = vmatprep.subr.bf16.mxu0 0
    %2627 = vmatpush2.bf16.msra.mxu0 0
    %2628 = vmatprep.subr.bf16.mxu0 0
    %2629 = vmatpush2.bf16.msra.mxu0 0
    %2630 = vmatprep.subr.bf16.mxu0 0
    %2631 = vmatpush2.bf16.msra.mxu0 0
    %2632 = vmatprep.subr.bf16.mxu0 0
    %2633 = vmatpush2.bf16.msra.mxu0 0
    %2634 = vmatprep.subr.bf16.mxu0 0
    %2635 = vmatpush2.bf16.msra.mxu0 0
    %2636 = vmatprep.subr.bf16.mxu0 0
    %2637 = vmatpush2.bf16.msra.mxu0 0
    %2638 = vmatprep.subr.bf16.mxu0 0
    %2639 = vmatpush2.bf16.msra.mxu0 0
    %2640 = vmatprep.subr.bf16.mxu0 0
    %2641 = vmatpush2.bf16.msra.mxu0 0
    %2642 = vmatprep.mubr.bf16.mxu0 0
    %2643 = vmatmul.mubr.bf16.gmra.mxu0 %v2408
    %v2644 = vpop.f32.mrf.mxu0
    %v2645 = vadd.f32 0.0, %v2644
    %v2646 = vpop.f32.mrf.mxu0
    %v2647 = vadd.f32 0.0, %v2646
    %v2648 = vpop.f32.mrf.mxu0
    %v2649 = vpop.f32.mrf.mxu0
    %2650 = vdwg.mxu0
    %2651 = vmatprep.subr.bf16.mxu0 %v2577
    %2652 = vmatpush1.bf16.msra.mxu0 %v2576
    %2653 = vmatprep.subr.bf16.mxu0 %v2573
    %2654 = vmatpush1.bf16.msra.mxu0 %v2572
    %2655 = vmatprep.subr.bf16.mxu0 %v2569
    %2656 = vmatpush1.bf16.msra.mxu0 %v2568
    %2657 = vmatprep.subr.bf16.mxu0 %v2565
    %2658 = vmatpush1.bf16.msra.mxu0 %v2564
    %2659 = vmatprep.subr.bf16.mxu0 %v2561
    %2660 = vmatpush1.bf16.msra.mxu0 %v2560
    %2661 = vmatprep.subr.bf16.mxu0 %v2557
    %2662 = vmatpush1.bf16.msra.mxu0 %v2556
    %2663 = vmatprep.subr.bf16.mxu0 %v2553
    %2664 = vmatpush1.bf16.msra.mxu0 %v2552
    %2665 = vmatprep.subr.bf16.mxu0 %v2549
    %2666 = vmatpush1.bf16.msra.mxu0 %v2548
    %2667 = vmatprep.subr.bf16.mxu0 0
    %2668 = vmatpush2.bf16.msra.mxu0 0
    %2669 = vmatprep.subr.bf16.mxu0 0
    %2670 = vmatpush2.bf16.msra.mxu0 0
    %2671 = vmatprep.subr.bf16.mxu0 0
    %2672 = vmatpush2.bf16.msra.mxu0 0
    %2673 = vmatprep.subr.bf16.mxu0 0
    %2674 = vmatpush2.bf16.msra.mxu0 0
    %2675 = vmatprep.subr.bf16.mxu0 0
    %2676 = vmatpush2.bf16.msra.mxu0 0
    %2677 = vmatprep.subr.bf16.mxu0 0
    %2678 = vmatpush2.bf16.msra.mxu0 0
    %2679 = vmatprep.subr.bf16.mxu0 0
    %2680 = vmatpush2.bf16.msra.mxu0 0
    %2681 = vmatprep.subr.bf16.mxu0 0
    %2682 = vmatpush2.bf16.msra.mxu0 0
    %2683 = vmatprep.mubr.bf16.mxu0 0
    %2684 = vmatmul.mubr.bf16.gmra.mxu0 %v2408
    %v2685 = vpop.f32.mrf.mxu0
    %v2686 = vadd.f32 0.0, %v2685
    %v2687 = vpop.f32.mrf.mxu0
    %v2688 = vadd.f32 0.0, %v2687
    %v2689 = vpop.f32.mrf.mxu0
    %v2690 = vpop.f32.mrf.mxu0
    %2691 = vdwg.mxu0
    %v2692 = vadd.f32 %v2414, %v2645
    %v2693 = vadd.f32 %v2415, %v2647
    %v2694 = vadd.f32 %v2416, %v2686
    %v2695 = vadd.f32 %v2417, %v2688
    %v2696 = vxor.u32 %v2692, 2147483648
    %v2697 = vmul.f32 %v2696, 1.442695
    %v2698 = vpow.pop %v2697
    %v2699 = vadd.f32 %v2698, 1.0
    %v2700 = vrcp.pop %v2699
    %v2701 = vmul.f32 1.0, %v2700
    %v2702 = vxor.u32 %v2693, 2147483648
    %v2703 = vmul.f32 %v2702, 1.442695
    %v2704 = vpow.pop %v2703
    %v2705 = vadd.f32 %v2704, 1.0
    %v2706 = vrcp.pop %v2705
    %v2707 = vmul.f32 1.0, %v2706
    %v2708 = vtanh.pop %v2694
    %v2709 = vxor.u32 %v2695, 2147483648
    %v2710 = vmul.f32 %v2709, 1.442695
    %v2711 = vpow.pop %v2710
    %v2712 = vadd.f32 %v2711, 1.0
    %v2713 = vrcp.pop %v2712
    %v2714 = vmul.f32 1.0, %v2713
    %v2715 = vmul.f32 %v2707, %v2405
    %v2716 = vmul.f32 %v2701, %v2708
    %v2717 = vadd.f32 %v2715, %v2716
    %v2718 = vtanh.pop %v2717
    %v2719 = vmul.f32 %v2714, %v2718
    %v2720 = vpack.c.bf16 %v2719, %v2719
    %s2721 = scalar_lea.vmem [#allocation3], 24
    %2722 = vst [vmem:[%s2721] sm:$0xf] %v2720
    %s2723 = smul.u32 7, 4
    %s2724 = smul.addr %s2723, 8
    %s2725 = scalar_lea.vmem [#allocation2], %s2724
    %v2726 = vld [vmem:[%s2725] sm:$0xff]
    %v2727 = vld [vmem:[%s2725 + $0x8] sm:$0xff]
    %v2728 = vld [vmem:[%s2725 + $0x10] sm:$0xff]
    %v2729 = vld [vmem:[%s2725 + $0x18] sm:$0xff]
    %v2730 = vld [vmem:[#allocation9] sm:$0xff]
    %v2731 = vld [vmem:[#allocation9 + $0x8] sm:$0xff]
    %v2732 = vld [vmem:[#allocation9 + $0x10] sm:$0xff]
    %v2733 = vld [vmem:[#allocation9 + $0x18] sm:$0xff]
    %v2734 = vld [vmem:[#allocation9 + $0x20] sm:$0xff]
    %v2735 = vld [vmem:[#allocation9 + $0x28] sm:$0xff]
    %v2736 = vld [vmem:[#allocation9 + $0x30] sm:$0xff]
    %v2737 = vld [vmem:[#allocation9 + $0x38] sm:$0xff]
    %v2738 = vld [vmem:[#allocation9 + $0x40] sm:$0xff]
    %v2739 = vld [vmem:[#allocation9 + $0x48] sm:$0xff]
    %v2740 = vld [vmem:[#allocation9 + $0x50] sm:$0xff]
    %v2741 = vld [vmem:[#allocation9 + $0x58] sm:$0xff]
    %v2742 = vld [vmem:[#allocation9 + $0x60] sm:$0xff]
    %v2743 = vld [vmem:[#allocation9 + $0x68] sm:$0xff]
    %v2744 = vld [vmem:[#allocation9 + $0x70] sm:$0xff]
    %v2745 = vld [vmem:[#allocation9 + $0x78] sm:$0xff]
    %v2746 = vld [vmem:[#allocation9 + $0x80] sm:$0xff]
    %v2747 = vld [vmem:[#allocation9 + $0x88] sm:$0xff]
    %v2748 = vld [vmem:[#allocation9 + $0x90] sm:$0xff]
    %v2749 = vld [vmem:[#allocation9 + $0x98] sm:$0xff]
    %v2750 = vld [vmem:[#allocation9 + $0xa0] sm:$0xff]
    %v2751 = vld [vmem:[#allocation9 + $0xa8] sm:$0xff]
    %v2752 = vld [vmem:[#allocation9 + $0xb0] sm:$0xff]
    %v2753 = vld [vmem:[#allocation9 + $0xb8] sm:$0xff]
    %v2754 = vld [vmem:[#allocation9 + $0xc0] sm:$0xff]
    %v2755 = vld [vmem:[#allocation9 + $0xc8] sm:$0xff]
    %v2756 = vld [vmem:[#allocation9 + $0xd0] sm:$0xff]
    %v2757 = vld [vmem:[#allocation9 + $0xd8] sm:$0xff]
    %v2758 = vld [vmem:[#allocation9 + $0xe0] sm:$0xff]
    %v2759 = vld [vmem:[#allocation9 + $0xe8] sm:$0xff]
    %v2760 = vld [vmem:[#allocation9 + $0xf0] sm:$0xff]
    %v2761 = vld [vmem:[#allocation9 + $0xf8] sm:$0xff]
    %v2794 = vunpack.c.l.b16 %v2730
    %v2795 = vunpack.c.h.b16 %v2730
    %v2796 = vunpack.c.l.b16 %v2731
    %v2797 = vunpack.c.h.b16 %v2731
    %v2798 = vunpack.c.l.b16 %v2732
    %v2799 = vunpack.c.h.b16 %v2732
    %v2800 = vunpack.c.l.b16 %v2733
    %v2801 = vunpack.c.h.b16 %v2733
    %v2802 = vunpack.c.l.b16 %v2734
    %v2803 = vunpack.c.h.b16 %v2734
    %v2804 = vunpack.c.l.b16 %v2735
    %v2805 = vunpack.c.h.b16 %v2735
    %v2806 = vunpack.c.l.b16 %v2736
    %v2807 = vunpack.c.h.b16 %v2736
    %v2808 = vunpack.c.l.b16 %v2737
    %v2809 = vunpack.c.h.b16 %v2737
    %v2810 = vunpack.c.l.b16 %v2738
    %v2811 = vunpack.c.h.b16 %v2738
    %v2812 = vunpack.c.l.b16 %v2739
    %v2813 = vunpack.c.h.b16 %v2739
    %v2814 = vunpack.c.l.b16 %v2740
    %v2815 = vunpack.c.h.b16 %v2740
    %v2816 = vunpack.c.l.b16 %v2741
    %v2817 = vunpack.c.h.b16 %v2741
    %v2818 = vunpack.c.l.b16 %v2742
    %v2819 = vunpack.c.h.b16 %v2742
    %v2820 = vunpack.c.l.b16 %v2743
    %v2821 = vunpack.c.h.b16 %v2743
    %v2822 = vunpack.c.l.b16 %v2744
    %v2823 = vunpack.c.h.b16 %v2744
    %v2824 = vunpack.c.l.b16 %v2745
    %v2825 = vunpack.c.h.b16 %v2745
    %v2826 = vunpack.c.l.b16 %v2746
    %v2827 = vunpack.c.h.b16 %v2746
    %v2828 = vunpack.c.l.b16 %v2747
    %v2829 = vunpack.c.h.b16 %v2747
    %v2830 = vunpack.c.l.b16 %v2748
    %v2831 = vunpack.c.h.b16 %v2748
    %v2832 = vunpack.c.l.b16 %v2749
    %v2833 = vunpack.c.h.b16 %v2749
    %v2834 = vunpack.c.l.b16 %v2750
    %v2835 = vunpack.c.h.b16 %v2750
    %v2836 = vunpack.c.l.b16 %v2751
    %v2837 = vunpack.c.h.b16 %v2751
    %v2838 = vunpack.c.l.b16 %v2752
    %v2839 = vunpack.c.h.b16 %v2752
    %v2840 = vunpack.c.l.b16 %v2753
    %v2841 = vunpack.c.h.b16 %v2753
    %v2842 = vunpack.c.l.b16 %v2754
    %v2843 = vunpack.c.h.b16 %v2754
    %v2844 = vunpack.c.l.b16 %v2755
    %v2845 = vunpack.c.h.b16 %v2755
    %v2846 = vunpack.c.l.b16 %v2756
    %v2847 = vunpack.c.h.b16 %v2756
    %v2848 = vunpack.c.l.b16 %v2757
    %v2849 = vunpack.c.h.b16 %v2757
    %v2850 = vunpack.c.l.b16 %v2758
    %v2851 = vunpack.c.h.b16 %v2758
    %v2852 = vunpack.c.l.b16 %v2759
    %v2853 = vunpack.c.h.b16 %v2759
    %v2854 = vunpack.c.l.b16 %v2760
    %v2855 = vunpack.c.h.b16 %v2760
    %v2856 = vunpack.c.l.b16 %v2761
    %v2857 = vunpack.c.h.b16 %v2761
    %v2858 = vpack.c.b16 %v2798, %v2794
    %v2859 = vpack.c.b16 %v2799, %v2795
    %v2860 = vpack.c.b16 %v2800, %v2796
    %v2861 = vpack.c.b16 %v2801, %v2797
    %v2862 = vpack.c.b16 %v2806, %v2802
    %v2863 = vpack.c.b16 %v2807, %v2803
    %v2864 = vpack.c.b16 %v2808, %v2804
    %v2865 = vpack.c.b16 %v2809, %v2805
    %v2866 = vpack.c.b16 %v2814, %v2810
    %v2867 = vpack.c.b16 %v2815, %v2811
    %v2868 = vpack.c.b16 %v2816, %v2812
    %v2869 = vpack.c.b16 %v2817, %v2813
    %v2870 = vpack.c.b16 %v2822, %v2818
    %v2871 = vpack.c.b16 %v2823, %v2819
    %v2872 = vpack.c.b16 %v2824, %v2820
    %v2873 = vpack.c.b16 %v2825, %v2821
    %v2874 = vpack.c.b16 %v2830, %v2826
    %v2875 = vpack.c.b16 %v2831, %v2827
    %v2876 = vpack.c.b16 %v2832, %v2828
    %v2877 = vpack.c.b16 %v2833, %v2829
    %v2878 = vpack.c.b16 %v2838, %v2834
    %v2879 = vpack.c.b16 %v2839, %v2835
    %v2880 = vpack.c.b16 %v2840, %v2836
    %v2881 = vpack.c.b16 %v2841, %v2837
    %v2882 = vpack.c.b16 %v2846, %v2842
    %v2883 = vpack.c.b16 %v2847, %v2843
    %v2884 = vpack.c.b16 %v2848, %v2844
    %v2885 = vpack.c.b16 %v2849, %v2845
    %v2886 = vpack.c.b16 %v2854, %v2850
    %v2887 = vpack.c.b16 %v2855, %v2851
    %v2888 = vpack.c.b16 %v2856, %v2852
    %v2889 = vpack.c.b16 %v2857, %v2853
    %2922 = vmatprep.subr.bf16.mxu0 %v2887
    %2923 = vmatpush1.bf16.msra.mxu0 %v2886
    %2924 = vmatprep.subr.bf16.mxu0 %v2883
    %2925 = vmatpush1.bf16.msra.mxu0 %v2882
    %2926 = vmatprep.subr.bf16.mxu0 %v2879
    %2927 = vmatpush1.bf16.msra.mxu0 %v2878
    %2928 = vmatprep.subr.bf16.mxu0 %v2875
    %2929 = vmatpush1.bf16.msra.mxu0 %v2874
    %2930 = vmatprep.subr.bf16.mxu0 %v2871
    %2931 = vmatpush1.bf16.msra.mxu0 %v2870
    %2932 = vmatprep.subr.bf16.mxu0 %v2867
    %2933 = vmatpush1.bf16.msra.mxu0 %v2866
    %2934 = vmatprep.subr.bf16.mxu0 %v2863
    %2935 = vmatpush1.bf16.msra.mxu0 %v2862
    %2936 = vmatprep.subr.bf16.mxu0 %v2859
    %2937 = vmatpush1.bf16.msra.mxu0 %v2858
    %2938 = vmatprep.subr.bf16.mxu0 0
    %2939 = vmatpush2.bf16.msra.mxu0 0
    %2940 = vmatprep.subr.bf16.mxu0 0
    %2941 = vmatpush2.bf16.msra.mxu0 0
    %2942 = vmatprep.subr.bf16.mxu0 0
    %2943 = vmatpush2.bf16.msra.mxu0 0
    %2944 = vmatprep.subr.bf16.mxu0 0
    %2945 = vmatpush2.bf16.msra.mxu0 0
    %2946 = vmatprep.subr.bf16.mxu0 0
    %2947 = vmatpush2.bf16.msra.mxu0 0
    %2948 = vmatprep.subr.bf16.mxu0 0
    %2949 = vmatpush2.bf16.msra.mxu0 0
    %2950 = vmatprep.subr.bf16.mxu0 0
    %2951 = vmatpush2.bf16.msra.mxu0 0
    %2952 = vmatprep.subr.bf16.mxu0 0
    %2953 = vmatpush2.bf16.msra.mxu0 0
    %2954 = vmatprep.mubr.bf16.mxu0 0
    %2955 = vmatmul.mubr.bf16.gmra.mxu0 %v2720
    %v2956 = vpop.f32.mrf.mxu0
    %v2957 = vadd.f32 0.0, %v2956
    %v2958 = vpop.f32.mrf.mxu0
    %v2959 = vadd.f32 0.0, %v2958
    %v2960 = vpop.f32.mrf.mxu0
    %v2961 = vpop.f32.mrf.mxu0
    %2962 = vdwg.mxu0
    %2963 = vmatprep.subr.bf16.mxu0 %v2889
    %2964 = vmatpush1.bf16.msra.mxu0 %v2888
    %2965 = vmatprep.subr.bf16.mxu0 %v2885
    %2966 = vmatpush1.bf16.msra.mxu0 %v2884
    %2967 = vmatprep.subr.bf16.mxu0 %v2881
    %2968 = vmatpush1.bf16.msra.mxu0 %v2880
    %2969 = vmatprep.subr.bf16.mxu0 %v2877
    %2970 = vmatpush1.bf16.msra.mxu0 %v2876
    %2971 = vmatprep.subr.bf16.mxu0 %v2873
    %2972 = vmatpush1.bf16.msra.mxu0 %v2872
    %2973 = vmatprep.subr.bf16.mxu0 %v2869
    %2974 = vmatpush1.bf16.msra.mxu0 %v2868
    %2975 = vmatprep.subr.bf16.mxu0 %v2865
    %2976 = vmatpush1.bf16.msra.mxu0 %v2864
    %2977 = vmatprep.subr.bf16.mxu0 %v2861
    %2978 = vmatpush1.bf16.msra.mxu0 %v2860
    %2979 = vmatprep.subr.bf16.mxu0 0
    %2980 = vmatpush2.bf16.msra.mxu0 0
    %2981 = vmatprep.subr.bf16.mxu0 0
    %2982 = vmatpush2.bf16.msra.mxu0 0
    %2983 = vmatprep.subr.bf16.mxu0 0
    %2984 = vmatpush2.bf16.msra.mxu0 0
    %2985 = vmatprep.subr.bf16.mxu0 0
    %2986 = vmatpush2.bf16.msra.mxu0 0
    %2987 = vmatprep.subr.bf16.mxu0 0
    %2988 = vmatpush2.bf16.msra.mxu0 0
    %2989 = vmatprep.subr.bf16.mxu0 0
    %2990 = vmatpush2.bf16.msra.mxu0 0
    %2991 = vmatprep.subr.bf16.mxu0 0
    %2992 = vmatpush2.bf16.msra.mxu0 0
    %2993 = vmatprep.subr.bf16.mxu0 0
    %2994 = vmatpush2.bf16.msra.mxu0 0
    %2995 = vmatprep.mubr.bf16.mxu0 0
    %2996 = vmatmul.mubr.bf16.gmra.mxu0 %v2720
    %v2997 = vpop.f32.mrf.mxu0
    %v2998 = vadd.f32 0.0, %v2997
    %v2999 = vpop.f32.mrf.mxu0
    %v3000 = vadd.f32 0.0, %v2999
    %v3001 = vpop.f32.mrf.mxu0
    %v3002 = vpop.f32.mrf.mxu0
    %3003 = vdwg.mxu0
    %v3004 = vadd.f32 %v2726, %v2957
    %v3005 = vadd.f32 %v2727, %v2959
    %v3006 = vadd.f32 %v2728, %v2998
    %v3007 = vadd.f32 %v2729, %v3000
    %v3008 = vxor.u32 %v3004, 2147483648
    %v3009 = vmul.f32 %v3008, 1.442695
    %v3010 = vpow.pop %v3009
    %v3011 = vadd.f32 %v3010, 1.0
    %v3012 = vrcp.pop %v3011
    %v3013 = vmul.f32 1.0, %v3012
    %v3014 = vxor.u32 %v3005, 2147483648
    %v3015 = vmul.f32 %v3014, 1.442695
    %v3016 = vpow.pop %v3015
    %v3017 = vadd.f32 %v3016, 1.0
    %v3018 = vrcp.pop %v3017
    %v3019 = vmul.f32 1.0, %v3018
    %v3020 = vtanh.pop %v3006
    %v3021 = vxor.u32 %v3007, 2147483648
    %v3022 = vmul.f32 %v3021, 1.442695
    %v3023 = vpow.pop %v3022
    %v3024 = vadd.f32 %v3023, 1.0
    %v3025 = vrcp.pop %v3024
    %v3026 = vmul.f32 1.0, %v3025
    %v3027 = vmul.f32 %v3019, %v2717
    %v3028 = vmul.f32 %v3013, %v3020
    %v3029 = vadd.f32 %v3027, %v3028
    %v3030 = vtanh.pop %v3029
    %v3031 = vmul.f32 %v3026, %v3030
    %v3032 = vpack.c.bf16 %v3031, %v3031
    %s3033 = scalar_lea.vmem [#allocation3], 28
    %3034 = vst [vmem:[%s3033] sm:$0xf] %v3032
    %v3035 = vld [vmem:[#allocation3] sm:$0xf]
    %v3036 = vld [vmem:[#allocation3 + $0x4] sm:$0xf]
    %v3037 = vld [vmem:[#allocation3 + $0x8] sm:$0xf]
    %v3038 = vld [vmem:[#allocation3 + $0xc] sm:$0xf]
    %v3039 = vld [vmem:[#allocation3 + $0x10] sm:$0xf]
    %v3040 = vld [vmem:[#allocation3 + $0x14] sm:$0xf]
    %v3041 = vld [vmem:[#allocation3 + $0x18] sm:$0xf]
    %v3042 = vld [vmem:[#allocation3 + $0x1c] sm:$0xf]
    %v3043 = vld [vmem:[#allocation10] sm:$0xff]
    %v3044 = vld [vmem:[#allocation10 + $0x8] sm:$0xff]
    %v3045 = vld [vmem:[#allocation10 + $0x10] sm:$0xff]
    %v3046 = vld [vmem:[#allocation10 + $0x18] sm:$0xff]
    %v3047 = vld [vmem:[#allocation10 + $0x20] sm:$0xff]
    %v3048 = vld [vmem:[#allocation10 + $0x28] sm:$0xff]
    %v3049 = vld [vmem:[#allocation10 + $0x30] sm:$0xff]
    %v3050 = vld [vmem:[#allocation10 + $0x38] sm:$0xff]
    %v3051 = vld [vmem:[#allocation10 + $0x40] sm:$0xff]
    %v3052 = vld [vmem:[#allocation10 + $0x48] sm:$0xff]
    %v3053 = vld [vmem:[#allocation10 + $0x50] sm:$0xff]
    %v3054 = vld [vmem:[#allocation10 + $0x58] sm:$0xff]
    %v3055 = vld [vmem:[#allocation10 + $0x60] sm:$0xff]
    %v3056 = vld [vmem:[#allocation10 + $0x68] sm:$0xff]
    %v3057 = vld [vmem:[#allocation10 + $0x70] sm:$0xff]
    %v3058 = vld [vmem:[#allocation10 + $0x78] sm:$0xff]
    %v3059 = vld [vmem:[#allocation10 + $0x80] sm:$0xff]
    %v3060 = vld [vmem:[#allocation10 + $0x88] sm:$0xff]
    %v3061 = vld [vmem:[#allocation10 + $0x90] sm:$0xff]
    %v3062 = vld [vmem:[#allocation10 + $0x98] sm:$0xff]
    %v3063 = vld [vmem:[#allocation10 + $0xa0] sm:$0xff]
    %v3064 = vld [vmem:[#allocation10 + $0xa8] sm:$0xff]
    %v3065 = vld [vmem:[#allocation10 + $0xb0] sm:$0xff]
    %v3066 = vld [vmem:[#allocation10 + $0xb8] sm:$0xff]
    %v3067 = vld [vmem:[#allocation10 + $0xc0] sm:$0xff]
    %v3068 = vld [vmem:[#allocation10 + $0xc8] sm:$0xff]
    %v3069 = vld [vmem:[#allocation10 + $0xd0] sm:$0xff]
    %v3070 = vld [vmem:[#allocation10 + $0xd8] sm:$0xff]
    %v3071 = vld [vmem:[#allocation10 + $0xe0] sm:$0xff]
    %v3072 = vld [vmem:[#allocation10 + $0xe8] sm:$0xff]
    %v3073 = vld [vmem:[#allocation10 + $0xf0] sm:$0xff]
    %v3074 = vld [vmem:[#allocation10 + $0xf8] sm:$0xff]
    %v3075 = vld [vmem:[%s6] sm:$0xf]
    %v3077 = vlaneseq
    %v3078 = vshrl.u32 %v3077, 7
    %v3079 = vsub.s32 0, %v3078
    %v3080 = vrot.slane %v3075, %v3079
    %v3081 = vlaneseq
    %v3082 = vshrl.u32 %v3081, 7
    %v3083 = vsub.s32 1, %v3082
    %v3084 = vrot.slane %v3075, %v3083
    %v3085 = vlaneseq
    %v3086 = vshrl.u32 %v3085, 7
    %v3087 = vsub.s32 2, %v3086
    %v3088 = vrot.slane %v3075, %v3087
    %v3089 = vlaneseq
    %v3090 = vshrl.u32 %v3089, 7
    %v3091 = vsub.s32 3, %v3090
    %v3092 = vrot.slane %v3075, %v3091
    %v3105 = vunpack.c.l.b16 %v3035
    %v3106 = vunpack.c.l.b16 %v3036
    %v3107 = vunpack.c.l.b16 %v3037
    %v3108 = vunpack.c.l.b16 %v3038
    %v3109 = vunpack.c.l.b16 %v3039
    %v3110 = vunpack.c.l.b16 %v3040
    %v3111 = vunpack.c.l.b16 %v3041
    %v3112 = vunpack.c.l.b16 %v3042
    %v3113 = vpack.c.b16 %v3106, %v3105
    %v3114 = vpack.c.b16 %v3108, %v3107
    %v3115 = vpack.c.b16 %v3110, %v3109
    %v3116 = vpack.c.b16 %v3112, %v3111
    %v3153 = vunpack.c.l.b16 %v3043
    %v3154 = vunpack.c.h.b16 %v3043
    %v3155 = vunpack.c.l.b16 %v3044
    %v3156 = vunpack.c.h.b16 %v3044
    %v3157 = vunpack.c.l.b16 %v3045
    %v3158 = vunpack.c.h.b16 %v3045
    %v3159 = vunpack.c.l.b16 %v3046
    %v3160 = vunpack.c.h.b16 %v3046
    %v3161 = vunpack.c.l.b16 %v3047
    %v3162 = vunpack.c.h.b16 %v3047
    %v3163 = vunpack.c.l.b16 %v3048
    %v3164 = vunpack.c.h.b16 %v3048
    %v3165 = vunpack.c.l.b16 %v3049
    %v3166 = vunpack.c.h.b16 %v3049
    %v3167 = vunpack.c.l.b16 %v3050
    %v3168 = vunpack.c.h.b16 %v3050
    %v3169 = vunpack.c.l.b16 %v3051
    %v3170 = vunpack.c.h.b16 %v3051
    %v3171 = vunpack.c.l.b16 %v3052
    %v3172 = vunpack.c.h.b16 %v3052
    %v3173 = vunpack.c.l.b16 %v3053
    %v3174 = vunpack.c.h.b16 %v3053
    %v3175 = vunpack.c.l.b16 %v3054
    %v3176 = vunpack.c.h.b16 %v3054
    %v3177 = vunpack.c.l.b16 %v3055
    %v3178 = vunpack.c.h.b16 %v3055
    %v3179 = vunpack.c.l.b16 %v3056
    %v3180 = vunpack.c.h.b16 %v3056
    %v3181 = vunpack.c.l.b16 %v3057
    %v3182 = vunpack.c.h.b16 %v3057
    %v3183 = vunpack.c.l.b16 %v3058
    %v3184 = vunpack.c.h.b16 %v3058
    %v3185 = vunpack.c.l.b16 %v3059
    %v3186 = vunpack.c.h.b16 %v3059
    %v3187 = vunpack.c.l.b16 %v3060
    %v3188 = vunpack.c.h.b16 %v3060
    %v3189 = vunpack.c.l.b16 %v3061
    %v3190 = vunpack.c.h.b16 %v3061
    %v3191 = vunpack.c.l.b16 %v3062
    %v3192 = vunpack.c.h.b16 %v3062
    %v3193 = vunpack.c.l.b16 %v3063
    %v3194 = vunpack.c.h.b16 %v3063
    %v3195 = vunpack.c.l.b16 %v3064
    %v3196 = vunpack.c.h.b16 %v3064
    %v3197 = vunpack.c.l.b16 %v3065
    %v3198 = vunpack.c.h.b16 %v3065
    %v3199 = vunpack.c.l.b16 %v3066
    %v3200 = vunpack.c.h.b16 %v3066
    %v3201 = vunpack.c.l.b16 %v3067
    %v3202 = vunpack.c.h.b16 %v3067
    %v3203 = vunpack.c.l.b16 %v3068
    %v3204 = vunpack.c.h.b16 %v3068
    %v3205 = vunpack.c.l.b16 %v3069
    %v3206 = vunpack.c.h.b16 %v3069
    %v3207 = vunpack.c.l.b16 %v3070
    %v3208 = vunpack.c.h.b16 %v3070
    %v3209 = vunpack.c.l.b16 %v3071
    %v3210 = vunpack.c.h.b16 %v3071
    %v3211 = vunpack.c.l.b16 %v3072
    %v3212 = vunpack.c.h.b16 %v3072
    %v3213 = vunpack.c.l.b16 %v3073
    %v3214 = vunpack.c.h.b16 %v3073
    %v3215 = vunpack.c.l.b16 %v3074
    %v3216 = vunpack.c.h.b16 %v3074
    %v3217 = vpack.c.b16 %v3157, %v3153
    %v3218 = vpack.c.b16 %v3158, %v3154
    %v3219 = vpack.c.b16 %v3159, %v3155
    %v3220 = vpack.c.b16 %v3160, %v3156
    %v3221 = vpack.c.b16 %v3165, %v3161
    %v3222 = vpack.c.b16 %v3166, %v3162
    %v3223 = vpack.c.b16 %v3167, %v3163
    %v3224 = vpack.c.b16 %v3168, %v3164
    %v3225 = vpack.c.b16 %v3173, %v3169
    %v3226 = vpack.c.b16 %v3174, %v3170
    %v3227 = vpack.c.b16 %v3175, %v3171
    %v3228 = vpack.c.b16 %v3176, %v3172
    %v3229 = vpack.c.b16 %v3181, %v3177
    %v3230 = vpack.c.b16 %v3182, %v3178
    %v3231 = vpack.c.b16 %v3183, %v3179
    %v3232 = vpack.c.b16 %v3184, %v3180
    %v3233 = vpack.c.b16 %v3189, %v3185
    %v3234 = vpack.c.b16 %v3190, %v3186
    %v3235 = vpack.c.b16 %v3191, %v3187
    %v3236 = vpack.c.b16 %v3192, %v3188
    %v3237 = vpack.c.b16 %v3197, %v3193
    %v3238 = vpack.c.b16 %v3198, %v3194
    %v3239 = vpack.c.b16 %v3199, %v3195
    %v3240 = vpack.c.b16 %v3200, %v3196
    %v3241 = vpack.c.b16 %v3205, %v3201
    %v3242 = vpack.c.b16 %v3206, %v3202
    %v3243 = vpack.c.b16 %v3207, %v3203
    %v3244 = vpack.c.b16 %v3208, %v3204
    %v3245 = vpack.c.b16 %v3213, %v3209
    %v3246 = vpack.c.b16 %v3214, %v3210
    %v3247 = vpack.c.b16 %v3215, %v3211
    %v3248 = vpack.c.b16 %v3216, %v3212
    %3281 = vmatprep.subr.bf16.mxu0 %v3246
    %3282 = vmatpush1.bf16.msra.mxu0 %v3245
    %3283 = vmatprep.subr.bf16.mxu0 %v3242
    %3284 = vmatpush1.bf16.msra.mxu0 %v3241
    %3285 = vmatprep.subr.bf16.mxu0 %v3238
    %3286 = vmatpush1.bf16.msra.mxu0 %v3237
    %3287 = vmatprep.subr.bf16.mxu0 %v3234
    %3288 = vmatpush1.bf16.msra.mxu0 %v3233
    %3289 = vmatprep.subr.bf16.mxu0 %v3230
    %3290 = vmatpush1.bf16.msra.mxu0 %v3229
    %3291 = vmatprep.subr.bf16.mxu0 %v3226
    %3292 = vmatpush1.bf16.msra.mxu0 %v3225
    %3293 = vmatprep.subr.bf16.mxu0 %v3222
    %3294 = vmatpush1.bf16.msra.mxu0 %v3221
    %3295 = vmatprep.subr.bf16.mxu0 %v3218
    %3296 = vmatpush1.bf16.msra.mxu0 %v3217
    %3297 = vmatprep.subr.bf16.mxu0 0
    %3298 = vmatpush2.bf16.msra.mxu0 0
    %3299 = vmatprep.subr.bf16.mxu0 0
    %3300 = vmatpush2.bf16.msra.mxu0 0
    %3301 = vmatprep.subr.bf16.mxu0 0
    %3302 = vmatpush2.bf16.msra.mxu0 0
    %3303 = vmatprep.subr.bf16.mxu0 0
    %3304 = vmatpush2.bf16.msra.mxu0 0
    %3305 = vmatprep.subr.bf16.mxu0 0
    %3306 = vmatpush2.bf16.msra.mxu0 0
    %3307 = vmatprep.subr.bf16.mxu0 0
    %3308 = vmatpush2.bf16.msra.mxu0 0
    %3309 = vmatprep.subr.bf16.mxu0 0
    %3310 = vmatpush2.bf16.msra.mxu0 0
    %3311 = vmatprep.subr.bf16.mxu0 0
    %3312 = vmatpush2.bf16.msra.mxu0 0
    %3313 = vmatprep.mubr.bf16.mxu0 0
    %3314 = vmatmul.mubr.bf16.gmra.mxu0 %v3113
    %v3315 = vpop.f32.mrf.mxu0
    %v3316 = vadd.f32 %v3080, %v3315
    %v3317 = vpop.f32.mrf.mxu0
    %v3318 = vadd.f32 %v3084, %v3317
    %v3319 = vpop.f32.mrf.mxu0
    %v3320 = vadd.f32 %v3080, %v3319
    %v3321 = vpop.f32.mrf.mxu0
    %v3322 = vadd.f32 %v3084, %v3321
    %3323 = vmatprep.mubr.bf16.mxu0 0
    %3324 = vmatmul.mubr.bf16.gmra.mxu0 %v3114
    %v3325 = vpop.f32.mrf.mxu0
    %v3326 = vadd.f32 %v3080, %v3325
    %v3327 = vpop.f32.mrf.mxu0
    %v3328 = vadd.f32 %v3084, %v3327
    %v3329 = vpop.f32.mrf.mxu0
    %v3330 = vadd.f32 %v3080, %v3329
    %v3331 = vpop.f32.mrf.mxu0
    %v3332 = vadd.f32 %v3084, %v3331
    %3333 = vmatprep.mubr.bf16.mxu0 0
    %3334 = vmatmul.mubr.bf16.gmra.mxu0 %v3115
    %v3335 = vpop.f32.mrf.mxu0
    %v3336 = vadd.f32 %v3080, %v3335
    %v3337 = vpop.f32.mrf.mxu0
    %v3338 = vadd.f32 %v3084, %v3337
    %v3339 = vpop.f32.mrf.mxu0
    %v3340 = vadd.f32 %v3080, %v3339
    %v3341 = vpop.f32.mrf.mxu0
    %v3342 = vadd.f32 %v3084, %v3341
    %3343 = vmatprep.mubr.bf16.mxu0 0
    %3344 = vmatmul.mubr.bf16.gmra.mxu0 %v3116
    %v3345 = vpop.f32.mrf.mxu0
    %v3346 = vadd.f32 %v3080, %v3345
    %v3347 = vpop.f32.mrf.mxu0
    %v3348 = vadd.f32 %v3084, %v3347
    %v3349 = vpop.f32.mrf.mxu0
    %v3350 = vadd.f32 %v3080, %v3349
    %v3351 = vpop.f32.mrf.mxu0
    %v3352 = vadd.f32 %v3084, %v3351
    %3353 = vdwg.mxu0
    %3354 = vmatprep.subr.bf16.mxu0 %v3248
    %3355 = vmatpush1.bf16.msra.mxu0 %v3247
    %3356 = vmatprep.subr.bf16.mxu0 %v3244
    %3357 = vmatpush1.bf16.msra.mxu0 %v3243
    %3358 = vmatprep.subr.bf16.mxu0 %v3240
    %3359 = vmatpush1.bf16.msra.mxu0 %v3239
    %3360 = vmatprep.subr.bf16.mxu0 %v3236
    %3361 = vmatpush1.bf16.msra.mxu0 %v3235
    %3362 = vmatprep.subr.bf16.mxu0 %v3232
    %3363 = vmatpush1.bf16.msra.mxu0 %v3231
    %3364 = vmatprep.subr.bf16.mxu0 %v3228
    %3365 = vmatpush1.bf16.msra.mxu0 %v3227
    %3366 = vmatprep.subr.bf16.mxu0 %v3224
    %3367 = vmatpush1.bf16.msra.mxu0 %v3223
    %3368 = vmatprep.subr.bf16.mxu0 %v3220
    %3369 = vmatpush1.bf16.msra.mxu0 %v3219
    %3370 = vmatprep.subr.bf16.mxu0 0
    %3371 = vmatpush2.bf16.msra.mxu0 0
    %3372 = vmatprep.subr.bf16.mxu0 0
    %3373 = vmatpush2.bf16.msra.mxu0 0
    %3374 = vmatprep.subr.bf16.mxu0 0
    %3375 = vmatpush2.bf16.msra.mxu0 0
    %3376 = vmatprep.subr.bf16.mxu0 0
    %3377 = vmatpush2.bf16.msra.mxu0 0
    %3378 = vmatprep.subr.bf16.mxu0 0
    %3379 = vmatpush2.bf16.msra.mxu0 0
    %3380 = vmatprep.subr.bf16.mxu0 0
    %3381 = vmatpush2.bf16.msra.mxu0 0
    %3382 = vmatprep.subr.bf16.mxu0 0
    %3383 = vmatpush2.bf16.msra.mxu0 0
    %3384 = vmatprep.subr.bf16.mxu0 0
    %3385 = vmatpush2.bf16.msra.mxu0 0
    %3386 = vmatprep.mubr.bf16.mxu0 0
    %3387 = vmatmul.mubr.bf16.gmra.mxu0 %v3113
    %v3388 = vpop.f32.mrf.mxu0
    %v3389 = vadd.f32 %v3088, %v3388
    %v3390 = vpop.f32.mrf.mxu0
    %v3391 = vadd.f32 %v3092, %v3390
    %v3392 = vpop.f32.mrf.mxu0
    %v3393 = vadd.f32 %v3088, %v3392
    %v3394 = vpop.f32.mrf.mxu0
    %v3395 = vadd.f32 %v3092, %v3394
    %3396 = vmatprep.mubr.bf16.mxu0 0
    %3397 = vmatmul.mubr.bf16.gmra.mxu0 %v3114
    %v3398 = vpop.f32.mrf.mxu0
    %v3399 = vadd.f32 %v3088, %v3398
    %v3400 = vpop.f32.mrf.mxu0
    %v3401 = vadd.f32 %v3092, %v3400
    %v3402 = vpop.f32.mrf.mxu0
    %v3403 = vadd.f32 %v3088, %v3402
    %v3404 = vpop.f32.mrf.mxu0
    %v3405 = vadd.f32 %v3092, %v3404
    %3406 = vmatprep.mubr.bf16.mxu0 0
    %3407 = vmatmul.mubr.bf16.gmra.mxu0 %v3115
    %v3408 = vpop.f32.mrf.mxu0
    %v3409 = vadd.f32 %v3088, %v3408
    %v3410 = vpop.f32.mrf.mxu0
    %v3411 = vadd.f32 %v3092, %v3410
    %v3412 = vpop.f32.mrf.mxu0
    %v3413 = vadd.f32 %v3088, %v3412
    %v3414 = vpop.f32.mrf.mxu0
    %v3415 = vadd.f32 %v3092, %v3414
    %3416 = vmatprep.mubr.bf16.mxu0 0
    %3417 = vmatmul.mubr.bf16.gmra.mxu0 %v3116
    %v3418 = vpop.f32.mrf.mxu0
    %v3419 = vadd.f32 %v3088, %v3418
    %v3420 = vpop.f32.mrf.mxu0
    %v3421 = vadd.f32 %v3092, %v3420
    %v3422 = vpop.f32.mrf.mxu0
    %v3423 = vadd.f32 %v3088, %v3422
    %v3424 = vpop.f32.mrf.mxu0
    %v3425 = vadd.f32 %v3092, %v3424
    %3426 = vdwg.mxu0
    %3427 = vst [vmem:[#allocation2] sm:$0xff] %v3316
    %3428 = vst [vmem:[#allocation2 + $0x8] sm:$0xff] %v3318
    %3429 = vst [vmem:[#allocation2 + $0x10] sm:$0xff] %v3389
    %3430 = vst [vmem:[#allocation2 + $0x18] sm:$0xff] %v3391
    %3431 = vst [vmem:[#allocation2 + $0x20] sm:$0xff] %v3320
    %3432 = vst [vmem:[#allocation2 + $0x28] sm:$0xff] %v3322
    %3433 = vst [vmem:[#allocation2 + $0x30] sm:$0xff] %v3393
    %3434 = vst [vmem:[#allocation2 + $0x38] sm:$0xff] %v3395
    %3435 = vst [vmem:[#allocation2 + $0x40] sm:$0xff] %v3326
    %3436 = vst [vmem:[#allocation2 + $0x48] sm:$0xff] %v3328
    %3437 = vst [vmem:[#allocation2 + $0x50] sm:$0xff] %v3399
    %3438 = vst [vmem:[#allocation2 + $0x58] sm:$0xff] %v3401
    %3439 = vst [vmem:[#allocation2 + $0x60] sm:$0xff] %v3330
    %3440 = vst [vmem:[#allocation2 + $0x68] sm:$0xff] %v3332
    %3441 = vst [vmem:[#allocation2 + $0x70] sm:$0xff] %v3403
    %3442 = vst [vmem:[#allocation2 + $0x78] sm:$0xff] %v3405
    %3443 = vst [vmem:[#allocation2 + $0x80] sm:$0xff] %v3336
    %3444 = vst [vmem:[#allocation2 + $0x88] sm:$0xff] %v3338
    %3445 = vst [vmem:[#allocation2 + $0x90] sm:$0xff] %v3409
    %3446 = vst [vmem:[#allocation2 + $0x98] sm:$0xff] %v3411
    %3447 = vst [vmem:[#allocation2 + $0xa0] sm:$0xff] %v3340
    %3448 = vst [vmem:[#allocation2 + $0xa8] sm:$0xff] %v3342
    %3449 = vst [vmem:[#allocation2 + $0xb0] sm:$0xff] %v3413
    %3450 = vst [vmem:[#allocation2 + $0xb8] sm:$0xff] %v3415
    %3451 = vst [vmem:[#allocation2 + $0xc0] sm:$0xff] %v3346
    %3452 = vst [vmem:[#allocation2 + $0xc8] sm:$0xff] %v3348
    %3453 = vst [vmem:[#allocation2 + $0xd0] sm:$0xff] %v3419
    %3454 = vst [vmem:[#allocation2 + $0xd8] sm:$0xff] %v3421
    %3455 = vst [vmem:[#allocation2 + $0xe0] sm:$0xff] %v3350
    %3456 = vst [vmem:[#allocation2 + $0xe8] sm:$0xff] %v3352
    %3457 = vst [vmem:[#allocation2 + $0xf0] sm:$0xff] %v3423
    %3458 = vst [vmem:[#allocation2 + $0xf8] sm:$0xff] %v3425
    %v3459 = vld [vmem:[%s542] sm:$0xff]
    %v3460 = vld [vmem:[%s542 + $0x8] sm:$0xff]
    %v3461 = vld [vmem:[%s542 + $0x10] sm:$0xff]
    %v3462 = vld [vmem:[%s542 + $0x18] sm:$0xff]
    %v3463 = vld [vmem:[#allocation12] sm:$0xff]
    %v3464 = vld [vmem:[#allocation12 + $0x8] sm:$0xff]
    %v3465 = vld [vmem:[#allocation12 + $0x10] sm:$0xff]
    %v3466 = vld [vmem:[#allocation12 + $0x18] sm:$0xff]
    %v3467 = vld [vmem:[#allocation12 + $0x20] sm:$0xff]
    %v3468 = vld [vmem:[#allocation12 + $0x28] sm:$0xff]
    %v3469 = vld [vmem:[#allocation12 + $0x30] sm:$0xff]
    %v3470 = vld [vmem:[#allocation12 + $0x38] sm:$0xff]
    %v3471 = vld [vmem:[#allocation12 + $0x40] sm:$0xff]
    %v3472 = vld [vmem:[#allocation12 + $0x48] sm:$0xff]
    %v3473 = vld [vmem:[#allocation12 + $0x50] sm:$0xff]
    %v3474 = vld [vmem:[#allocation12 + $0x58] sm:$0xff]
    %v3475 = vld [vmem:[#allocation12 + $0x60] sm:$0xff]
    %v3476 = vld [vmem:[#allocation12 + $0x68] sm:$0xff]
    %v3477 = vld [vmem:[#allocation12 + $0x70] sm:$0xff]
    %v3478 = vld [vmem:[#allocation12 + $0x78] sm:$0xff]
    %v3479 = vld [vmem:[#allocation12 + $0x80] sm:$0xff]
    %v3480 = vld [vmem:[#allocation12 + $0x88] sm:$0xff]
    %v3481 = vld [vmem:[#allocation12 + $0x90] sm:$0xff]
    %v3482 = vld [vmem:[#allocation12 + $0x98] sm:$0xff]
    %v3483 = vld [vmem:[#allocation12 + $0xa0] sm:$0xff]
    %v3484 = vld [vmem:[#allocation12 + $0xa8] sm:$0xff]
    %v3485 = vld [vmem:[#allocation12 + $0xb0] sm:$0xff]
    %v3486 = vld [vmem:[#allocation12 + $0xb8] sm:$0xff]
    %v3487 = vld [vmem:[#allocation12 + $0xc0] sm:$0xff]
    %v3488 = vld [vmem:[#allocation12 + $0xc8] sm:$0xff]
    %v3489 = vld [vmem:[#allocation12 + $0xd0] sm:$0xff]
    %v3490 = vld [vmem:[#allocation12 + $0xd8] sm:$0xff]
    %v3491 = vld [vmem:[#allocation12 + $0xe0] sm:$0xff]
    %v3492 = vld [vmem:[#allocation12 + $0xe8] sm:$0xff]
    %v3493 = vld [vmem:[#allocation12 + $0xf0] sm:$0xff]
    %v3494 = vld [vmem:[#allocation12 + $0xf8] sm:$0xff]
    %v3527 = vunpack.c.l.b16 %v3463
    %v3528 = vunpack.c.h.b16 %v3463
    %v3529 = vunpack.c.l.b16 %v3464
    %v3530 = vunpack.c.h.b16 %v3464
    %v3531 = vunpack.c.l.b16 %v3465
    %v3532 = vunpack.c.h.b16 %v3465
    %v3533 = vunpack.c.l.b16 %v3466
    %v3534 = vunpack.c.h.b16 %v3466
    %v3535 = vunpack.c.l.b16 %v3467
    %v3536 = vunpack.c.h.b16 %v3467
    %v3537 = vunpack.c.l.b16 %v3468
    %v3538 = vunpack.c.h.b16 %v3468
    %v3539 = vunpack.c.l.b16 %v3469
    %v3540 = vunpack.c.h.b16 %v3469
    %v3541 = vunpack.c.l.b16 %v3470
    %v3542 = vunpack.c.h.b16 %v3470
    %v3543 = vunpack.c.l.b16 %v3471
    %v3544 = vunpack.c.h.b16 %v3471
    %v3545 = vunpack.c.l.b16 %v3472
    %v3546 = vunpack.c.h.b16 %v3472
    %v3547 = vunpack.c.l.b16 %v3473
    %v3548 = vunpack.c.h.b16 %v3473
    %v3549 = vunpack.c.l.b16 %v3474
    %v3550 = vunpack.c.h.b16 %v3474
    %v3551 = vunpack.c.l.b16 %v3475
    %v3552 = vunpack.c.h.b16 %v3475
    %v3553 = vunpack.c.l.b16 %v3476
    %v3554 = vunpack.c.h.b16 %v3476
    %v3555 = vunpack.c.l.b16 %v3477
    %v3556 = vunpack.c.h.b16 %v3477
    %v3557 = vunpack.c.l.b16 %v3478
    %v3558 = vunpack.c.h.b16 %v3478
    %v3559 = vunpack.c.l.b16 %v3479
    %v3560 = vunpack.c.h.b16 %v3479
    %v3561 = vunpack.c.l.b16 %v3480
    %v3562 = vunpack.c.h.b16 %v3480
    %v3563 = vunpack.c.l.b16 %v3481
    %v3564 = vunpack.c.h.b16 %v3481
    %v3565 = vunpack.c.l.b16 %v3482
    %v3566 = vunpack.c.h.b16 %v3482
    %v3567 = vunpack.c.l.b16 %v3483
    %v3568 = vunpack.c.h.b16 %v3483
    %v3569 = vunpack.c.l.b16 %v3484
    %v3570 = vunpack.c.h.b16 %v3484
    %v3571 = vunpack.c.l.b16 %v3485
    %v3572 = vunpack.c.h.b16 %v3485
    %v3573 = vunpack.c.l.b16 %v3486
    %v3574 = vunpack.c.h.b16 %v3486
    %v3575 = vunpack.c.l.b16 %v3487
    %v3576 = vunpack.c.h.b16 %v3487
    %v3577 = vunpack.c.l.b16 %v3488
    %v3578 = vunpack.c.h.b16 %v3488
    %v3579 = vunpack.c.l.b16 %v3489
    %v3580 = vunpack.c.h.b16 %v3489
    %v3581 = vunpack.c.l.b16 %v3490
    %v3582 = vunpack.c.h.b16 %v3490
    %v3583 = vunpack.c.l.b16 %v3491
    %v3584 = vunpack.c.h.b16 %v3491
    %v3585 = vunpack.c.l.b16 %v3492
    %v3586 = vunpack.c.h.b16 %v3492
    %v3587 = vunpack.c.l.b16 %v3493
    %v3588 = vunpack.c.h.b16 %v3493
    %v3589 = vunpack.c.l.b16 %v3494
    %v3590 = vunpack.c.h.b16 %v3494
    %v3591 = vpack.c.b16 %v3531, %v3527
    %v3592 = vpack.c.b16 %v3532, %v3528
    %v3593 = vpack.c.b16 %v3533, %v3529
    %v3594 = vpack.c.b16 %v3534, %v3530
    %v3595 = vpack.c.b16 %v3539, %v3535
    %v3596 = vpack.c.b16 %v3540, %v3536
    %v3597 = vpack.c.b16 %v3541, %v3537
    %v3598 = vpack.c.b16 %v3542, %v3538
    %v3599 = vpack.c.b16 %v3547, %v3543
    %v3600 = vpack.c.b16 %v3548, %v3544
    %v3601 = vpack.c.b16 %v3549, %v3545
    %v3602 = vpack.c.b16 %v3550, %v3546
    %v3603 = vpack.c.b16 %v3555, %v3551
    %v3604 = vpack.c.b16 %v3556, %v3552
    %v3605 = vpack.c.b16 %v3557, %v3553
    %v3606 = vpack.c.b16 %v3558, %v3554
    %v3607 = vpack.c.b16 %v3563, %v3559
    %v3608 = vpack.c.b16 %v3564, %v3560
    %v3609 = vpack.c.b16 %v3565, %v3561
    %v3610 = vpack.c.b16 %v3566, %v3562
    %v3611 = vpack.c.b16 %v3571, %v3567
    %v3612 = vpack.c.b16 %v3572, %v3568
    %v3613 = vpack.c.b16 %v3573, %v3569
    %v3614 = vpack.c.b16 %v3574, %v3570
    %v3615 = vpack.c.b16 %v3579, %v3575
    %v3616 = vpack.c.b16 %v3580, %v3576
    %v3617 = vpack.c.b16 %v3581, %v3577
    %v3618 = vpack.c.b16 %v3582, %v3578
    %v3619 = vpack.c.b16 %v3587, %v3583
    %v3620 = vpack.c.b16 %v3588, %v3584
    %v3621 = vpack.c.b16 %v3589, %v3585
    %v3622 = vpack.c.b16 %v3590, %v3586
    %3655 = vmatprep.subr.bf16.mxu0 %v3620
    %3656 = vmatpush1.bf16.msra.mxu0 %v3619
    %3657 = vmatprep.subr.bf16.mxu0 %v3616
    %3658 = vmatpush1.bf16.msra.mxu0 %v3615
    %3659 = vmatprep.subr.bf16.mxu0 %v3612
    %3660 = vmatpush1.bf16.msra.mxu0 %v3611
    %3661 = vmatprep.subr.bf16.mxu0 %v3608
    %3662 = vmatpush1.bf16.msra.mxu0 %v3607
    %3663 = vmatprep.subr.bf16.mxu0 %v3604
    %3664 = vmatpush1.bf16.msra.mxu0 %v3603
    %3665 = vmatprep.subr.bf16.mxu0 %v3600
    %3666 = vmatpush1.bf16.msra.mxu0 %v3599
    %3667 = vmatprep.subr.bf16.mxu0 %v3596
    %3668 = vmatpush1.bf16.msra.mxu0 %v3595
    %3669 = vmatprep.subr.bf16.mxu0 %v3592
    %3670 = vmatpush1.bf16.msra.mxu0 %v3591
    %3671 = vmatprep.subr.bf16.mxu0 0
    %3672 = vmatpush2.bf16.msra.mxu0 0
    %3673 = vmatprep.subr.bf16.mxu0 0
    %3674 = vmatpush2.bf16.msra.mxu0 0
    %3675 = vmatprep.subr.bf16.mxu0 0
    %3676 = vmatpush2.bf16.msra.mxu0 0
    %3677 = vmatprep.subr.bf16.mxu0 0
    %3678 = vmatpush2.bf16.msra.mxu0 0
    %3679 = vmatprep.subr.bf16.mxu0 0
    %3680 = vmatpush2.bf16.msra.mxu0 0
    %3681 = vmatprep.subr.bf16.mxu0 0
    %3682 = vmatpush2.bf16.msra.mxu0 0
    %3683 = vmatprep.subr.bf16.mxu0 0
    %3684 = vmatpush2.bf16.msra.mxu0 0
    %3685 = vmatprep.subr.bf16.mxu0 0
    %3686 = vmatpush2.bf16.msra.mxu0 0
    %3687 = vmatprep.mubr.bf16.mxu0 0
    %3688 = vmatmul.mubr.bf16.gmra.mxu0 0
    %v3689 = vpop.f32.mrf.mxu0
    %v3690 = vadd.f32 0.0, %v3689
    %v3691 = vpop.f32.mrf.mxu0
    %v3692 = vadd.f32 0.0, %v3691
    %v3693 = vpop.f32.mrf.mxu0
    %v3694 = vpop.f32.mrf.mxu0
    %3695 = vdwg.mxu0
    %3696 = vmatprep.subr.bf16.mxu0 %v3622
    %3697 = vmatpush1.bf16.msra.mxu0 %v3621
    %3698 = vmatprep.subr.bf16.mxu0 %v3618
    %3699 = vmatpush1.bf16.msra.mxu0 %v3617
    %3700 = vmatprep.subr.bf16.mxu0 %v3614
    %3701 = vmatpush1.bf16.msra.mxu0 %v3613
    %3702 = vmatprep.subr.bf16.mxu0 %v3610
    %3703 = vmatpush1.bf16.msra.mxu0 %v3609
    %3704 = vmatprep.subr.bf16.mxu0 %v3606
    %3705 = vmatpush1.bf16.msra.mxu0 %v3605
    %3706 = vmatprep.subr.bf16.mxu0 %v3602
    %3707 = vmatpush1.bf16.msra.mxu0 %v3601
    %3708 = vmatprep.subr.bf16.mxu0 %v3598
    %3709 = vmatpush1.bf16.msra.mxu0 %v3597
    %3710 = vmatprep.subr.bf16.mxu0 %v3594
    %3711 = vmatpush1.bf16.msra.mxu0 %v3593
    %3712 = vmatprep.subr.bf16.mxu0 0
    %3713 = vmatpush2.bf16.msra.mxu0 0
    %3714 = vmatprep.subr.bf16.mxu0 0
    %3715 = vmatpush2.bf16.msra.mxu0 0
    %3716 = vmatprep.subr.bf16.mxu0 0
    %3717 = vmatpush2.bf16.msra.mxu0 0
    %3718 = vmatprep.subr.bf16.mxu0 0
    %3719 = vmatpush2.bf16.msra.mxu0 0
    %3720 = vmatprep.subr.bf16.mxu0 0
    %3721 = vmatpush2.bf16.msra.mxu0 0
    %3722 = vmatprep.subr.bf16.mxu0 0
    %3723 = vmatpush2.bf16.msra.mxu0 0
    %3724 = vmatprep.subr.bf16.mxu0 0
    %3725 = vmatpush2.bf16.msra.mxu0 0
    %3726 = vmatprep.subr.bf16.mxu0 0
    %3727 = vmatpush2.bf16.msra.mxu0 0
    %3728 = vmatprep.mubr.bf16.mxu0 0
    %3729 = vmatmul.mubr.bf16.gmra.mxu0 0
    %v3730 = vpop.f32.mrf.mxu0
    %v3731 = vadd.f32 0.0, %v3730
    %v3732 = vpop.f32.mrf.mxu0
    %v3733 = vadd.f32 0.0, %v3732
    %v3734 = vpop.f32.mrf.mxu0
    %v3735 = vpop.f32.mrf.mxu0
    %3736 = vdwg.mxu0
    %v3737 = vadd.f32 %v3459, %v3690
    %v3738 = vadd.f32 %v3460, %v3692
    %v3739 = vadd.f32 %v3461, %v3731
    %v3740 = vadd.f32 %v3462, %v3733
    %v3741 = vxor.u32 %v3737, 2147483648
    %v3742 = vmul.f32 %v3741, 1.442695
    %v3743 = vpow.pop %v3742
    %v3744 = vadd.f32 %v3743, 1.0
    %v3745 = vrcp.pop %v3744
    %v3746 = vmul.f32 1.0, %v3745
    %v3747 = vxor.u32 %v3738, 2147483648
    %v3748 = vmul.f32 %v3747, 1.442695
    %v3749 = vpow.pop %v3748
    %v3750 = vadd.f32 %v3749, 1.0
    %v3751 = vrcp.pop %v3750
    %v3752 = vmul.f32 1.0, %v3751
    %v3753 = vtanh.pop %v3739
    %v3754 = vxor.u32 %v3740, 2147483648
    %v3755 = vmul.f32 %v3754, 1.442695
    %v3756 = vpow.pop %v3755
    %v3757 = vadd.f32 %v3756, 1.0
    %v3758 = vrcp.pop %v3757
    %v3759 = vmul.f32 1.0, %v3758
    %v3760 = vmul.f32 %v3752, 0.0
    %v3761 = vmul.f32 %v3746, %v3753
    %v3762 = vadd.f32 %v3760, %v3761
    %v3763 = vtanh.pop %v3762
    %v3764 = vmul.f32 %v3759, %v3763
    %v3765 = vld [vmem:[%s853] sm:$0xff]
    %v3766 = vld [vmem:[%s853 + $0x8] sm:$0xff]
    %v3767 = vld [vmem:[%s853 + $0x10] sm:$0xff]
    %v3768 = vld [vmem:[%s853 + $0x18] sm:$0xff]
    %v3769 = vpack.c.bf16 %v3764, %v3764
    %3770 = vmatprep.subr.bf16.mxu0 %v3620
    %3771 = vmatpush1.bf16.msra.mxu0 %v3619
    %3772 = vmatprep.subr.bf16.mxu0 %v3616
    %3773 = vmatpush1.bf16.msra.mxu0 %v3615
    %3774 = vmatprep.subr.bf16.mxu0 %v3612
    %3775 = vmatpush1.bf16.msra.mxu0 %v3611
    %3776 = vmatprep.subr.bf16.mxu0 %v3608
    %3777 = vmatpush1.bf16.msra.mxu0 %v3607
    %3778 = vmatprep.subr.bf16.mxu0 %v3604
    %3779 = vmatpush1.bf16.msra.mxu0 %v3603
    %3780 = vmatprep.subr.bf16.mxu0 %v3600
    %3781 = vmatpush1.bf16.msra.mxu0 %v3599
    %3782 = vmatprep.subr.bf16.mxu0 %v3596
    %3783 = vmatpush1.bf16.msra.mxu0 %v3595
    %3784 = vmatprep.subr.bf16.mxu0 %v3592
    %3785 = vmatpush1.bf16.msra.mxu0 %v3591
    %3786 = vmatprep.subr.bf16.mxu0 0
    %3787 = vmatpush2.bf16.msra.mxu0 0
    %3788 = vmatprep.subr.bf16.mxu0 0
    %3789 = vmatpush2.bf16.msra.mxu0 0
    %3790 = vmatprep.subr.bf16.mxu0 0
    %3791 = vmatpush2.bf16.msra.mxu0 0
    %3792 = vmatprep.subr.bf16.mxu0 0
    %3793 = vmatpush2.bf16.msra.mxu0 0
    %3794 = vmatprep.subr.bf16.mxu0 0
    %3795 = vmatpush2.bf16.msra.mxu0 0
    %3796 = vmatprep.subr.bf16.mxu0 0
    %3797 = vmatpush2.bf16.msra.mxu0 0
    %3798 = vmatprep.subr.bf16.mxu0 0
    %3799 = vmatpush2.bf16.msra.mxu0 0
    %3800 = vmatprep.subr.bf16.mxu0 0
    %3801 = vmatpush2.bf16.msra.mxu0 0
    %3802 = vmatprep.mubr.bf16.mxu0 0
    %3803 = vmatmul.mubr.bf16.gmra.mxu0 %v3769
    %v3804 = vpop.f32.mrf.mxu0
    %v3805 = vadd.f32 0.0, %v3804
    %v3806 = vpop.f32.mrf.mxu0
    %v3807 = vadd.f32 0.0, %v3806
    %v3808 = vpop.f32.mrf.mxu0
    %v3809 = vpop.f32.mrf.mxu0
    %3810 = vdwg.mxu0
    %3811 = vmatprep.subr.bf16.mxu0 %v3622
    %3812 = vmatpush1.bf16.msra.mxu0 %v3621
    %3813 = vmatprep.subr.bf16.mxu0 %v3618
    %3814 = vmatpush1.bf16.msra.mxu0 %v3617
    %3815 = vmatprep.subr.bf16.mxu0 %v3614
    %3816 = vmatpush1.bf16.msra.mxu0 %v3613
    %3817 = vmatprep.subr.bf16.mxu0 %v3610
    %3818 = vmatpush1.bf16.msra.mxu0 %v3609
    %3819 = vmatprep.subr.bf16.mxu0 %v3606
    %3820 = vmatpush1.bf16.msra.mxu0 %v3605
    %3821 = vmatprep.subr.bf16.mxu0 %v3602
    %3822 = vmatpush1.bf16.msra.mxu0 %v3601
    %3823 = vmatprep.subr.bf16.mxu0 %v3598
    %3824 = vmatpush1.bf16.msra.mxu0 %v3597
    %3825 = vmatprep.subr.bf16.mxu0 %v3594
    %3826 = vmatpush1.bf16.msra.mxu0 %v3593
    %3827 = vmatprep.subr.bf16.mxu0 0
    %3828 = vmatpush2.bf16.msra.mxu0 0
    %3829 = vmatprep.subr.bf16.mxu0 0
    %3830 = vmatpush2.bf16.msra.mxu0 0
    %3831 = vmatprep.subr.bf16.mxu0 0
    %3832 = vmatpush2.bf16.msra.mxu0 0
    %3833 = vmatprep.subr.bf16.mxu0 0
    %3834 = vmatpush2.bf16.msra.mxu0 0
    %3835 = vmatprep.subr.bf16.mxu0 0
    %3836 = vmatpush2.bf16.msra.mxu0 0
    %3837 = vmatprep.subr.bf16.mxu0 0
    %3838 = vmatpush2.bf16.msra.mxu0 0
    %3839 = vmatprep.subr.bf16.mxu0 0
    %3840 = vmatpush2.bf16.msra.mxu0 0
    %3841 = vmatprep.subr.bf16.mxu0 0
    %3842 = vmatpush2.bf16.msra.mxu0 0
    %3843 = vmatprep.mubr.bf16.mxu0 0
    %3844 = vmatmul.mubr.bf16.gmra.mxu0 %v3769
    %v3845 = vpop.f32.mrf.mxu0
    %v3846 = vadd.f32 0.0, %v3845
    %v3847 = vpop.f32.mrf.mxu0
    %v3848 = vadd.f32 0.0, %v3847
    %v3849 = vpop.f32.mrf.mxu0
    %v3850 = vpop.f32.mrf.mxu0
    %3851 = vdwg.mxu0
    %v3852 = vadd.f32 %v3765, %v3805
    %v3853 = vadd.f32 %v3766, %v3807
    %v3854 = vadd.f32 %v3767, %v3846
    %v3855 = vadd.f32 %v3768, %v3848
    %v3856 = vxor.u32 %v3852, 2147483648
    %v3857 = vmul.f32 %v3856, 1.442695
    %v3858 = vpow.pop %v3857
    %v3859 = vadd.f32 %v3858, 1.0
    %v3860 = vrcp.pop %v3859
    %v3861 = vmul.f32 1.0, %v3860
    %v3862 = vxor.u32 %v3853, 2147483648
    %v3863 = vmul.f32 %v3862, 1.442695
    %v3864 = vpow.pop %v3863
    %v3865 = vadd.f32 %v3864, 1.0
    %v3866 = vrcp.pop %v3865
    %v3867 = vmul.f32 1.0, %v3866
    %v3868 = vtanh.pop %v3854
    %v3869 = vxor.u32 %v3855, 2147483648
    %v3870 = vmul.f32 %v3869, 1.442695
    %v3871 = vpow.pop %v3870
    %v3872 = vadd.f32 %v3871, 1.0
    %v3873 = vrcp.pop %v3872
    %v3874 = vmul.f32 1.0, %v3873
    %v3875 = vmul.f32 %v3867, %v3762
    %v3876 = vmul.f32 %v3861, %v3868
    %v3877 = vadd.f32 %v3875, %v3876
    %v3878 = vtanh.pop %v3877
    %v3879 = vmul.f32 %v3874, %v3878
    %v3880 = vld [vmem:[%s1165] sm:$0xff]
    %v3881 = vld [vmem:[%s1165 + $0x8] sm:$0xff]
    %v3882 = vld [vmem:[%s1165 + $0x10] sm:$0xff]
    %v3883 = vld [vmem:[%s1165 + $0x18] sm:$0xff]
    %v3884 = vpack.c.bf16 %v3879, %v3879
    %3885 = vmatprep.subr.bf16.mxu0 %v3620
    %3886 = vmatpush1.bf16.msra.mxu0 %v3619
    %3887 = vmatprep.subr.bf16.mxu0 %v3616
    %3888 = vmatpush1.bf16.msra.mxu0 %v3615
    %3889 = vmatprep.subr.bf16.mxu0 %v3612
    %3890 = vmatpush1.bf16.msra.mxu0 %v3611
    %3891 = vmatprep.subr.bf16.mxu0 %v3608
    %3892 = vmatpush1.bf16.msra.mxu0 %v3607
    %3893 = vmatprep.subr.bf16.mxu0 %v3604
    %3894 = vmatpush1.bf16.msra.mxu0 %v3603
    %3895 = vmatprep.subr.bf16.mxu0 %v3600
    %3896 = vmatpush1.bf16.msra.mxu0 %v3599
    %3897 = vmatprep.subr.bf16.mxu0 %v3596
    %3898 = vmatpush1.bf16.msra.mxu0 %v3595
    %3899 = vmatprep.subr.bf16.mxu0 %v3592
    %3900 = vmatpush1.bf16.msra.mxu0 %v3591
    %3901 = vmatprep.subr.bf16.mxu0 0
    %3902 = vmatpush2.bf16.msra.mxu0 0
    %3903 = vmatprep.subr.bf16.mxu0 0
    %3904 = vmatpush2.bf16.msra.mxu0 0
    %3905 = vmatprep.subr.bf16.mxu0 0
    %3906 = vmatpush2.bf16.msra.mxu0 0
    %3907 = vmatprep.subr.bf16.mxu0 0
    %3908 = vmatpush2.bf16.msra.mxu0 0
    %3909 = vmatprep.subr.bf16.mxu0 0
    %3910 = vmatpush2.bf16.msra.mxu0 0
    %3911 = vmatprep.subr.bf16.mxu0 0
    %3912 = vmatpush2.bf16.msra.mxu0 0
    %3913 = vmatprep.subr.bf16.mxu0 0
    %3914 = vmatpush2.bf16.msra.mxu0 0
    %3915 = vmatprep.subr.bf16.mxu0 0
    %3916 = vmatpush2.bf16.msra.mxu0 0
    %3917 = vmatprep.mubr.bf16.mxu0 0
    %3918 = vmatmul.mubr.bf16.gmra.mxu0 %v3884
    %v3919 = vpop.f32.mrf.mxu0
    %v3920 = vadd.f32 0.0, %v3919
    %v3921 = vpop.f32.mrf.mxu0
    %v3922 = vadd.f32 0.0, %v3921
    %v3923 = vpop.f32.mrf.mxu0
    %v3924 = vpop.f32.mrf.mxu0
    %3925 = vdwg.mxu0
    %3926 = vmatprep.subr.bf16.mxu0 %v3622
    %3927 = vmatpush1.bf16.msra.mxu0 %v3621
    %3928 = vmatprep.subr.bf16.mxu0 %v3618
    %3929 = vmatpush1.bf16.msra.mxu0 %v3617
    %3930 = vmatprep.subr.bf16.mxu0 %v3614
    %3931 = vmatpush1.bf16.msra.mxu0 %v3613
    %3932 = vmatprep.subr.bf16.mxu0 %v3610
    %3933 = vmatpush1.bf16.msra.mxu0 %v3609
    %3934 = vmatprep.subr.bf16.mxu0 %v3606
    %3935 = vmatpush1.bf16.msra.mxu0 %v3605
    %3936 = vmatprep.subr.bf16.mxu0 %v3602
    %3937 = vmatpush1.bf16.msra.mxu0 %v3601
    %3938 = vmatprep.subr.bf16.mxu0 %v3598
    %3939 = vmatpush1.bf16.msra.mxu0 %v3597
    %3940 = vmatprep.subr.bf16.mxu0 %v3594
    %3941 = vmatpush1.bf16.msra.mxu0 %v3593
    %3942 = vmatprep.subr.bf16.mxu0 0
    %3943 = vmatpush2.bf16.msra.mxu0 0
    %3944 = vmatprep.subr.bf16.mxu0 0
    %3945 = vmatpush2.bf16.msra.mxu0 0
    %3946 = vmatprep.subr.bf16.mxu0 0
    %3947 = vmatpush2.bf16.msra.mxu0 0
    %3948 = vmatprep.subr.bf16.mxu0 0
    %3949 = vmatpush2.bf16.msra.mxu0 0
    %3950 = vmatprep.subr.bf16.mxu0 0
    %3951 = vmatpush2.bf16.msra.mxu0 0
    %3952 = vmatprep.subr.bf16.mxu0 0
    %3953 = vmatpush2.bf16.msra.mxu0 0
    %3954 = vmatprep.subr.bf16.mxu0 0
    %3955 = vmatpush2.bf16.msra.mxu0 0
    %3956 = vmatprep.subr.bf16.mxu0 0
    %3957 = vmatpush2.bf16.msra.mxu0 0
    %3958 = vmatprep.mubr.bf16.mxu0 0
    %3959 = vmatmul.mubr.bf16.gmra.mxu0 %v3884
    %v3960 = vpop.f32.mrf.mxu0
    %v3961 = vadd.f32 0.0, %v3960
    %v3962 = vpop.f32.mrf.mxu0
    %v3963 = vadd.f32 0.0, %v3962
    %v3964 = vpop.f32.mrf.mxu0
    %v3965 = vpop.f32.mrf.mxu0
    %3966 = vdwg.mxu0
    %v3967 = vadd.f32 %v3880, %v3920
    %v3968 = vadd.f32 %v3881, %v3922
    %v3969 = vadd.f32 %v3882, %v3961
    %v3970 = vadd.f32 %v3883, %v3963
    %v3971 = vxor.u32 %v3967, 2147483648
    %v3972 = vmul.f32 %v3971, 1.442695
    %v3973 = vpow.pop %v3972
    %v3974 = vadd.f32 %v3973, 1.0
    %v3975 = vrcp.pop %v3974
    %v3976 = vmul.f32 1.0, %v3975
    %v3977 = vxor.u32 %v3968, 2147483648
    %v3978 = vmul.f32 %v3977, 1.442695
    %v3979 = vpow.pop %v3978
    %v3980 = vadd.f32 %v3979, 1.0
    %v3981 = vrcp.pop %v3980
    %v3982 = vmul.f32 1.0, %v3981
    %v3983 = vtanh.pop %v3969
    %v3984 = vxor.u32 %v3970, 2147483648
    %v3985 = vmul.f32 %v3984, 1.442695
    %v3986 = vpow.pop %v3985
    %v3987 = vadd.f32 %v3986, 1.0
    %v3988 = vrcp.pop %v3987
    %v3989 = vmul.f32 1.0, %v3988
    %v3990 = vmul.f32 %v3982, %v3877
    %v3991 = vmul.f32 %v3976, %v3983
    %v3992 = vadd.f32 %v3990, %v3991
    %v3993 = vtanh.pop %v3992
    %v3994 = vmul.f32 %v3989, %v3993
    %v3995 = vld [vmem:[%s1477] sm:$0xff]
    %v3996 = vld [vmem:[%s1477 + $0x8] sm:$0xff]
    %v3997 = vld [vmem:[%s1477 + $0x10] sm:$0xff]
    %v3998 = vld [vmem:[%s1477 + $0x18] sm:$0xff]
    %v3999 = vpack.c.bf16 %v3994, %v3994
    %4000 = vmatprep.subr.bf16.mxu0 %v3620
    %4001 = vmatpush1.bf16.msra.mxu0 %v3619
    %4002 = vmatprep.subr.bf16.mxu0 %v3616
    %4003 = vmatpush1.bf16.msra.mxu0 %v3615
    %4004 = vmatprep.subr.bf16.mxu0 %v3612
    %4005 = vmatpush1.bf16.msra.mxu0 %v3611
    %4006 = vmatprep.subr.bf16.mxu0 %v3608
    %4007 = vmatpush1.bf16.msra.mxu0 %v3607
    %4008 = vmatprep.subr.bf16.mxu0 %v3604
    %4009 = vmatpush1.bf16.msra.mxu0 %v3603
    %4010 = vmatprep.subr.bf16.mxu0 %v3600
    %4011 = vmatpush1.bf16.msra.mxu0 %v3599
    %4012 = vmatprep.subr.bf16.mxu0 %v3596
    %4013 = vmatpush1.bf16.msra.mxu0 %v3595
    %4014 = vmatprep.subr.bf16.mxu0 %v3592
    %4015 = vmatpush1.bf16.msra.mxu0 %v3591
    %4016 = vmatprep.subr.bf16.mxu0 0
    %4017 = vmatpush2.bf16.msra.mxu0 0
    %4018 = vmatprep.subr.bf16.mxu0 0
    %4019 = vmatpush2.bf16.msra.mxu0 0
    %4020 = vmatprep.subr.bf16.mxu0 0
    %4021 = vmatpush2.bf16.msra.mxu0 0
    %4022 = vmatprep.subr.bf16.mxu0 0
    %4023 = vmatpush2.bf16.msra.mxu0 0
    %4024 = vmatprep.subr.bf16.mxu0 0
    %4025 = vmatpush2.bf16.msra.mxu0 0
    %4026 = vmatprep.subr.bf16.mxu0 0
    %4027 = vmatpush2.bf16.msra.mxu0 0
    %4028 = vmatprep.subr.bf16.mxu0 0
    %4029 = vmatpush2.bf16.msra.mxu0 0
    %4030 = vmatprep.subr.bf16.mxu0 0
    %4031 = vmatpush2.bf16.msra.mxu0 0
    %4032 = vmatprep.mubr.bf16.mxu0 0
    %4033 = vmatmul.mubr.bf16.gmra.mxu0 %v3999
    %v4034 = vpop.f32.mrf.mxu0
    %v4035 = vadd.f32 0.0, %v4034
    %v4036 = vpop.f32.mrf.mxu0
    %v4037 = vadd.f32 0.0, %v4036
    %v4038 = vpop.f32.mrf.mxu0
    %v4039 = vpop.f32.mrf.mxu0
    %4040 = vdwg.mxu0
    %4041 = vmatprep.subr.bf16.mxu0 %v3622
    %4042 = vmatpush1.bf16.msra.mxu0 %v3621
    %4043 = vmatprep.subr.bf16.mxu0 %v3618
    %4044 = vmatpush1.bf16.msra.mxu0 %v3617
    %4045 = vmatprep.subr.bf16.mxu0 %v3614
    %4046 = vmatpush1.bf16.msra.mxu0 %v3613
    %4047 = vmatprep.subr.bf16.mxu0 %v3610
    %4048 = vmatpush1.bf16.msra.mxu0 %v3609
    %4049 = vmatprep.subr.bf16.mxu0 %v3606
    %4050 = vmatpush1.bf16.msra.mxu0 %v3605
    %4051 = vmatprep.subr.bf16.mxu0 %v3602
    %4052 = vmatpush1.bf16.msra.mxu0 %v3601
    %4053 = vmatprep.subr.bf16.mxu0 %v3598
    %4054 = vmatpush1.bf16.msra.mxu0 %v3597
    %4055 = vmatprep.subr.bf16.mxu0 %v3594
    %4056 = vmatpush1.bf16.msra.mxu0 %v3593
    %4057 = vmatprep.subr.bf16.mxu0 0
    %4058 = vmatpush2.bf16.msra.mxu0 0
    %4059 = vmatprep.subr.bf16.mxu0 0
    %4060 = vmatpush2.bf16.msra.mxu0 0
    %4061 = vmatprep.subr.bf16.mxu0 0
    %4062 = vmatpush2.bf16.msra.mxu0 0
    %4063 = vmatprep.subr.bf16.mxu0 0
    %4064 = vmatpush2.bf16.msra.mxu0 0
    %4065 = vmatprep.subr.bf16.mxu0 0
    %4066 = vmatpush2.bf16.msra.mxu0 0
    %4067 = vmatprep.subr.bf16.mxu0 0
    %4068 = vmatpush2.bf16.msra.mxu0 0
    %4069 = vmatprep.subr.bf16.mxu0 0
    %4070 = vmatpush2.bf16.msra.mxu0 0
    %4071 = vmatprep.subr.bf16.mxu0 0
    %4072 = vmatpush2.bf16.msra.mxu0 0
    %4073 = vmatprep.mubr.bf16.mxu0 0
    %4074 = vmatmul.mubr.bf16.gmra.mxu0 %v3999
    %v4075 = vpop.f32.mrf.mxu0
    %v4076 = vadd.f32 0.0, %v4075
    %v4077 = vpop.f32.mrf.mxu0
    %v4078 = vadd.f32 0.0, %v4077
    %v4079 = vpop.f32.mrf.mxu0
    %v4080 = vpop.f32.mrf.mxu0
    %4081 = vdwg.mxu0
    %v4082 = vadd.f32 %v3995, %v4035
    %v4083 = vadd.f32 %v3996, %v4037
    %v4084 = vadd.f32 %v3997, %v4076
    %v4085 = vadd.f32 %v3998, %v4078
    %v4086 = vxor.u32 %v4082, 2147483648
    %v4087 = vmul.f32 %v4086, 1.442695
    %v4088 = vpow.pop %v4087
    %v4089 = vadd.f32 %v4088, 1.0
    %v4090 = vrcp.pop %v4089
    %v4091 = vmul.f32 1.0, %v4090
    %v4092 = vxor.u32 %v4083, 2147483648
    %v4093 = vmul.f32 %v4092, 1.442695
    %v4094 = vpow.pop %v4093
    %v4095 = vadd.f32 %v4094, 1.0
    %v4096 = vrcp.pop %v4095
    %v4097 = vmul.f32 1.0, %v4096
    %v4098 = vtanh.pop %v4084
    %v4099 = vxor.u32 %v4085, 2147483648
    %v4100 = vmul.f32 %v4099, 1.442695
    %v4101 = vpow.pop %v4100
    %v4102 = vadd.f32 %v4101, 1.0
    %v4103 = vrcp.pop %v4102
    %v4104 = vmul.f32 1.0, %v4103
    %v4105 = vmul.f32 %v4097, %v3992
    %v4106 = vmul.f32 %v4091, %v4098
    %v4107 = vadd.f32 %v4105, %v4106
    %v4108 = vtanh.pop %v4107
    %v4109 = vmul.f32 %v4104, %v4108
    %v4110 = vld [vmem:[%s1789] sm:$0xff]
    %v4111 = vld [vmem:[%s1789 + $0x8] sm:$0xff]
    %v4112 = vld [vmem:[%s1789 + $0x10] sm:$0xff]
    %v4113 = vld [vmem:[%s1789 + $0x18] sm:$0xff]
    %v4114 = vpack.c.bf16 %v4109, %v4109
    %4115 = vmatprep.subr.bf16.mxu0 %v3620
    %4116 = vmatpush1.bf16.msra.mxu0 %v3619
    %4117 = vmatprep.subr.bf16.mxu0 %v3616
    %4118 = vmatpush1.bf16.msra.mxu0 %v3615
    %4119 = vmatprep.subr.bf16.mxu0 %v3612
    %4120 = vmatpush1.bf16.msra.mxu0 %v3611
    %4121 = vmatprep.subr.bf16.mxu0 %v3608
    %4122 = vmatpush1.bf16.msra.mxu0 %v3607
    %4123 = vmatprep.subr.bf16.mxu0 %v3604
    %4124 = vmatpush1.bf16.msra.mxu0 %v3603
    %4125 = vmatprep.subr.bf16.mxu0 %v3600
    %4126 = vmatpush1.bf16.msra.mxu0 %v3599
    %4127 = vmatprep.subr.bf16.mxu0 %v3596
    %4128 = vmatpush1.bf16.msra.mxu0 %v3595
    %4129 = vmatprep.subr.bf16.mxu0 %v3592
    %4130 = vmatpush1.bf16.msra.mxu0 %v3591
    %4131 = vmatprep.subr.bf16.mxu0 0
    %4132 = vmatpush2.bf16.msra.mxu0 0
    %4133 = vmatprep.subr.bf16.mxu0 0
    %4134 = vmatpush2.bf16.msra.mxu0 0
    %4135 = vmatprep.subr.bf16.mxu0 0
    %4136 = vmatpush2.bf16.msra.mxu0 0
    %4137 = vmatprep.subr.bf16.mxu0 0
    %4138 = vmatpush2.bf16.msra.mxu0 0
    %4139 = vmatprep.subr.bf16.mxu0 0
    %4140 = vmatpush2.bf16.msra.mxu0 0
    %4141 = vmatprep.subr.bf16.mxu0 0
    %4142 = vmatpush2.bf16.msra.mxu0 0
    %4143 = vmatprep.subr.bf16.mxu0 0
    %4144 = vmatpush2.bf16.msra.mxu0 0
    %4145 = vmatprep.subr.bf16.mxu0 0
    %4146 = vmatpush2.bf16.msra.mxu0 0
    %4147 = vmatprep.mubr.bf16.mxu0 0
    %4148 = vmatmul.mubr.bf16.gmra.mxu0 %v4114
    %v4149 = vpop.f32.mrf.mxu0
    %v4150 = vadd.f32 0.0, %v4149
    %v4151 = vpop.f32.mrf.mxu0
    %v4152 = vadd.f32 0.0, %v4151
    %v4153 = vpop.f32.mrf.mxu0
    %v4154 = vpop.f32.mrf.mxu0
    %4155 = vdwg.mxu0
    %4156 = vmatprep.subr.bf16.mxu0 %v3622
    %4157 = vmatpush1.bf16.msra.mxu0 %v3621
    %4158 = vmatprep.subr.bf16.mxu0 %v3618
    %4159 = vmatpush1.bf16.msra.mxu0 %v3617
    %4160 = vmatprep.subr.bf16.mxu0 %v3614
    %4161 = vmatpush1.bf16.msra.mxu0 %v3613
    %4162 = vmatprep.subr.bf16.mxu0 %v3610
    %4163 = vmatpush1.bf16.msra.mxu0 %v3609
    %4164 = vmatprep.subr.bf16.mxu0 %v3606
    %4165 = vmatpush1.bf16.msra.mxu0 %v3605
    %4166 = vmatprep.subr.bf16.mxu0 %v3602
    %4167 = vmatpush1.bf16.msra.mxu0 %v3601
    %4168 = vmatprep.subr.bf16.mxu0 %v3598
    %4169 = vmatpush1.bf16.msra.mxu0 %v3597
    %4170 = vmatprep.subr.bf16.mxu0 %v3594
    %4171 = vmatpush1.bf16.msra.mxu0 %v3593
    %4172 = vmatprep.subr.bf16.mxu0 0
    %4173 = vmatpush2.bf16.msra.mxu0 0
    %4174 = vmatprep.subr.bf16.mxu0 0
    %4175 = vmatpush2.bf16.msra.mxu0 0
    %4176 = vmatprep.subr.bf16.mxu0 0
    %4177 = vmatpush2.bf16.msra.mxu0 0
    %4178 = vmatprep.subr.bf16.mxu0 0
    %4179 = vmatpush2.bf16.msra.mxu0 0
    %4180 = vmatprep.subr.bf16.mxu0 0
    %4181 = vmatpush2.bf16.msra.mxu0 0
    %4182 = vmatprep.subr.bf16.mxu0 0
    %4183 = vmatpush2.bf16.msra.mxu0 0
    %4184 = vmatprep.subr.bf16.mxu0 0
    %4185 = vmatpush2.bf16.msra.mxu0 0
    %4186 = vmatprep.subr.bf16.mxu0 0
    %4187 = vmatpush2.bf16.msra.mxu0 0
    %4188 = vmatprep.mubr.bf16.mxu0 0
    %4189 = vmatmul.mubr.bf16.gmra.mxu0 %v4114
    %v4190 = vpop.f32.mrf.mxu0
    %v4191 = vadd.f32 0.0, %v4190
    %v4192 = vpop.f32.mrf.mxu0
    %v4193 = vadd.f32 0.0, %v4192
    %v4194 = vpop.f32.mrf.mxu0
    %v4195 = vpop.f32.mrf.mxu0
    %4196 = vdwg.mxu0
    %v4197 = vadd.f32 %v4110, %v4150
    %v4198 = vadd.f32 %v4111, %v4152
    %v4199 = vadd.f32 %v4112, %v4191
    %v4200 = vadd.f32 %v4113, %v4193
    %v4201 = vxor.u32 %v4197, 2147483648
    %v4202 = vmul.f32 %v4201, 1.442695
    %v4203 = vpow.pop %v4202
    %v4204 = vadd.f32 %v4203, 1.0
    %v4205 = vrcp.pop %v4204
    %v4206 = vmul.f32 1.0, %v4205
    %v4207 = vxor.u32 %v4198, 2147483648
    %v4208 = vmul.f32 %v4207, 1.442695
    %v4209 = vpow.pop %v4208
    %v4210 = vadd.f32 %v4209, 1.0
    %v4211 = vrcp.pop %v4210
    %v4212 = vmul.f32 1.0, %v4211
    %v4213 = vtanh.pop %v4199
    %v4214 = vxor.u32 %v4200, 2147483648
    %v4215 = vmul.f32 %v4214, 1.442695
    %v4216 = vpow.pop %v4215
    %v4217 = vadd.f32 %v4216, 1.0
    %v4218 = vrcp.pop %v4217
    %v4219 = vmul.f32 1.0, %v4218
    %v4220 = vmul.f32 %v4212, %v4107
    %v4221 = vmul.f32 %v4206, %v4213
    %v4222 = vadd.f32 %v4220, %v4221
    %v4223 = vtanh.pop %v4222
    %v4224 = vmul.f32 %v4219, %v4223
    %v4225 = vld [vmem:[%s2101] sm:$0xff]
    %v4226 = vld [vmem:[%s2101 + $0x8] sm:$0xff]
    %v4227 = vld [vmem:[%s2101 + $0x10] sm:$0xff]
    %v4228 = vld [vmem:[%s2101 + $0x18] sm:$0xff]
    %v4229 = vpack.c.bf16 %v4224, %v4224
    %4230 = vmatprep.subr.bf16.mxu0 %v3620
    %4231 = vmatpush1.bf16.msra.mxu0 %v3619
    %4232 = vmatprep.subr.bf16.mxu0 %v3616
    %4233 = vmatpush1.bf16.msra.mxu0 %v3615
    %4234 = vmatprep.subr.bf16.mxu0 %v3612
    %4235 = vmatpush1.bf16.msra.mxu0 %v3611
    %4236 = vmatprep.subr.bf16.mxu0 %v3608
    %4237 = vmatpush1.bf16.msra.mxu0 %v3607
    %4238 = vmatprep.subr.bf16.mxu0 %v3604
    %4239 = vmatpush1.bf16.msra.mxu0 %v3603
    %4240 = vmatprep.subr.bf16.mxu0 %v3600
    %4241 = vmatpush1.bf16.msra.mxu0 %v3599
    %4242 = vmatprep.subr.bf16.mxu0 %v3596
    %4243 = vmatpush1.bf16.msra.mxu0 %v3595
    %4244 = vmatprep.subr.bf16.mxu0 %v3592
    %4245 = vmatpush1.bf16.msra.mxu0 %v3591
    %4246 = vmatprep.subr.bf16.mxu0 0
    %4247 = vmatpush2.bf16.msra.mxu0 0
    %4248 = vmatprep.subr.bf16.mxu0 0
    %4249 = vmatpush2.bf16.msra.mxu0 0
    %4250 = vmatprep.subr.bf16.mxu0 0
    %4251 = vmatpush2.bf16.msra.mxu0 0
    %4252 = vmatprep.subr.bf16.mxu0 0
    %4253 = vmatpush2.bf16.msra.mxu0 0
    %4254 = vmatprep.subr.bf16.mxu0 0
    %4255 = vmatpush2.bf16.msra.mxu0 0
    %4256 = vmatprep.subr.bf16.mxu0 0
    %4257 = vmatpush2.bf16.msra.mxu0 0
    %4258 = vmatprep.subr.bf16.mxu0 0
    %4259 = vmatpush2.bf16.msra.mxu0 0
    %4260 = vmatprep.subr.bf16.mxu0 0
    %4261 = vmatpush2.bf16.msra.mxu0 0
    %4262 = vmatprep.mubr.bf16.mxu0 0
    %4263 = vmatmul.mubr.bf16.gmra.mxu0 %v4229
    %v4264 = vpop.f32.mrf.mxu0
    %v4265 = vadd.f32 0.0, %v4264
    %v4266 = vpop.f32.mrf.mxu0
    %v4267 = vadd.f32 0.0, %v4266
    %v4268 = vpop.f32.mrf.mxu0
    %v4269 = vpop.f32.mrf.mxu0
    %4270 = vdwg.mxu0
    %4271 = vmatprep.subr.bf16.mxu0 %v3622
    %4272 = vmatpush1.bf16.msra.mxu0 %v3621
    %4273 = vmatprep.subr.bf16.mxu0 %v3618
    %4274 = vmatpush1.bf16.msra.mxu0 %v3617
    %4275 = vmatprep.subr.bf16.mxu0 %v3614
    %4276 = vmatpush1.bf16.msra.mxu0 %v3613
    %4277 = vmatprep.subr.bf16.mxu0 %v3610
    %4278 = vmatpush1.bf16.msra.mxu0 %v3609
    %4279 = vmatprep.subr.bf16.mxu0 %v3606
    %4280 = vmatpush1.bf16.msra.mxu0 %v3605
    %4281 = vmatprep.subr.bf16.mxu0 %v3602
    %4282 = vmatpush1.bf16.msra.mxu0 %v3601
    %4283 = vmatprep.subr.bf16.mxu0 %v3598
    %4284 = vmatpush1.bf16.msra.mxu0 %v3597
    %4285 = vmatprep.subr.bf16.mxu0 %v3594
    %4286 = vmatpush1.bf16.msra.mxu0 %v3593
    %4287 = vmatprep.subr.bf16.mxu0 0
    %4288 = vmatpush2.bf16.msra.mxu0 0
    %4289 = vmatprep.subr.bf16.mxu0 0
    %4290 = vmatpush2.bf16.msra.mxu0 0
    %4291 = vmatprep.subr.bf16.mxu0 0
    %4292 = vmatpush2.bf16.msra.mxu0 0
    %4293 = vmatprep.subr.bf16.mxu0 0
    %4294 = vmatpush2.bf16.msra.mxu0 0
    %4295 = vmatprep.subr.bf16.mxu0 0
    %4296 = vmatpush2.bf16.msra.mxu0 0
    %4297 = vmatprep.subr.bf16.mxu0 0
    %4298 = vmatpush2.bf16.msra.mxu0 0
    %4299 = vmatprep.subr.bf16.mxu0 0
    %4300 = vmatpush2.bf16.msra.mxu0 0
    %4301 = vmatprep.subr.bf16.mxu0 0
    %4302 = vmatpush2.bf16.msra.mxu0 0
    %4303 = vmatprep.mubr.bf16.mxu0 0
    %4304 = vmatmul.mubr.bf16.gmra.mxu0 %v4229
    %v4305 = vpop.f32.mrf.mxu0
    %v4306 = vadd.f32 0.0, %v4305
    %v4307 = vpop.f32.mrf.mxu0
    %v4308 = vadd.f32 0.0, %v4307
    %v4309 = vpop.f32.mrf.mxu0
    %v4310 = vpop.f32.mrf.mxu0
    %4311 = vdwg.mxu0
    %v4312 = vadd.f32 %v4225, %v4265
    %v4313 = vadd.f32 %v4226, %v4267
    %v4314 = vadd.f32 %v4227, %v4306
    %v4315 = vadd.f32 %v4228, %v4308
    %v4316 = vxor.u32 %v4312, 2147483648
    %v4317 = vmul.f32 %v4316, 1.442695
    %v4318 = vpow.pop %v4317
    %v4319 = vadd.f32 %v4318, 1.0
    %v4320 = vrcp.pop %v4319
    %v4321 = vmul.f32 1.0, %v4320
    %v4322 = vxor.u32 %v4313, 2147483648
    %v4323 = vmul.f32 %v4322, 1.442695
    %v4324 = vpow.pop %v4323
    %v4325 = vadd.f32 %v4324, 1.0
    %v4326 = vrcp.pop %v4325
    %v4327 = vmul.f32 1.0, %v4326
    %v4328 = vtanh.pop %v4314
    %v4329 = vxor.u32 %v4315, 2147483648
    %v4330 = vmul.f32 %v4329, 1.442695
    %v4331 = vpow.pop %v4330
    %v4332 = vadd.f32 %v4331, 1.0
    %v4333 = vrcp.pop %v4332
    %v4334 = vmul.f32 1.0, %v4333
    %v4335 = vmul.f32 %v4327, %v4222
    %v4336 = vmul.f32 %v4321, %v4328
    %v4337 = vadd.f32 %v4335, %v4336
    %v4338 = vtanh.pop %v4337
    %v4339 = vmul.f32 %v4334, %v4338
    %v4340 = vld [vmem:[%s2413] sm:$0xff]
    %v4341 = vld [vmem:[%s2413 + $0x8] sm:$0xff]
    %v4342 = vld [vmem:[%s2413 + $0x10] sm:$0xff]
    %v4343 = vld [vmem:[%s2413 + $0x18] sm:$0xff]
    %v4344 = vpack.c.bf16 %v4339, %v4339
    %4345 = vmatprep.subr.bf16.mxu0 %v3620
    %4346 = vmatpush1.bf16.msra.mxu0 %v3619
    %4347 = vmatprep.subr.bf16.mxu0 %v3616
    %4348 = vmatpush1.bf16.msra.mxu0 %v3615
    %4349 = vmatprep.subr.bf16.mxu0 %v3612
    %4350 = vmatpush1.bf16.msra.mxu0 %v3611
    %4351 = vmatprep.subr.bf16.mxu0 %v3608
    %4352 = vmatpush1.bf16.msra.mxu0 %v3607
    %4353 = vmatprep.subr.bf16.mxu0 %v3604
    %4354 = vmatpush1.bf16.msra.mxu0 %v3603
    %4355 = vmatprep.subr.bf16.mxu0 %v3600
    %4356 = vmatpush1.bf16.msra.mxu0 %v3599
    %4357 = vmatprep.subr.bf16.mxu0 %v3596
    %4358 = vmatpush1.bf16.msra.mxu0 %v3595
    %4359 = vmatprep.subr.bf16.mxu0 %v3592
    %4360 = vmatpush1.bf16.msra.mxu0 %v3591
    %4361 = vmatprep.subr.bf16.mxu0 0
    %4362 = vmatpush2.bf16.msra.mxu0 0
    %4363 = vmatprep.subr.bf16.mxu0 0
    %4364 = vmatpush2.bf16.msra.mxu0 0
    %4365 = vmatprep.subr.bf16.mxu0 0
    %4366 = vmatpush2.bf16.msra.mxu0 0
    %4367 = vmatprep.subr.bf16.mxu0 0
    %4368 = vmatpush2.bf16.msra.mxu0 0
    %4369 = vmatprep.subr.bf16.mxu0 0
    %4370 = vmatpush2.bf16.msra.mxu0 0
    %4371 = vmatprep.subr.bf16.mxu0 0
    %4372 = vmatpush2.bf16.msra.mxu0 0
    %4373 = vmatprep.subr.bf16.mxu0 0
    %4374 = vmatpush2.bf16.msra.mxu0 0
    %4375 = vmatprep.subr.bf16.mxu0 0
    %4376 = vmatpush2.bf16.msra.mxu0 0
    %4377 = vmatprep.mubr.bf16.mxu0 0
    %4378 = vmatmul.mubr.bf16.gmra.mxu0 %v4344
    %v4379 = vpop.f32.mrf.mxu0
    %v4380 = vadd.f32 0.0, %v4379
    %v4381 = vpop.f32.mrf.mxu0
    %v4382 = vadd.f32 0.0, %v4381
    %v4383 = vpop.f32.mrf.mxu0
    %v4384 = vpop.f32.mrf.mxu0
    %4385 = vdwg.mxu0
    %4386 = vmatprep.subr.bf16.mxu0 %v3622
    %4387 = vmatpush1.bf16.msra.mxu0 %v3621
    %4388 = vmatprep.subr.bf16.mxu0 %v3618
    %4389 = vmatpush1.bf16.msra.mxu0 %v3617
    %4390 = vmatprep.subr.bf16.mxu0 %v3614
    %4391 = vmatpush1.bf16.msra.mxu0 %v3613
    %4392 = vmatprep.subr.bf16.mxu0 %v3610
    %4393 = vmatpush1.bf16.msra.mxu0 %v3609
    %4394 = vmatprep.subr.bf16.mxu0 %v3606
    %4395 = vmatpush1.bf16.msra.mxu0 %v3605
    %4396 = vmatprep.subr.bf16.mxu0 %v3602
    %4397 = vmatpush1.bf16.msra.mxu0 %v3601
    %4398 = vmatprep.subr.bf16.mxu0 %v3598
    %4399 = vmatpush1.bf16.msra.mxu0 %v3597
    %4400 = vmatprep.subr.bf16.mxu0 %v3594
    %4401 = vmatpush1.bf16.msra.mxu0 %v3593
    %4402 = vmatprep.subr.bf16.mxu0 0
    %4403 = vmatpush2.bf16.msra.mxu0 0
    %4404 = vmatprep.subr.bf16.mxu0 0
    %4405 = vmatpush2.bf16.msra.mxu0 0
    %4406 = vmatprep.subr.bf16.mxu0 0
    %4407 = vmatpush2.bf16.msra.mxu0 0
    %4408 = vmatprep.subr.bf16.mxu0 0
    %4409 = vmatpush2.bf16.msra.mxu0 0
    %4410 = vmatprep.subr.bf16.mxu0 0
    %4411 = vmatpush2.bf16.msra.mxu0 0
    %4412 = vmatprep.subr.bf16.mxu0 0
    %4413 = vmatpush2.bf16.msra.mxu0 0
    %4414 = vmatprep.subr.bf16.mxu0 0
    %4415 = vmatpush2.bf16.msra.mxu0 0
    %4416 = vmatprep.subr.bf16.mxu0 0
    %4417 = vmatpush2.bf16.msra.mxu0 0
    %4418 = vmatprep.mubr.bf16.mxu0 0
    %4419 = vmatmul.mubr.bf16.gmra.mxu0 %v4344
    %v4420 = vpop.f32.mrf.mxu0
    %v4421 = vadd.f32 0.0, %v4420
    %v4422 = vpop.f32.mrf.mxu0
    %v4423 = vadd.f32 0.0, %v4422
    %v4424 = vpop.f32.mrf.mxu0
    %v4425 = vpop.f32.mrf.mxu0
    %4426 = vdwg.mxu0
    %v4427 = vadd.f32 %v4340, %v4380
    %v4428 = vadd.f32 %v4341, %v4382
    %v4429 = vadd.f32 %v4342, %v4421
    %v4430 = vadd.f32 %v4343, %v4423
    %v4431 = vxor.u32 %v4427, 2147483648
    %v4432 = vmul.f32 %v4431, 1.442695
    %v4433 = vpow.pop %v4432
    %v4434 = vadd.f32 %v4433, 1.0
    %v4435 = vrcp.pop %v4434
    %v4436 = vmul.f32 1.0, %v4435
    %v4437 = vxor.u32 %v4428, 2147483648
    %v4438 = vmul.f32 %v4437, 1.442695
    %v4439 = vpow.pop %v4438
    %v4440 = vadd.f32 %v4439, 1.0
    %v4441 = vrcp.pop %v4440
    %v4442 = vmul.f32 1.0, %v4441
    %v4443 = vtanh.pop %v4429
    %v4444 = vxor.u32 %v4430, 2147483648
    %v4445 = vmul.f32 %v4444, 1.442695
    %v4446 = vpow.pop %v4445
    %v4447 = vadd.f32 %v4446, 1.0
    %v4448 = vrcp.pop %v4447
    %v4449 = vmul.f32 1.0, %v4448
    %v4450 = vmul.f32 %v4442, %v4337
    %v4451 = vmul.f32 %v4436, %v4443
    %v4452 = vadd.f32 %v4450, %v4451
    %v4453 = vtanh.pop %v4452
    %v4454 = vmul.f32 %v4449, %v4453
    %v4455 = vld [vmem:[%s2725] sm:$0xff]
    %v4456 = vld [vmem:[%s2725 + $0x8] sm:$0xff]
    %v4457 = vld [vmem:[%s2725 + $0x10] sm:$0xff]
    %v4458 = vld [vmem:[%s2725 + $0x18] sm:$0xff]
    %v4459 = vpack.c.bf16 %v4454, %v4454
    %4460 = vmatprep.subr.bf16.mxu0 %v3620
    %4461 = vmatpush1.bf16.msra.mxu0 %v3619
    %4462 = vmatprep.subr.bf16.mxu0 %v3616
    %4463 = vmatpush1.bf16.msra.mxu0 %v3615
    %4464 = vmatprep.subr.bf16.mxu0 %v3612
    %4465 = vmatpush1.bf16.msra.mxu0 %v3611
    %4466 = vmatprep.subr.bf16.mxu0 %v3608
    %4467 = vmatpush1.bf16.msra.mxu0 %v3607
    %4468 = vmatprep.subr.bf16.mxu0 %v3604
    %4469 = vmatpush1.bf16.msra.mxu0 %v3603
    %4470 = vmatprep.subr.bf16.mxu0 %v3600
    %4471 = vmatpush1.bf16.msra.mxu0 %v3599
    %4472 = vmatprep.subr.bf16.mxu0 %v3596
    %4473 = vmatpush1.bf16.msra.mxu0 %v3595
    %4474 = vmatprep.subr.bf16.mxu0 %v3592
    %4475 = vmatpush1.bf16.msra.mxu0 %v3591
    %4476 = vmatprep.subr.bf16.mxu0 0
    %4477 = vmatpush2.bf16.msra.mxu0 0
    %4478 = vmatprep.subr.bf16.mxu0 0
    %4479 = vmatpush2.bf16.msra.mxu0 0
    %4480 = vmatprep.subr.bf16.mxu0 0
    %4481 = vmatpush2.bf16.msra.mxu0 0
    %4482 = vmatprep.subr.bf16.mxu0 0
    %4483 = vmatpush2.bf16.msra.mxu0 0
    %4484 = vmatprep.subr.bf16.mxu0 0
    %4485 = vmatpush2.bf16.msra.mxu0 0
    %4486 = vmatprep.subr.bf16.mxu0 0
    %4487 = vmatpush2.bf16.msra.mxu0 0
    %4488 = vmatprep.subr.bf16.mxu0 0
    %4489 = vmatpush2.bf16.msra.mxu0 0
    %4490 = vmatprep.subr.bf16.mxu0 0
    %4491 = vmatpush2.bf16.msra.mxu0 0
    %4492 = vmatprep.mubr.bf16.mxu0 0
    %4493 = vmatmul.mubr.bf16.gmra.mxu0 %v4459
    %v4494 = vpop.f32.mrf.mxu0
    %v4495 = vadd.f32 0.0, %v4494
    %v4496 = vpop.f32.mrf.mxu0
    %v4497 = vadd.f32 0.0, %v4496
    %v4498 = vpop.f32.mrf.mxu0
    %v4499 = vpop.f32.mrf.mxu0
    %4500 = vdwg.mxu0
    %4501 = vmatprep.subr.bf16.mxu0 %v3622
    %4502 = vmatpush1.bf16.msra.mxu0 %v3621
    %4503 = vmatprep.subr.bf16.mxu0 %v3618
    %4504 = vmatpush1.bf16.msra.mxu0 %v3617
    %4505 = vmatprep.subr.bf16.mxu0 %v3614
    %4506 = vmatpush1.bf16.msra.mxu0 %v3613
    %4507 = vmatprep.subr.bf16.mxu0 %v3610
    %4508 = vmatpush1.bf16.msra.mxu0 %v3609
    %4509 = vmatprep.subr.bf16.mxu0 %v3606
    %4510 = vmatpush1.bf16.msra.mxu0 %v3605
    %4511 = vmatprep.subr.bf16.mxu0 %v3602
    %4512 = vmatpush1.bf16.msra.mxu0 %v3601
    %4513 = vmatprep.subr.bf16.mxu0 %v3598
    %4514 = vmatpush1.bf16.msra.mxu0 %v3597
    %4515 = vmatprep.subr.bf16.mxu0 %v3594
    %4516 = vmatpush1.bf16.msra.mxu0 %v3593
    %4517 = vmatprep.subr.bf16.mxu0 0
    %4518 = vmatpush2.bf16.msra.mxu0 0
    %4519 = vmatprep.subr.bf16.mxu0 0
    %4520 = vmatpush2.bf16.msra.mxu0 0
    %4521 = vmatprep.subr.bf16.mxu0 0
    %4522 = vmatpush2.bf16.msra.mxu0 0
    %4523 = vmatprep.subr.bf16.mxu0 0
    %4524 = vmatpush2.bf16.msra.mxu0 0
    %4525 = vmatprep.subr.bf16.mxu0 0
    %4526 = vmatpush2.bf16.msra.mxu0 0
    %4527 = vmatprep.subr.bf16.mxu0 0
    %4528 = vmatpush2.bf16.msra.mxu0 0
    %4529 = vmatprep.subr.bf16.mxu0 0
    %4530 = vmatpush2.bf16.msra.mxu0 0
    %4531 = vmatprep.subr.bf16.mxu0 0
    %4532 = vmatpush2.bf16.msra.mxu0 0
    %4533 = vmatprep.mubr.bf16.mxu0 0
    %4534 = vmatmul.mubr.bf16.gmra.mxu0 %v4459
    %v4535 = vpop.f32.mrf.mxu0
    %v4536 = vadd.f32 0.0, %v4535
    %v4537 = vpop.f32.mrf.mxu0
    %v4538 = vadd.f32 0.0, %v4537
    %v4539 = vpop.f32.mrf.mxu0
    %v4540 = vpop.f32.mrf.mxu0
    %4541 = vdwg.mxu0
    %v4542 = vadd.f32 %v4455, %v4495
    %v4543 = vadd.f32 %v4456, %v4497
    %v4544 = vadd.f32 %v4457, %v4536
    %v4545 = vadd.f32 %v4458, %v4538
    %v4546 = vxor.u32 %v4542, 2147483648
    %v4547 = vmul.f32 %v4546, 1.442695
    %v4548 = vpow.pop %v4547
    %v4549 = vadd.f32 %v4548, 1.0
    %v4550 = vrcp.pop %v4549
    %v4551 = vmul.f32 1.0, %v4550
    %v4552 = vxor.u32 %v4543, 2147483648
    %v4553 = vmul.f32 %v4552, 1.442695
    %v4554 = vpow.pop %v4553
    %v4555 = vadd.f32 %v4554, 1.0
    %v4556 = vrcp.pop %v4555
    %v4557 = vmul.f32 1.0, %v4556
    %v4558 = vtanh.pop %v4544
    %v4559 = vxor.u32 %v4545, 2147483648
    %v4560 = vmul.f32 %v4559, 1.442695
    %v4561 = vpow.pop %v4560
    %v4562 = vadd.f32 %v4561, 1.0
    %v4563 = vrcp.pop %v4562
    %v4564 = vmul.f32 1.0, %v4563
    %v4565 = vmul.f32 %v4557, %v4452
    %v4566 = vmul.f32 %v4551, %v4558
    %v4567 = vadd.f32 %v4565, %v4566
    %v4568 = vtanh.pop %v4567
    %v4569 = vmul.f32 %v4564, %v4568
    %v4570 = vpack.c.bf16 %v4569, %v4569
    %v4571 = vld [vmem:[#allocation13] sm:$0xf]
    %v4572 = vld [vmem:[#allocation13 + $0x4] sm:$0xf]
    %v4573 = vld [vmem:[#allocation13 + $0x8] sm:$0xf]
    %v4574 = vld [vmem:[#allocation13 + $0xc] sm:$0xf]
    %v4575 = vld [vmem:[#allocation13 + $0x10] sm:$0xf]
    %v4576 = vld [vmem:[#allocation13 + $0x14] sm:$0xf]
    %v4577 = vld [vmem:[#allocation13 + $0x18] sm:$0xf]
    %v4578 = vld [vmem:[#allocation13 + $0x1c] sm:$0xf]
    %v4579 = vld [vmem:[#allocation13 + $0x20] sm:$0xf]
    %v4580 = vld [vmem:[#allocation13 + $0x24] sm:$0xf]
    %v4581 = vld [vmem:[#allocation13 + $0x28] sm:$0xf]
    %v4582 = vld [vmem:[#allocation13 + $0x2c] sm:$0xf]
    %v4583 = vld [vmem:[#allocation13 + $0x30] sm:$0xf]
    %v4584 = vld [vmem:[#allocation13 + $0x34] sm:$0xf]
    %v4585 = vld [vmem:[#allocation13 + $0x38] sm:$0xf]
    %v4586 = vld [vmem:[#allocation13 + $0x3c] sm:$0xf]
    %v4587 = vld [vmem:[%s8] sm:$0x1]
    %v4589 = vlaneseq
    %v4590 = vshrl.u32 %v4589, 7
    %v4591 = vsub.s32 0, %v4590
    %v4592 = vrot.slane %v4587, %v4591
    %v4610 = vunpack.c.l.b16 %v4571
    %v4611 = vunpack.c.l.b16 %v4572
    %v4612 = vunpack.c.l.b16 %v4573
    %v4613 = vunpack.c.l.b16 %v4574
    %v4614 = vunpack.c.l.b16 %v4575
    %v4615 = vunpack.c.l.b16 %v4576
    %v4616 = vunpack.c.l.b16 %v4577
    %v4617 = vunpack.c.l.b16 %v4578
    %v4618 = vunpack.c.l.b16 %v4579
    %v4619 = vunpack.c.l.b16 %v4580
    %v4620 = vunpack.c.l.b16 %v4581
    %v4621 = vunpack.c.l.b16 %v4582
    %v4622 = vunpack.c.l.b16 %v4583
    %v4623 = vunpack.c.l.b16 %v4584
    %v4624 = vunpack.c.l.b16 %v4585
    %v4625 = vunpack.c.l.b16 %v4586
    %v4626 = vpack.c.b16 %v4611, %v4610
    %v4627 = vpack.c.b16 %v4613, %v4612
    %v4628 = vpack.c.b16 %v4615, %v4614
    %v4629 = vpack.c.b16 %v4617, %v4616
    %v4630 = vpack.c.b16 %v4619, %v4618
    %v4631 = vpack.c.b16 %v4621, %v4620
    %v4632 = vpack.c.b16 %v4623, %v4622
    %v4633 = vpack.c.b16 %v4625, %v4624
    %4642 = vmatprep.subr.bf16.mxu0 0
    %4643 = vmatpush1.bf16.msra.mxu0 %v4633
    %4644 = vmatprep.subr.bf16.mxu0 0
    %4645 = vmatpush1.bf16.msra.mxu0 %v4632
    %4646 = vmatprep.subr.bf16.mxu0 0
    %4647 = vmatpush1.bf16.msra.mxu0 %v4631
    %4648 = vmatprep.subr.bf16.mxu0 0
    %4649 = vmatpush1.bf16.msra.mxu0 %v4630
    %4650 = vmatprep.subr.bf16.mxu0 0
    %4651 = vmatpush1.bf16.msra.mxu0 %v4629
    %4652 = vmatprep.subr.bf16.mxu0 0
    %4653 = vmatpush1.bf16.msra.mxu0 %v4628
    %4654 = vmatprep.subr.bf16.mxu0 0
    %4655 = vmatpush1.bf16.msra.mxu0 %v4627
    %4656 = vmatprep.subr.bf16.mxu0 0
    %4657 = vmatpush1.bf16.msra.mxu0 %v4626
    %4658 = vmatprep.subr.bf16.mxu0 0
    %4659 = vmatpush2.bf16.msra.mxu0 0
    %4660 = vmatprep.subr.bf16.mxu0 0
    %4661 = vmatpush2.bf16.msra.mxu0 0
    %4662 = vmatprep.subr.bf16.mxu0 0
    %4663 = vmatpush2.bf16.msra.mxu0 0
    %4664 = vmatprep.subr.bf16.mxu0 0
    %4665 = vmatpush2.bf16.msra.mxu0 0
    %4666 = vmatprep.subr.bf16.mxu0 0
    %4667 = vmatpush2.bf16.msra.mxu0 0
    %4668 = vmatprep.subr.bf16.mxu0 0
    %4669 = vmatpush2.bf16.msra.mxu0 0
    %4670 = vmatprep.subr.bf16.mxu0 0
    %4671 = vmatpush2.bf16.msra.mxu0 0
    %4672 = vmatprep.subr.bf16.mxu0 0
    %4673 = vmatpush2.bf16.msra.mxu0 0
    %4674 = vmatprep.mubr.bf16.mxu0 0
    %4675 = vmatmul.mubr.bf16.gmra.mxu0 %v4570
    %v4676 = vpop.f32.mrf.mxu0
    %v4677 = vadd.f32 %v4592, %v4676
    %v4678 = vpop.f32.mrf.mxu0
    %v4679 = vpop.f32.mrf.mxu0
    %v4680 = vpop.f32.mrf.mxu0
    %4681 = vdwg.mxu0
    %4682 = vst [vmem:[#allocation15] sm:$0xff] %v4677
    // Predicated region
    $region62: #{tpu_custom_call.1} parent=1 // pred_check
      _
    $region63: #{tpu_custom_call.1} parent=1 // pred_check_branch
      %4684 = sbr.rel (0) target = $region65
    $region64: #{tpu_custom_call.1} parent=1 // pred_region
      %s4686 = ssub.s32 128, 128
      %4687 = vsyncadd [#allocation6], %s4686
      %s4689 = sshll.u32 [#allocation15], 4
      %s4690 = int_to_ptr.vmem [resolvable:$true] %s4689
      %4692 = dma.vmem_to_hbm [thread:$0]  %s4690, 128, %s9, [#allocation6]
    $region65: #{tpu_custom_call.1} parent=1 // pred_fallthru
      _
    // Predicated region
    $region66: #{tpu_custom_call.1} parent=1 // pred_check
      _
    $region67: #{tpu_custom_call.1} parent=1 // pred_check_branch
      %4694 = sbr.rel (0) target = $region69
    $region68: #{tpu_custom_call.1} parent=1 // pred_region
      %4695 = dma.done [#allocation6], 128
    $region69: #{tpu_custom_call.1} parent=1 // pred_fallthru
      _
    %4696 = vsyncpa [#allocation5], 1
    %4697 = vsyncpa [#allocation8], 1
    %4698 = vsyncpa [#allocation11], 1
    %4699 = vsyncpa [#allocation14], 1
    %4700 = vsyncpa [#allocation6], 1

</llo_original>
